<compile_context>
chip_gen: v6e
topology: v6e:2x2x1
jax: 0.10.0
libtpu: 0.0.40
codegen_flags: <defaults>
</compile_context>

<pallas_src>
import functools
import math

import jax
import jax.numpy as jnp
from jax.experimental import pallas as pl
from jax.experimental.pallas import tpu as pltpu


# Matmul operand dtype. float32 keeps exact parity with the f32 PyTorch reference;
# set to jnp.bfloat16 on v6e/v7x for full MXU rate (accumulation stays f32, LN /
# softmax statistics stay f32 regardless).
_MM_DTYPE = jnp.float32

_ROW_TILE = 256                       # row tile for dense kernels (<=256 fits v7x VMEM)
_VMEM_LIMIT = 64 * 1024 * 1024


def _cparams():
    return pltpu.CompilerParams(
        dimension_semantics=("parallel",),
        vmem_limit_bytes=_VMEM_LIMIT)


def _row_grid(n):
    """Return (row_tile, padded_rows). Blocks equal full dims when n <= tile."""
    if n <= _ROW_TILE:
        return n, n
    npad = ((n + _ROW_TILE - 1) // _ROW_TILE) * _ROW_TILE
    return _ROW_TILE, npad


def _pad_rows(x, npad):
    return x if x.shape[0] == npad else jnp.pad(x, ((0, npad - x.shape[0]), (0, 0)))


def _ln_f32(x, g, b):
    """torch.LayerNorm semantics: f32 stats, biased variance, eps=1e-5."""
    x = x.astype(jnp.float32)
    mean = jnp.mean(x, axis=-1, keepdims=True)
    var = jnp.mean(jnp.square(x - mean), axis=-1, keepdims=True)
    return (x - mean) * jax.lax.rsqrt(var + 1e-5) * g + b


# ----------------------------- Pallas kernels ------------------------------

def _matmul_kernel(x_ref, w_ref, o_ref):
    acc = jnp.dot(x_ref[...].astype(_MM_DTYPE), w_ref[...].astype(_MM_DTYPE),
                  preferred_element_type=jnp.float32)
    o_ref[...] = acc.astype(o_ref.dtype)


def _layernorm_kernel(x_ref, g_ref, b_ref, o_ref):
    o_ref[...] = _ln_f32(x_ref[...], g_ref[...], b_ref[...]).astype(o_ref.dtype)


def _ln_linear_kernel(x_ref, g_ref, bln_ref, w_ref, b_ref, o_ref):
    # Fused LayerNorm -> linear (ln1 + QKV projection).
    y = _ln_f32(x_ref[...], g_ref[...], bln_ref[...])
    acc = jnp.dot(y.astype(_MM_DTYPE), w_ref[...].astype(_MM_DTYPE),
                  preferred_element_type=jnp.float32)
    o_ref[...] = (acc + b_ref[...]).astype(o_ref.dtype)


def _linear_residual_kernel(a_ref, res_ref, w_ref, b_ref, o_ref):
    # res + a @ w + b  (v side-branch out_proj fused with its residual add).
    acc = jnp.dot(a_ref[...].astype(_MM_DTYPE), w_ref[...].astype(_MM_DTYPE),
                  preferred_element_type=jnp.float32)
    o_ref[...] = (res_ref[...].astype(jnp.float32) + acc + b_ref[...]).astype(o_ref.dtype)


def _ln_mlp_kernel(x_ref, g_ref, bln_ref, w1_ref, b1_ref, w2_ref, b2_ref, o_ref):
    # Fused LayerNorm -> c_fc -> QuickGELU -> c_proj -> residual add.
    x = x_ref[...].astype(jnp.float32)
    y = _ln_f32(x, g_ref[...], bln_ref[...])
    h = jnp.dot(y.astype(_MM_DTYPE), w1_ref[...].astype(_MM_DTYPE),
                preferred_element_type=jnp.float32) + b1_ref[...]
    h = h * (1.0 / (1.0 + jnp.exp(-1.702 * h)))        # QuickGELU in f32 (VPU/EUP)
    out = jnp.dot(h.astype(_MM_DTYPE), w2_ref[...].astype(_MM_DTYPE),
                  preferred_element_type=jnp.float32) + b2_ref[...]
    o_ref[...] = (x + out).astype(o_ref.dtype)


def _attn_kernel(qkv_ref, x_ref, wo_ref, bo_ref, o_ref, *, heads, scale):
    # One program per batch element: every head of scaled-dot-product attention,
    # the output projection and the residual add, fused.  The out_proj is
    # distributed over the head concat:  attn @ Wo = sum_h attn_h @ Wo[h*Dh:(h+1)*Dh].
    L, E3 = qkv_ref.shape
    E = E3 // 3
    Dh = E // heads
    qkv = qkv_ref[...].astype(jnp.float32)
    wo = wo_ref[...]
    out = x_ref[...].astype(jnp.float32) + bo_ref[...].astype(jnp.float32)
    for h in range(heads):                               # static unroll over heads
        q = qkv[:, h * Dh:(h + 1) * Dh] * scale
        k = qkv[:, E + h * Dh:E + (h + 1) * Dh]
        v = qkv[:, 2 * E + h * Dh:2 * E + (h + 1) * Dh]
        s = jax.lax.dot_general(q, k, (((1,), (1,)), ((), ())),
                                preferred_element_type=jnp.float32)   # [L, L], no K.T
        s = s - jnp.max(s, axis=-1, keepdims=True)
        p = jnp.exp(s)
        p = p * pl.reciprocal(jnp.sum(p, axis=-1, keepdims=True), approx=True)
        oh = jnp.dot(p.astype(_MM_DTYPE), v.astype(_MM_DTYPE),
                     preferred_element_type=jnp.float32)              # [L, Dh]
        out = out + jnp.dot(oh.astype(_MM_DTYPE),
                            wo[h * Dh:(h + 1) * Dh, :].astype(_MM_DTYPE),
                            preferred_element_type=jnp.float32)       # [L, E]
    o_ref[...] = out.astype(o_ref.dtype)
    # TODO(synk): for long sequences (L ~ 1k+, high-res MaskCLIP) switch to a
    # KV-tiled online-softmax (flash) loop instead of the full [L, L] score matrix.


# ------------------------------- wrappers -----------------------------------

def matmul(x, w):
    """y = x @ w (no bias).  Row-tiled; weight block VMEM-resident."""
    N, K = x.shape
    M = w.shape[1]
    tn, npad = _row_grid(N)
    out = pl.pallas_call(
        _matmul_kernel,
        out_shape=jax.ShapeDtypeStruct((npad, M), x.dtype),
        grid=(npad // tn,),
        in_specs=[pl.BlockSpec((tn, K), lambda i: (i, 0)),
                  pl.BlockSpec((K, M), lambda i: (0, 0))],
        out_specs=pl.BlockSpec((tn, M), lambda i: (i, 0)),
        compiler_params=_cparams(),
    )(_pad_rows(x, npad), w)
    return out if npad == N else out[:N]


def layernorm(x, g, b):
    N, D = x.shape
    tn, npad = _row_grid(N)
    out = pl.pallas_call(
        _layernorm_kernel,
        out_shape=jax.ShapeDtypeStruct((npad, D), x.dtype),
        grid=(npad // tn,),
        in_specs=[pl.BlockSpec((tn, D), lambda i: (i, 0)),
                  pl.BlockSpec((1, D), lambda i: (0, 0)),
                  pl.BlockSpec((1, D), lambda i: (0, 0))],
        out_specs=pl.BlockSpec((tn, D), lambda i: (i, 0)),
        compiler_params=_cparams(),
    )(_pad_rows(x, npad), g.reshape(1, D), b.reshape(1, D))
    return out if npad == N else out[:N]


def ln_linear(x, g, bln, w, b):
    """LayerNorm(x) @ w + b, fused (ln1 + QKV projection)."""
    N, D = x.shape
    M = w.shape[1]
    tn, npad = _row_grid(N)
    out = pl.pallas_call(
        _ln_linear_kernel,
        out_shape=jax.ShapeDtypeStruct((npad, M), x.dtype),
        grid=(npad // tn,),
        in_specs=[pl.BlockSpec((tn, D), lambda i: (i, 0)),
                  pl.BlockSpec((1, D), lambda i: (0, 0)),
                  pl.BlockSpec((1, D), lambda i: (0, 0)),
                  pl.BlockSpec((D, M), lambda i: (0, 0)),
                  pl.BlockSpec((1, M), lambda i: (0, 0))],
        out_specs=pl.BlockSpec((tn, M), lambda i: (i, 0)),
        compiler_params=_cparams(),
    )(_pad_rows(x, npad), g.reshape(1, D), bln.reshape(1, D), w, b.reshape(1, M))
    return out if npad == N else out[:N]


def linear_residual(a, res, w, b):
    """res + a @ w + b."""
    N, K = a.shape
    M = w.shape[1]
    tn, npad = _row_grid(N)
    out = pl.pallas_call(
        _linear_residual_kernel,
        out_shape=jax.ShapeDtypeStruct((npad, M), a.dtype),
        grid=(npad // tn,),
        in_specs=[pl.BlockSpec((tn, K), lambda i: (i, 0)),
                  pl.BlockSpec((tn, M), lambda i: (i, 0)),
                  pl.BlockSpec((K, M), lambda i: (0, 0)),
                  pl.BlockSpec((1, M), lambda i: (0, 0))],
        out_specs=pl.BlockSpec((tn, M), lambda i: (i, 0)),
        compiler_params=_cparams(),
    )(_pad_rows(a, npad), _pad_rows(res, npad), w, b.reshape(1, M))
    return out if npad == N else out[:N]


def ln_mlp_residual(x, g, bln, w1, b1, w2, b2):
    """x + c_proj(QuickGELU(c_fc(LayerNorm(x)))), fused."""
    N, D = x.shape
    H = w1.shape[1]
    tn, npad = _row_grid(N)
    out = pl.pallas_call(
        _ln_mlp_kernel,
        out_shape=jax.ShapeDtypeStruct((npad, D), x.dtype),
        grid=(npad // tn,),
        in_specs=[pl.BlockSpec((tn, D), lambda i: (i, 0)),
                  pl.BlockSpec((1, D), lambda i: (0, 0)),
                  pl.BlockSpec((1, D), lambda i: (0, 0)),
                  pl.BlockSpec((D, H), lambda i: (0, 0)),
                  pl.BlockSpec((1, H), lambda i: (0, 0)),
                  pl.BlockSpec((H, D), lambda i: (0, 0)),
                  pl.BlockSpec((1, D), lambda i: (0, 0))],
        out_specs=pl.BlockSpec((tn, D), lambda i: (i, 0)),
        compiler_params=_cparams(),
    )(_pad_rows(x, npad), g.reshape(1, D), bln.reshape(1, D),
      w1, b1.reshape(1, H), w2, b2.reshape(1, D))
    return out if npad == N else out[:N]


def attention_block(qkv, x, wo, bo, heads):
    """Fused per-batch MHA + out_proj + residual.  qkv: [B, L, 3E], x: [B, L, E]."""
    B, L, E3 = qkv.shape
    E = E3 // 3
    scale = 1.0 / math.sqrt(E // heads)
    kern = functools.partial(_attn_kernel, heads=heads, scale=scale)
    return pl.pallas_call(
        kern,
        out_shape=jax.ShapeDtypeStruct((B, L, E), x.dtype),
        grid=(B,),
        in_specs=[pl.BlockSpec((None, L, E3), lambda b: (b, 0, 0)),
                  pl.BlockSpec((None, L, E), lambda b: (b, 0, 0)),
                  pl.BlockSpec((E, E), lambda b: (0, 0)),
                  pl.BlockSpec((1, E), lambda b: (0, 0))],
        out_specs=pl.BlockSpec((None, L, E), lambda b: (b, 0, 0)),
        compiler_params=_cparams(),
    )(qkv, x, wo, bo.reshape(1, E))


# ------------------------------ Model (glue) -------------------------------

def resblock_forward(x2d, B, L, bp, heads, *, want_v):
    """ResidualAttentionBlock.forward on [B*L, E] rows. Returns (x2d_new, v_raw)."""
    E = x2d.shape[1]
    qkv = ln_linear(x2d, bp["ln1_g"], bp["ln1_b"], bp["w_qkv"], bp["b_qkv"])  # [BL, 3E]
    x3 = attention_block(qkv.reshape(B, L, 3 * E), x2d.reshape(B, L, E),
                         bp["w_out"], bp["b_out"], heads)                     # [B, L, E]
    x2d = ln_mlp_residual(x3.reshape(B * L, E), bp["ln2_g"], bp["ln2_b"],
                          bp["w_fc"], bp["b_fc"], bp["w_cproj"], bp["b_cproj"])
    # Raw v projection (before out_proj) — only materialized for the final block,
    # since only the last layer's v is consumed by the reference forward.
    vp = qkv[:, 2 * E:] if want_v else None
    return x2d, vp


def vit_forward(prep, x_nchw, *, patch_size, heads):
    B, C, R, _ = x_nchw.shape
    p = patch_size
    Hp = R // p
    width = prep["w_patch"].shape[1]
    out_dim = prep["proj"].shape[1]

    # conv1 (kernel == stride, no bias) == per-patch matmul (bias-free kernel).
    xp = x_nchw.reshape(B, C, Hp, p, Hp, p).transpose(0, 2, 4, 1, 3, 5)
    xp = xp.reshape(B * Hp * Hp, C * p * p)
    tok = matmul(xp, prep["w_patch"]).reshape(B, Hp * Hp, width)

    cls = jnp.broadcast_to(prep["class_embedding"][None, None, :], (B, 1, width))
    x = jnp.concatenate([cls, tok], axis=1) + prep["positional_embedding"][None]
    L = x.shape[1]

    # ln_pre; from here activations stay batch-first [B*L, E] rows.
    x2d = layernorm(x.reshape(B * L, width), prep["ln_pre_g"], prep["ln_pre_b"])

    n_blocks = len(prep["blocks"])
    vp_last, last_bp = None, None
    for i, bp in enumerate(prep["blocks"]):
        x2d, vp = resblock_forward(x2d, B, L, bp, heads, want_v=(i == n_blocks - 1))
        if vp is not None:
            vp_last, last_bp = vp, bp

    # Final block's side branch: v = out_proj(v_raw) + x_final (fused residual).
    v2d = linear_residual(vp_last, x2d, last_bp["w_out"], last_bp["b_out"])

    # ln_post only affects the class-token rows that feed class_features.
    cls_rows = layernorm(x2d.reshape(B, L, width)[:, 0, :],
                         prep["ln_post_g"], prep["ln_post_b"])                 # [B, E]
    img_rows = v2d.reshape(B, L, width)[:, 1:, :].reshape(B * (L - 1), width)
    # Single fused (bias-free) projection for class + image features.
    feats = matmul(jnp.concatenate([cls_rows, img_rows], axis=0), prep["proj"])
    class_features = feats[:B]                                                 # [B, out_dim]
    image_features = feats[B:].reshape(B, L - 1, out_dim)                      # [B, L-1, out_dim]
    return class_features, image_features


# --------------------------- deterministic params --------------------------

def init_params(key, *, width, layers, patch_size, input_resolution, output_dim):
    """Parameters in the PyTorch module's native layout."""
    scale = width ** (-0.5)
    L = (input_resolution // patch_size) ** 2 + 1
    keys = iter(jax.random.split(key, 4 + layers * 8))

    def nrm(shape, s=0.02):
        return s * jax.random.normal(next(keys), shape, jnp.float32)

    params = {
        "conv1_w": nrm((width, 3, patch_size, patch_size)),
        "class_embedding": scale * jax.random.normal(next(keys), (width,), jnp.float32),
        "positional_embedding": scale * jax.random.normal(next(keys), (L, width), jnp.float32),
        "ln_pre_g": jnp.ones((width,), jnp.float32),
        "ln_pre_b": jnp.zeros((width,), jnp.float32),
        "ln_post_g": jnp.ones((width,), jnp.float32),
        "ln_post_b": jnp.zeros((width,), jnp.float32),
        "proj": scale * jax.random.normal(next(keys), (width, output_dim), jnp.float32),
        "blocks": [],
    }
    for _ in range(layers):
        params["blocks"].append({
            "ln1_g": jnp.ones((width,), jnp.float32),
            "ln1_b": jnp.zeros((width,), jnp.float32),
            "ln2_g": jnp.ones((width,), jnp.float32),
            "ln2_b": jnp.zeros((width,), jnp.float32),
            "in_proj_w": nrm((3 * width, width)),
            "in_proj_b": nrm((3 * width,)),
            "out_proj_w": nrm((width, width)),
            "out_proj_b": nrm((width,)),
            "fc_w": nrm((4 * width, width)),
            "fc_b": nrm((4 * width,)),
            "cproj_w": nrm((width, 4 * width)),
            "cproj_b": nrm((width,)),
        })
    return params


def prepare_params(params):
    """One-time weight relayout (outside jit): [out,in] torch layout -> [in,out]."""
    width = params["conv1_w"].shape[0]
    prep = {
        "w_patch": params["conv1_w"].reshape(width, -1).T,        # [3*p*p, width]
        "class_embedding": params["class_embedding"],
        "positional_embedding": params["positional_embedding"],
        "ln_pre_g": params["ln_pre_g"], "ln_pre_b": params["ln_pre_b"],
        "ln_post_g": params["ln_post_g"], "ln_post_b": params["ln_post_b"],
        "proj": params["proj"],
        "blocks": [],
    }
    for lp in params["blocks"]:
        prep["blocks"].append({
            "ln1_g": lp["ln1_g"], "ln1_b": lp["ln1_b"],
            "ln2_g": lp["ln2_g"], "ln2_b": lp["ln2_b"],
            "w_qkv": lp["in_proj_w"].T, "b_qkv": lp["in_proj_b"],
            "w_out": lp["out_proj_w"].T, "b_out": lp["out_proj_b"],
            "w_fc": lp["fc_w"].T, "b_fc": lp["fc_b"],
            "w_cproj": lp["cproj_w"].T, "b_cproj": lp["cproj_b"],
        })
    return prep


# ----------------------------------- main -----------------------------------

if __name__ == "__main__":
    input_resolution = 16
    patch_size = 8
    width = 32
    layers = 2
    heads = 4
    output_dim = 16
    batch = 2

    key = jax.random.PRNGKey(0)
    k_params, k_x = jax.random.split(key)
    params = init_params(k_params, width=width, layers=layers,
                         patch_size=patch_size,
                         input_resolution=input_resolution,
                         output_dim=output_dim)
    prep = prepare_params(params)   # one-time weight relayout, outside jit
    x = jax.random.normal(k_x, (batch, 3, input_resolution, input_resolution),
                          jnp.float32)

    fwd = jax.jit(functools.partial(vit_forward, patch_size=patch_size, heads=heads))
    class_features, image_features = fwd(prep, x)
    jax.block_until_ready((class_features, image_features))

    assert class_features.shape == (batch, output_dim)
    assert image_features.shape == (batch, (input_resolution // patch_size) ** 2, output_dim)
    # TODO(synk): resize_positional_embedding (bicubic F.interpolate) is not part of
    # forward() and is not implemented.
    print("KERNEL_OK")
</pallas_src>

<mosaic_0001>
module attributes {stable_mosaic.version = 11 : i64} {
  func.func @_matmul_kernel(%arg0: i32, %arg1: memref<8x192xf32, #tpu.memory_space<vmem>>, %arg2: memref<192x32xf32, #tpu.memory_space<vmem>>, %arg3: memref<8x32xf32, #tpu.memory_space<vmem>>) attributes {dimension_semantics = [#tpu.dimension_semantics<parallel>], iteration_bounds = array<i64: 1>, scalar_prefetch = 0 : i64, scratch_operands = 0 : i64, tpu.core_type = #tpu.core_type<tc>, window_params = [{transform_indices = @transform_0, window_bounds = array<i64: 8, 192>}, {pipeline_mode = #tpu.pipeline_mode<synchronous>, transform_indices = @transform_1, window_bounds = array<i64: 192, 32>}, {transform_indices = @transform_2, window_bounds = array<i64: 8, 32>}]} {
    %c0 = arith.constant 0 : index
    %c0_0 = arith.constant 0 : index
    %0 = vector.load %arg1[%c0, %c0_0] : memref<8x192xf32, #tpu.memory_space<vmem>>, vector<8x192xf32>
    %c0_1 = arith.constant 0 : index
    %c0_2 = arith.constant 0 : index
    %1 = vector.load %arg2[%c0_1, %c0_2] : memref<192x32xf32, #tpu.memory_space<vmem>>, vector<192x32xf32>
    %cst = arith.constant dense<0.000000e+00> : vector<8x32xf32>
    %2 = tpu.matmul %0, %1, %cst {dimension_numbers = #tpu.dot_dimension_numbers<[1], [0], [0], [1], [0, 0, 1, 1], [], []>} : vector<8x192xf32>, vector<192x32xf32>, vector<8x32xf32> -> vector<8x32xf32>
    %c0_3 = arith.constant 0 : index
    %c0_4 = arith.constant 0 : index
    %3 = vector.load %arg3[%c0_3, %c0_4] : memref<8x32xf32, #tpu.memory_space<vmem>>, vector<8x32xf32>
    tpu.vector_store %arg3[%c0_3, %c0_4], %2 {strides = array<i32>} : memref<8x32xf32, #tpu.memory_space<vmem>>, vector<8x32xf32>,
    return
  }
  func.func @transform_0(%arg0: i32) -> (i32, i32) {
    %c0_i32 = arith.constant 0 : i32
    %c0_i32_0 = arith.constant 0 : i32
    return %arg0, %c0_i32 : i32, i32
  }
  func.func @transform_1(%arg0: i32) -> (i32, i32) {
    %c0_i32 = arith.constant 0 : i32
    %c0_i32_0 = arith.constant 0 : i32
    %c0_i32_1 = arith.constant 0 : i32
    return %c0_i32, %c0_i32_0 : i32, i32
  }
  func.func @transform_2(%arg0: i32) -> (i32, i32) {
    %c0_i32 = arith.constant 0 : i32
    %c0_i32_0 = arith.constant 0 : i32
    return %arg0, %c0_i32 : i32, i32
  }
}

module attributes {stable_mosaic.version = 11 : i64} {
  func.func @_layernorm_kernel(%arg0: i32, %arg1: memref<10x32xf32, #tpu.memory_space<vmem>>, %arg2: memref<1x32xf32, #tpu.memory_space<vmem>>, %arg3: memref<1x32xf32, #tpu.memory_space<vmem>>, %arg4: memref<10x32xf32, #tpu.memory_space<vmem>>) attributes {dimension_semantics = [#tpu.dimension_semantics<parallel>], iteration_bounds = array<i64: 1>, scalar_prefetch = 0 : i64, scratch_operands = 0 : i64, tpu.core_type = #tpu.core_type<tc>, window_params = [{transform_indices = @transform_0, window_bounds = array<i64: 10, 32>}, {pipeline_mode = #tpu.pipeline_mode<synchronous>, transform_indices = @transform_1, window_bounds = array<i64: 1, 32>}, {pipeline_mode = #tpu.pipeline_mode<synchronous>, transform_indices = @transform_2, window_bounds = array<i64: 1, 32>}, {transform_indices = @transform_3, window_bounds = array<i64: 10, 32>}]} {
    %c0 = arith.constant 0 : index
    %c0_0 = arith.constant 0 : index
    %0 = vector.load %arg1[%c0, %c0_0] : memref<10x32xf32, #tpu.memory_space<vmem>>, vector<10x32xf32>
    %c0_1 = arith.constant 0 : index
    %c0_2 = arith.constant 0 : index
    %1 = vector.load %arg2[%c0_1, %c0_2] : memref<1x32xf32, #tpu.memory_space<vmem>>, vector<1x32xf32>
    %c0_3 = arith.constant 0 : index
    %c0_4 = arith.constant 0 : index
    %2 = vector.load %arg3[%c0_3, %c0_4] : memref<1x32xf32, #tpu.memory_space<vmem>>, vector<1x32xf32>
    %cst = arith.constant dense<0.000000e+00> : vector<10xf32>
    %3 = vector.multi_reduction <add>, %0, %cst [1] : vector<10x32xf32> to vector<10xf32>
    %4 = vector.shape_cast %3 : vector<10xf32> to vector<10x1xf32>
    %cst_5 = arith.constant 3.200000e+01 : f32
    %5 = vector.broadcast %cst_5 : f32 to vector<10x1xf32>
    %6 = arith.divf %4, %5 : vector<10x1xf32>
    %7 = vector.broadcast %6 : vector<10x1xf32> to vector<10x32xf32>
    %8 = arith.subf %0, %7 : vector<10x32xf32>
    %9 = arith.mulf %8, %8 : vector<10x32xf32>
    %cst_6 = arith.constant dense<0.000000e+00> : vector<10xf32>
    %10 = vector.multi_reduction <add>, %9, %cst_6 [1] : vector<10x32xf32> to vector<10xf32>
    %11 = vector.shape_cast %10 : vector<10xf32> to vector<10x1xf32>
    %cst_7 = arith.constant 3.200000e+01 : f32
    %12 = vector.broadcast %cst_7 : f32 to vector<10x1xf32>
    %13 = arith.divf %11, %12 : vector<10x1xf32>
    %14 = vector.broadcast %6 : vector<10x1xf32> to vector<10x32xf32>
    %15 = arith.subf %0, %14 : vector<10x32xf32>
    %cst_8 = arith.constant 9.99999974E-6 : f32
    %16 = vector.broadcast %cst_8 : f32 to vector<10x1xf32>
    %17 = arith.addf %13, %16 : vector<10x1xf32>
    %18 = math.rsqrt %17 : vector<10x1xf32>
    %19 = vector.broadcast %18 : vector<10x1xf32> to vector<10x32xf32>
    %20 = arith.mulf %15, %19 : vector<10x32xf32>
    %21 = vector.broadcast %1 : vector<1x32xf32> to vector<10x32xf32>
    %22 = arith.mulf %20, %21 : vector<10x32xf32>
    %23 = vector.broadcast %2 : vector<1x32xf32> to vector<10x32xf32>
    %24 = arith.addf %22, %23 : vector<10x32xf32>
    %c0_9 = arith.constant 0 : index
    %c0_10 = arith.constant 0 : index
    %25 = vector.load %arg4[%c0_9, %c0_10] : memref<10x32xf32, #tpu.memory_space<vmem>>, vector<10x32xf32>
    tpu.vector_store %arg4[%c0_9, %c0_10], %24 {strides = array<i32>} : memref<10x32xf32, #tpu.memory_space<vmem>>, vector<10x32xf32>,
    return
  }
  func.func @transform_0(%arg0: i32) -> (i32, i32) {
    %c0_i32 = arith.constant 0 : i32
    %c0_i32_0 = arith.constant 0 : i32
    return %arg0, %c0_i32 : i32, i32
  }
  func.func @transform_1(%arg0: i32) -> (i32, i32) {
    %c0_i32 = arith.constant 0 : i32
    %c0_i32_0 = arith.constant 0 : i32
    %c0_i32_1 = arith.constant 0 : i32
    return %c0_i32, %c0_i32_0 : i32, i32
  }
  func.func @transform_2(%arg0: i32) -> (i32, i32) {
    %c0_i32 = arith.constant 0 : i32
    %c0_i32_0 = arith.constant 0 : i32
    %c0_i32_1 = arith.constant 0 : i32
    return %c0_i32, %c0_i32_0 : i32, i32
  }
  func.func @transform_3(%arg0: i32) -> (i32, i32) {
    %c0_i32 = arith.constant 0 : i32
    %c0_i32_0 = arith.constant 0 : i32
    return %arg0, %c0_i32 : i32, i32
  }
}

module attributes {stable_mosaic.version = 11 : i64} {
  func.func @_ln_linear_kernel(%arg0: i32, %arg1: memref<10x32xf32, #tpu.memory_space<vmem>>, %arg2: memref<1x32xf32, #tpu.memory_space<vmem>>, %arg3: memref<1x32xf32, #tpu.memory_space<vmem>>, %arg4: memref<32x96xf32, #tpu.memory_space<vmem>>, %arg5: memref<1x96xf32, #tpu.memory_space<vmem>>, %arg6: memref<10x96xf32, #tpu.memory_space<vmem>>) attributes {dimension_semantics = [#tpu.dimension_semantics<parallel>], iteration_bounds = array<i64: 1>, scalar_prefetch = 0 : i64, scratch_operands = 0 : i64, tpu.core_type = #tpu.core_type<tc>, window_params = [{transform_indices = @transform_0, window_bounds = array<i64: 10, 32>}, {pipeline_mode = #tpu.pipeline_mode<synchronous>, transform_indices = @transform_1, window_bounds = array<i64: 1, 32>}, {pipeline_mode = #tpu.pipeline_mode<synchronous>, transform_indices = @transform_2, window_bounds = array<i64: 1, 32>}, {pipeline_mode = #tpu.pipeline_mode<synchronous>, transform_indices = @transform_3, window_bounds = array<i64: 32, 96>}, {pipeline_mode = #tpu.pipeline_mode<synchronous>, transform_indices = @transform_4, window_bounds = array<i64: 1, 96>}, {transform_indices = @transform_5, window_bounds = array<i64: 10, 96>}]} {
    %c0 = arith.constant 0 : index
    %c0_0 = arith.constant 0 : index
    %0 = vector.load %arg1[%c0, %c0_0] : memref<10x32xf32, #tpu.memory_space<vmem>>, vector<10x32xf32>
    %c0_1 = arith.constant 0 : index
    %c0_2 = arith.constant 0 : index
    %1 = vector.load %arg2[%c0_1, %c0_2] : memref<1x32xf32, #tpu.memory_space<vmem>>, vector<1x32xf32>
    %c0_3 = arith.constant 0 : index
    %c0_4 = arith.constant 0 : index
    %2 = vector.load %arg3[%c0_3, %c0_4] : memref<1x32xf32, #tpu.memory_space<vmem>>, vector<1x32xf32>
    %cst = arith.constant dense<0.000000e+00> : vector<10xf32>
    %3 = vector.multi_reduction <add>, %0, %cst [1] : vector<10x32xf32> to vector<10xf32>
    %4 = vector.shape_cast %3 : vector<10xf32> to vector<10x1xf32>
    %cst_5 = arith.constant 3.200000e+01 : f32
    %5 = vector.broadcast %cst_5 : f32 to vector<10x1xf32>
    %6 = arith.divf %4, %5 : vector<10x1xf32>
    %7 = vector.broadcast %6 : vector<10x1xf32> to vector<10x32xf32>
    %8 = arith.subf %0, %7 : vector<10x32xf32>
    %9 = arith.mulf %8, %8 : vector<10x32xf32>
    %cst_6 = arith.constant dense<0.000000e+00> : vector<10xf32>
    %10 = vector.multi_reduction <add>, %9, %cst_6 [1] : vector<10x32xf32> to vector<10xf32>
    %11 = vector.shape_cast %10 : vector<10xf32> to vector<10x1xf32>
    %cst_7 = arith.constant 3.200000e+01 : f32
    %12 = vector.broadcast %cst_7 : f32 to vector<10x1xf32>
    %13 = arith.divf %11, %12 : vector<10x1xf32>
    %14 = vector.broadcast %6 : vector<10x1xf32> to vector<10x32xf32>
    %15 = arith.subf %0, %14 : vector<10x32xf32>
    %cst_8 = arith.constant 9.99999974E-6 : f32
    %16 = vector.broadcast %cst_8 : f32 to vector<10x1xf32>
    %17 = arith.addf %13, %16 : vector<10x1xf32>
    %18 = math.rsqrt %17 : vector<10x1xf32>
    %19 = vector.broadcast %18 : vector<10x1xf32> to vector<10x32xf32>
    %20 = arith.mulf %15, %19 : vector<10x32xf32>
    %21 = vector.broadcast %1 : vector<1x32xf32> to vector<10x32xf32>
    %22 = arith.mulf %20, %21 : vector<10x32xf32>
    %23 = vector.broadcast %2 : vector<1x32xf32> to vector<10x32xf32>
    %24 = arith.addf %22, %23 : vector<10x32xf32>
    %c0_9 = arith.constant 0 : index
    %c0_10 = arith.constant 0 : index
    %25 = vector.load %arg4[%c0_9, %c0_10] : memref<32x96xf32, #tpu.memory_space<vmem>>, vector<32x96xf32>
    %cst_11 = arith.constant dense<0.000000e+00> : vector<10x96xf32>
    %26 = tpu.matmul %24, %25, %cst_11 {dimension_numbers = #tpu.dot_dimension_numbers<[1], [0], [0], [1], [0, 0, 1, 1], [], []>} : vector<10x32xf32>, vector<32x96xf32>, vector<10x96xf32> -> vector<10x96xf32>
    %c0_12 = arith.constant 0 : index
    %c0_13 = arith.constant 0 : index
    %27 = vector.load %arg5[%c0_12, %c0_13] : memref<1x96xf32, #tpu.memory_space<vmem>>, vector<1x96xf32>
    %28 = vector.broadcast %27 : vector<1x96xf32> to vector<10x96xf32>
    %29 = arith.addf %26, %28 : vector<10x96xf32>
    %c0_14 = arith.constant 0 : index
    %c0_15 = arith.constant 0 : index
    %30 = vector.load %arg6[%c0_14, %c0_15] : memref<10x96xf32, #tpu.memory_space<vmem>>, vector<10x96xf32>
    tpu.vector_store %arg6[%c0_14, %c0_15], %29 {strides = array<i32>} : memref<10x96xf32, #tpu.memory_space<vmem>>, vector<10x96xf32>,
    return
  }
  func.func @transform_0(%arg0: i32) -> (i32, i32) {
    %c0_i32 = arith.constant 0 : i32
    %c0_i32_0 = arith.constant 0 : i32
    return %arg0, %c0_i32 : i32, i32
  }
  func.func @transform_1(%arg0: i32) -> (i32, i32) {
    %c0_i32 = arith.constant 0 : i32
    %c0_i32_0 = arith.constant 0 : i32
    %c0_i32_1 = arith.constant 0 : i32
    return %c0_i32, %c0_i32_0 : i32, i32
  }
  func.func @transform_2(%arg0: i32) -> (i32, i32) {
    %c0_i32 = arith.constant 0 : i32
    %c0_i32_0 = arith.constant 0 : i32
    %c0_i32_1 = arith.constant 0 : i32
    return %c0_i32, %c0_i32_0 : i32, i32
  }
  func.func @transform_3(%arg0: i32) -> (i32, i32) {
    %c0_i32 = arith.constant 0 : i32
    %c0_i32_0 = arith.constant 0 : i32
    %c0_i32_1 = arith.constant 0 : i32
    return %c0_i32, %c0_i32_0 : i32, i32
  }
  func.func @transform_4(%arg0: i32) -> (i32, i32) {
    %c0_i32 = arith.constant 0 : i32
    %c0_i32_0 = arith.constant 0 : i32
    %c0_i32_1 = arith.constant 0 : i32
    return %c0_i32, %c0_i32_0 : i32, i32
  }
  func.func @transform_5(%arg0: i32) -> (i32, i32) {
    %c0_i32 = arith.constant 0 : i32
    %c0_i32_0 = arith.constant 0 : i32
    return %arg0, %c0_i32 : i32, i32
  }
}

module attributes {stable_mosaic.version = 11 : i64} {
  func.func @_attn_kernel(%arg0: i32, %arg1: memref<1x5x96xf32, #tpu.memory_space<vmem>>, %arg2: memref<1x5x32xf32, #tpu.memory_space<vmem>>, %arg3: memref<32x32xf32, #tpu.memory_space<vmem>>, %arg4: memref<1x32xf32, #tpu.memory_space<vmem>>, %arg5: memref<1x5x32xf32, #tpu.memory_space<vmem>>) attributes {dimension_semantics = [#tpu.dimension_semantics<parallel>], iteration_bounds = array<i64: 2>, scalar_prefetch = 0 : i64, scratch_operands = 0 : i64, tpu.core_type = #tpu.core_type<tc>, window_params = [{transform_indices = @transform_0, window_bounds = array<i64: 1, 5, 96>}, {transform_indices = @transform_1, window_bounds = array<i64: 1, 5, 32>}, {pipeline_mode = #tpu.pipeline_mode<synchronous>, transform_indices = @transform_2, window_bounds = array<i64: 32, 32>}, {pipeline_mode = #tpu.pipeline_mode<synchronous>, transform_indices = @transform_3, window_bounds = array<i64: 1, 32>}, {transform_indices = @transform_4, window_bounds = array<i64: 1, 5, 32>}]} {
    %c0 = arith.constant 0 : index
    %c0_0 = arith.constant 0 : index
    %c0_1 = arith.constant 0 : index
    %0 = vector.load %arg1[%c0, %c0_0, %c0_1] : memref<1x5x96xf32, #tpu.memory_space<vmem>>, vector<1x5x96xf32>
    %1 = vector.shape_cast %0 : vector<1x5x96xf32> to vector<5x96xf32>
    %c0_2 = arith.constant 0 : index
    %c0_3 = arith.constant 0 : index
    %2 = vector.load %arg3[%c0_2, %c0_3] : memref<32x32xf32, #tpu.memory_space<vmem>>, vector<32x32xf32>
    %c0_4 = arith.constant 0 : index
    %c0_5 = arith.constant 0 : index
    %c0_6 = arith.constant 0 : index
    %3 = vector.load %arg2[%c0_4, %c0_5, %c0_6] : memref<1x5x32xf32, #tpu.memory_space<vmem>>, vector<1x5x32xf32>
    %4 = vector.shape_cast %3 : vector<1x5x32xf32> to vector<5x32xf32>
    %c0_7 = arith.constant 0 : index
    %c0_8 = arith.constant 0 : index
    %5 = vector.load %arg4[%c0_7, %c0_8] : memref<1x32xf32, #tpu.memory_space<vmem>>, vector<1x32xf32>
    %6 = vector.broadcast %5 : vector<1x32xf32> to vector<5x32xf32>
    %7 = arith.addf %4, %6 : vector<5x32xf32>
    %8 = vector.extract_strided_slice %1 {offsets = [0, 0], sizes = [5, 8], strides = [1, 1]} : vector<5x96xf32> to vector<5x8xf32>
    %cst = arith.constant 0.353553385 : f32
    %9 = vector.broadcast %cst : f32 to vector<5x8xf32>
    %10 = arith.mulf %8, %9 : vector<5x8xf32>
    %11 = vector.extract_strided_slice %1 {offsets = [0, 32], sizes = [5, 8], strides = [1, 1]} : vector<5x96xf32> to vector<5x8xf32>
    %12 = vector.extract_strided_slice %1 {offsets = [0, 64], sizes = [5, 8], strides = [1, 1]} : vector<5x96xf32> to vector<5x8xf32>
    %cst_9 = arith.constant dense<0.000000e+00> : vector<5x5xf32>
    %13 = tpu.matmul %10, %11, %cst_9 {dimension_numbers = #tpu.dot_dimension_numbers<[1], [1], [0], [0], [0, 0, 1, 0], [], []>} : vector<5x8xf32>, vector<5x8xf32>, vector<5x5xf32> -> vector<5x5xf32>
    %cst_10 = arith.constant dense<0xFF800000> : vector<5xf32>
    %14 = vector.multi_reduction <maximumf>, %13, %cst_10 [1] : vector<5x5xf32> to vector<5xf32>
    %15 = vector.shape_cast %14 : vector<5xf32> to vector<5x1xf32>
    %16 = vector.broadcast %15 : vector<5x1xf32> to vector<5x5xf32>
    %17 = arith.subf %13, %16 : vector<5x5xf32>
    %18 = math.exp %17 : vector<5x5xf32>
    %cst_11 = arith.constant dense<0.000000e+00> : vector<5xf32>
    %19 = vector.multi_reduction <add>, %18, %cst_11 [1] : vector<5x5xf32> to vector<5xf32>
    %20 = vector.shape_cast %19 : vector<5xf32> to vector<5x1xf32>
    %21 = tpu.reciprocal %20 {approx = true} : vector<5x1xf32> -> vector<5x1xf32>
    %22 = vector.broadcast %21 : vector<5x1xf32> to vector<5x5xf32>
    %23 = arith.mulf %18, %22 : vector<5x5xf32>
    %cst_12 = arith.constant dense<0.000000e+00> : vector<5x8xf32>
    %24 = tpu.matmul %23, %12, %cst_12 {dimension_numbers = #tpu.dot_dimension_numbers<[1], [0], [0], [1], [0, 0, 1, 1], [], []>} : vector<5x5xf32>, vector<5x8xf32>, vector<5x8xf32> -> vector<5x8xf32>
    %25 = vector.extract_strided_slice %2 {offsets = [0, 0], sizes = [8, 32], strides = [1, 1]} : vector<32x32xf32> to vector<8x32xf32>
    %cst_13 = arith.constant dense<0.000000e+00> : vector<5x32xf32>
    %26 = tpu.matmul %24, %25, %cst_13 {dimension_numbers = #tpu.dot_dimension_numbers<[1], [0], [0], [1], [0, 0, 1, 1], [], []>} : vector<5x8xf32>, vector<8x32xf32>, vector<5x32xf32> -> vector<5x32xf32>
    %27 = arith.addf %7, %26 : vector<5x32xf32>
    %28 = vector.extract_strided_slice %1 {offsets = [0, 8], sizes = [5, 8], strides = [1, 1]} : vector<5x96xf32> to vector<5x8xf32>
    %cst_14 = arith.constant 0.353553385 : f32
    %29 = vector.broadcast %cst_14 : f32 to vector<5x8xf32>
    %30 = arith.mulf %28, %29 : vector<5x8xf32>
    %31 = vector.extract_strided_slice %1 {offsets = [0, 40], sizes = [5, 8], strides = [1, 1]} : vector<5x96xf32> to vector<5x8xf32>
    %32 = vector.extract_strided_slice %1 {offsets = [0, 72], sizes = [5, 8], strides = [1, 1]} : vector<5x96xf32> to vector<5x8xf32>
    %cst_15 = arith.constant dense<0.000000e+00> : vector<5x5xf32>
    %33 = tpu.matmul %30, %31, %cst_15 {dimension_numbers = #tpu.dot_dimension_numbers<[1], [1], [0], [0], [0, 0, 1, 0], [], []>} : vector<5x8xf32>, vector<5x8xf32>, vector<5x5xf32> -> vector<5x5xf32>
    %cst_16 = arith.constant dense<0xFF800000> : vector<5xf32>
    %34 = vector.multi_reduction <maximumf>, %33, %cst_16 [1] : vector<5x5xf32> to vector<5xf32>
    %35 = vector.shape_cast %34 : vector<5xf32> to vector<5x1xf32>
    %36 = vector.broadcast %35 : vector<5x1xf32> to vector<5x5xf32>
    %37 = arith.subf %33, %36 : vector<5x5xf32>
    %38 = math.exp %37 : vector<5x5xf32>
    %cst_17 = arith.constant dense<0.000000e+00> : vector<5xf32>
    %39 = vector.multi_reduction <add>, %38, %cst_17 [1] : vector<5x5xf32> to vector<5xf32>
    %40 = vector.shape_cast %39 : vector<5xf32> to vector<5x1xf32>
    %41 = tpu.reciprocal %40 {approx = true} : vector<5x1xf32> -> vector<5x1xf32>
    %42 = vector.broadcast %41 : vector<5x1xf32> to vector<5x5xf32>
    %43 = arith.mulf %38, %42 : vector<5x5xf32>
    %cst_18 = arith.constant dense<0.000000e+00> : vector<5x8xf32>
    %44 = tpu.matmul %43, %32, %cst_18 {dimension_numbers = #tpu.dot_dimension_numbers<[1], [0], [0], [1], [0, 0, 1, 1], [], []>} : vector<5x5xf32>, vector<5x8xf32>, vector<5x8xf32> -> vector<5x8xf32>
    %45 = vector.extract_strided_slice %2 {offsets = [8, 0], sizes = [8, 32], strides = [1, 1]} : vector<32x32xf32> to vector<8x32xf32>
    %cst_19 = arith.constant dense<0.000000e+00> : vector<5x32xf32>
    %46 = tpu.matmul %44, %45, %cst_19 {dimension_numbers = #tpu.dot_dimension_numbers<[1], [0], [0], [1], [0, 0, 1, 1], [], []>} : vector<5x8xf32>, vector<8x32xf32>, vector<5x32xf32> -> vector<5x32xf32>
    %47 = arith.addf %27, %46 : vector<5x32xf32>
    %48 = vector.extract_strided_slice %1 {offsets = [0, 16], sizes = [5, 8], strides = [1, 1]} : vector<5x96xf32> to vector<5x8xf32>
    %cst_20 = arith.constant 0.353553385 : f32
    %49 = vector.broadcast %cst_20 : f32 to vector<5x8xf32>
    %50 = arith.mulf %48, %49 : vector<5x8xf32>
    %51 = vector.extract_strided_slice %1 {offsets = [0, 48], sizes = [5, 8], strides = [1, 1]} : vector<5x96xf32> to vector<5x8xf32>
    %52 = vector.extract_strided_slice %1 {offsets = [0, 80], sizes = [5, 8], strides = [1, 1]} : vector<5x96xf32> to vector<5x8xf32>
    %cst_21 = arith.constant dense<0.000000e+00> : vector<5x5xf32>
    %53 = tpu.matmul %50, %51, %cst_21 {dimension_numbers = #tpu.dot_dimension_numbers<[1], [1], [0], [0], [0, 0, 1, 0], [], []>} : vector<5x8xf32>, vector<5x8xf32>, vector<5x5xf32> -> vector<5x5xf32>
    %cst_22 = arith.constant dense<0xFF800000> : vector<5xf32>
    %54 = vector.multi_reduction <maximumf>, %53, %cst_22 [1] : vector<5x5xf32> to vector<5xf32>
    %55 = vector.shape_cast %54 : vector<5xf32> to vector<5x1xf32>
    %56 = vector.broadcast %55 : vector<5x1xf32> to vector<5x5xf32>
    %57 = arith.subf %53, %56 : vector<5x5xf32>
    %58 = math.exp %57 : vector<5x5xf32>
    %cst_23 = arith.constant dense<0.000000e+00> : vector<5xf32>
    %59 = vector.multi_reduction <add>, %58, %cst_23 [1] : vector<5x5xf32> to vector<5xf32>
    %60 = vector.shape_cast %59 : vector<5xf32> to vector<5x1xf32>
    %61 = tpu.reciprocal %60 {approx = true} : vector<5x1xf32> -> vector<5x1xf32>
    %62 = vector.broadcast %61 : vector<5x1xf32> to vector<5x5xf32>
    %63 = arith.mulf %58, %62 : vector<5x5xf32>
    %cst_24 = arith.constant dense<0.000000e+00> : vector<5x8xf32>
    %64 = tpu.matmul %63, %52, %cst_24 {dimension_numbers = #tpu.dot_dimension_numbers<[1], [0], [0], [1], [0, 0, 1, 1], [], []>} : vector<5x5xf32>, vector<5x8xf32>, vector<5x8xf32> -> vector<5x8xf32>
    %65 = vector.extract_strided_slice %2 {offsets = [16, 0], sizes = [8, 32], strides = [1, 1]} : vector<32x32xf32> to vector<8x32xf32>
    %cst_25 = arith.constant dense<0.000000e+00> : vector<5x32xf32>
    %66 = tpu.matmul %64, %65, %cst_25 {dimension_numbers = #tpu.dot_dimension_numbers<[1], [0], [0], [1], [0, 0, 1, 1], [], []>} : vector<5x8xf32>, vector<8x32xf32>, vector<5x32xf32> -> vector<5x32xf32>
    %67 = arith.addf %47, %66 : vector<5x32xf32>
    %68 = vector.extract_strided_slice %1 {offsets = [0, 24], sizes = [5, 8], strides = [1, 1]} : vector<5x96xf32> to vector<5x8xf32>
    %cst_26 = arith.constant 0.353553385 : f32
    %69 = vector.broadcast %cst_26 : f32 to vector<5x8xf32>
    %70 = arith.mulf %68, %69 : vector<5x8xf32>
    %71 = vector.extract_strided_slice %1 {offsets = [0, 56], sizes = [5, 8], strides = [1, 1]} : vector<5x96xf32> to vector<5x8xf32>
    %72 = vector.extract_strided_slice %1 {offsets = [0, 88], sizes = [5, 8], strides = [1, 1]} : vector<5x96xf32> to vector<5x8xf32>
    %cst_27 = arith.constant dense<0.000000e+00> : vector<5x5xf32>
    %73 = tpu.matmul %70, %71, %cst_27 {dimension_numbers = #tpu.dot_dimension_numbers<[1], [1], [0], [0], [0, 0, 1, 0], [], []>} : vector<5x8xf32>, vector<5x8xf32>, vector<5x5xf32> -> vector<5x5xf32>
    %cst_28 = arith.constant dense<0xFF800000> : vector<5xf32>
    %74 = vector.multi_reduction <maximumf>, %73, %cst_28 [1] : vector<5x5xf32> to vector<5xf32>
    %75 = vector.shape_cast %74 : vector<5xf32> to vector<5x1xf32>
    %76 = vector.broadcast %75 : vector<5x1xf32> to vector<5x5xf32>
    %77 = arith.subf %73, %76 : vector<5x5xf32>
    %78 = math.exp %77 : vector<5x5xf32>
    %cst_29 = arith.constant dense<0.000000e+00> : vector<5xf32>
    %79 = vector.multi_reduction <add>, %78, %cst_29 [1] : vector<5x5xf32> to vector<5xf32>
    %80 = vector.shape_cast %79 : vector<5xf32> to vector<5x1xf32>
    %81 = tpu.reciprocal %80 {approx = true} : vector<5x1xf32> -> vector<5x1xf32>
    %82 = vector.broadcast %81 : vector<5x1xf32> to vector<5x5xf32>
    %83 = arith.mulf %78, %82 : vector<5x5xf32>
    %cst_30 = arith.constant dense<0.000000e+00> : vector<5x8xf32>
    %84 = tpu.matmul %83, %72, %cst_30 {dimension_numbers = #tpu.dot_dimension_numbers<[1], [0], [0], [1], [0, 0, 1, 1], [], []>} : vector<5x5xf32>, vector<5x8xf32>, vector<5x8xf32> -> vector<5x8xf32>
    %85 = vector.extract_strided_slice %2 {offsets = [24, 0], sizes = [8, 32], strides = [1, 1]} : vector<32x32xf32> to vector<8x32xf32>
    %cst_31 = arith.constant dense<0.000000e+00> : vector<5x32xf32>
    %86 = tpu.matmul %84, %85, %cst_31 {dimension_numbers = #tpu.dot_dimension_numbers<[1], [0], [0], [1], [0, 0, 1, 1], [], []>} : vector<5x8xf32>, vector<8x32xf32>, vector<5x32xf32> -> vector<5x32xf32>
    %87 = arith.addf %67, %86 : vector<5x32xf32>
    %c0_32 = arith.constant 0 : index
    %c0_33 = arith.constant 0 : index
    %c0_34 = arith.constant 0 : index
    %88 = vector.load %arg5[%c0_32, %c0_33, %c0_34] : memref<1x5x32xf32, #tpu.memory_space<vmem>>, vector<1x5x32xf32>
    %89 = vector.shape_cast %88 : vector<1x5x32xf32> to vector<5x32xf32>
    %90 = vector.shape_cast %87 : vector<5x32xf32> to vector<1x5x32xf32>
    tpu.vector_store %arg5[%c0_32, %c0_33, %c0_34], %90 {strides = array<i32>} : memref<1x5x32xf32, #tpu.memory_space<vmem>>, vector<1x5x32xf32>,
    return
  }
  func.func @transform_0(%arg0: i32) -> (i32, i32, i32) {
    %c0_i32 = arith.constant 0 : i32
    %c0_i32_0 = arith.constant 0 : i32
    %c0_i32_1 = arith.constant 0 : i32
    return %arg0, %c0_i32, %c0_i32_0 : i32, i32, i32
  }
  func.func @transform_1(%arg0: i32) -> (i32, i32, i32) {
    %c0_i32 = arith.constant 0 : i32
    %c0_i32_0 = arith.constant 0 : i32
    %c0_i32_1 = arith.constant 0 : i32
    return %arg0, %c0_i32, %c0_i32_0 : i32, i32, i32
  }
  func.func @transform_2(%arg0: i32) -> (i32, i32) {
    %c0_i32 = arith.constant 0 : i32
    %c0_i32_0 = arith.constant 0 : i32
    %c0_i32_1 = arith.constant 0 : i32
    return %c0_i32, %c0_i32_0 : i32, i32
  }
  func.func @transform_3(%arg0: i32) -> (i32, i32) {
    %c0_i32 = arith.constant 0 : i32
    %c0_i32_0 = arith.constant 0 : i32
    %c0_i32_1 = arith.constant 0 : i32
    return %c0_i32, %c0_i32_0 : i32, i32
  }
  func.func @transform_4(%arg0: i32) -> (i32, i32, i32) {
    %c0_i32 = arith.constant 0 : i32
    %c0_i32_0 = arith.constant 0 : i32
    %c0_i32_1 = arith.constant 0 : i32
    return %arg0, %c0_i32, %c0_i32_0 : i32, i32, i32
  }
}

module attributes {stable_mosaic.version = 11 : i64} {
  func.func @_ln_mlp_kernel(%arg0: i32, %arg1: memref<10x32xf32, #tpu.memory_space<vmem>>, %arg2: memref<1x32xf32, #tpu.memory_space<vmem>>, %arg3: memref<1x32xf32, #tpu.memory_space<vmem>>, %arg4: memref<32x128xf32, #tpu.memory_space<vmem>>, %arg5: memref<1x128xf32, #tpu.memory_space<vmem>>, %arg6: memref<128x32xf32, #tpu.memory_space<vmem>>, %arg7: memref<1x32xf32, #tpu.memory_space<vmem>>, %arg8: memref<10x32xf32, #tpu.memory_space<vmem>>) attributes {dimension_semantics = [#tpu.dimension_semantics<parallel>], iteration_bounds = array<i64: 1>, scalar_prefetch = 0 : i64, scratch_operands = 0 : i64, tpu.core_type = #tpu.core_type<tc>, window_params = [{transform_indices = @transform_0, window_bounds = array<i64: 10, 32>}, {pipeline_mode = #tpu.pipeline_mode<synchronous>, transform_indices = @transform_1, window_bounds = array<i64: 1, 32>}, {pipeline_mode = #tpu.pipeline_mode<synchronous>, transform_indices = @transform_2, window_bounds = array<i64: 1, 32>}, {pipeline_mode = #tpu.pipeline_mode<synchronous>, transform_indices = @transform_3, window_bounds = array<i64: 32, 128>}, {pipeline_mode = #tpu.pipeline_mode<synchronous>, transform_indices = @transform_4, window_bounds = array<i64: 1, 128>}, {pipeline_mode = #tpu.pipeline_mode<synchronous>, transform_indices = @transform_5, window_bounds = array<i64: 128, 32>}, {pipeline_mode = #tpu.pipeline_mode<synchronous>, transform_indices = @transform_6, window_bounds = array<i64: 1, 32>}, {transform_indices = @transform_7, window_bounds = array<i64: 10, 32>}]} {
    %c0 = arith.constant 0 : index
    %c0_0 = arith.constant 0 : index
    %0 = vector.load %arg1[%c0, %c0_0] : memref<10x32xf32, #tpu.memory_space<vmem>>, vector<10x32xf32>
    %c0_1 = arith.constant 0 : index
    %c0_2 = arith.constant 0 : index
    %1 = vector.load %arg2[%c0_1, %c0_2] : memref<1x32xf32, #tpu.memory_space<vmem>>, vector<1x32xf32>
    %c0_3 = arith.constant 0 : index
    %c0_4 = arith.constant 0 : index
    %2 = vector.load %arg3[%c0_3, %c0_4] : memref<1x32xf32, #tpu.memory_space<vmem>>, vector<1x32xf32>
    %cst = arith.constant dense<0.000000e+00> : vector<10xf32>
    %3 = vector.multi_reduction <add>, %0, %cst [1] : vector<10x32xf32> to vector<10xf32>
    %4 = vector.shape_cast %3 : vector<10xf32> to vector<10x1xf32>
    %cst_5 = arith.constant 3.200000e+01 : f32
    %5 = vector.broadcast %cst_5 : f32 to vector<10x1xf32>
    %6 = arith.divf %4, %5 : vector<10x1xf32>
    %7 = vector.broadcast %6 : vector<10x1xf32> to vector<10x32xf32>
    %8 = arith.subf %0, %7 : vector<10x32xf32>
    %9 = arith.mulf %8, %8 : vector<10x32xf32>
    %cst_6 = arith.constant dense<0.000000e+00> : vector<10xf32>
    %10 = vector.multi_reduction <add>, %9, %cst_6 [1] : vector<10x32xf32> to vector<10xf32>
    %11 = vector.shape_cast %10 : vector<10xf32> to vector<10x1xf32>
    %cst_7 = arith.constant 3.200000e+01 : f32
    %12 = vector.broadcast %cst_7 : f32 to vector<10x1xf32>
    %13 = arith.divf %11, %12 : vector<10x1xf32>
    %14 = vector.broadcast %6 : vector<10x1xf32> to vector<10x32xf32>
    %15 = arith.subf %0, %14 : vector<10x32xf32>
    %cst_8 = arith.constant 9.99999974E-6 : f32
    %16 = vector.broadcast %cst_8 : f32 to vector<10x1xf32>
    %17 = arith.addf %13, %16 : vector<10x1xf32>
    %18 = math.rsqrt %17 : vector<10x1xf32>
    %19 = vector.broadcast %18 : vector<10x1xf32> to vector<10x32xf32>
    %20 = arith.mulf %15, %19 : vector<10x32xf32>
    %21 = vector.broadcast %1 : vector<1x32xf32> to vector<10x32xf32>
    %22 = arith.mulf %20, %21 : vector<10x32xf32>
    %23 = vector.broadcast %2 : vector<1x32xf32> to vector<10x32xf32>
    %24 = arith.addf %22, %23 : vector<10x32xf32>
    %c0_9 = arith.constant 0 : index
    %c0_10 = arith.constant 0 : index
    %25 = vector.load %arg4[%c0_9, %c0_10] : memref<32x128xf32, #tpu.memory_space<vmem>>, vector<32x128xf32>
    %cst_11 = arith.constant dense<0.000000e+00> : vector<10x128xf32>
    %26 = tpu.matmul %24, %25, %cst_11 {dimension_numbers = #tpu.dot_dimension_numbers<[1], [0], [0], [1], [0, 0, 1, 1], [], []>} : vector<10x32xf32>, vector<32x128xf32>, vector<10x128xf32> -> vector<10x128xf32>
    %c0_12 = arith.constant 0 : index
    %c0_13 = arith.constant 0 : index
    %27 = vector.load %arg5[%c0_12, %c0_13] : memref<1x128xf32, #tpu.memory_space<vmem>>, vector<1x128xf32>
    %28 = vector.broadcast %27 : vector<1x128xf32> to vector<10x128xf32>
    %29 = arith.addf %26, %28 : vector<10x128xf32>
    %cst_14 = arith.constant -1.702000e+00 : f32
    %30 = vector.broadcast %cst_14 : f32 to vector<10x128xf32>
    %31 = arith.mulf %30, %29 : vector<10x128xf32>
    %32 = math.exp %31 : vector<10x128xf32>
    %cst_15 = arith.constant 1.000000e+00 : f32
    %33 = vector.broadcast %cst_15 : f32 to vector<10x128xf32>
    %34 = arith.addf %33, %32 : vector<10x128xf32>
    %cst_16 = arith.constant 1.000000e+00 : f32
    %35 = vector.broadcast %cst_16 : f32 to vector<10x128xf32>
    %36 = arith.divf %35, %34 : vector<10x128xf32>
    %37 = arith.mulf %29, %36 : vector<10x128xf32>
    %c0_17 = arith.constant 0 : index
    %c0_18 = arith.constant 0 : index
    %38 = vector.load %arg6[%c0_17, %c0_18] : memref<128x32xf32, #tpu.memory_space<vmem>>, vector<128x32xf32>
    %cst_19 = arith.constant dense<0.000000e+00> : vector<10x32xf32>
    %39 = tpu.matmul %37, %38, %cst_19 {dimension_numbers = #tpu.dot_dimension_numbers<[1], [0], [0], [1], [0, 0, 1, 1], [], []>} : vector<10x128xf32>, vector<128x32xf32>, vector<10x32xf32> -> vector<10x32xf32>
    %c0_20 = arith.constant 0 : index
    %c0_21 = arith.constant 0 : index
    %40 = vector.load %arg7[%c0_20, %c0_21] : memref<1x32xf32, #tpu.memory_space<vmem>>, vector<1x32xf32>
    %41 = vector.broadcast %40 : vector<1x32xf32> to vector<10x32xf32>
    %42 = arith.addf %39, %41 : vector<10x32xf32>
    %43 = arith.addf %0, %42 : vector<10x32xf32>
    %c0_22 = arith.constant 0 : index
    %c0_23 = arith.constant 0 : index
    %44 = vector.load %arg8[%c0_22, %c0_23] : memref<10x32xf32, #tpu.memory_space<vmem>>, vector<10x32xf32>
    tpu.vector_store %arg8[%c0_22, %c0_23], %43 {strides = array<i32>} : memref<10x32xf32, #tpu.memory_space<vmem>>, vector<10x32xf32>,
    return
  }
  func.func @transform_0(%arg0: i32) -> (i32, i32) {
    %c0_i32 = arith.constant 0 : i32
    %c0_i32_0 = arith.constant 0 : i32
    return %arg0, %c0_i32 : i32, i32
  }
  func.func @transform_1(%arg0: i32) -> (i32, i32) {
    %c0_i32 = arith.constant 0 : i32
    %c0_i32_0 = arith.constant 0 : i32
    %c0_i32_1 = arith.constant 0 : i32
    return %c0_i32, %c0_i32_0 : i32, i32
  }
  func.func @transform_2(%arg0: i32) -> (i32, i32) {
    %c0_i32 = arith.constant 0 : i32
    %c0_i32_0 = arith.constant 0 : i32
    %c0_i32_1 = arith.constant 0 : i32
    return %c0_i32, %c0_i32_0 : i32, i32
  }
  func.func @transform_3(%arg0: i32) -> (i32, i32) {
    %c0_i32 = arith.constant 0 : i32
    %c0_i32_0 = arith.constant 0 : i32
    %c0_i32_1 = arith.constant 0 : i32
    return %c0_i32, %c0_i32_0 : i32, i32
  }
  func.func @transform_4(%arg0: i32) -> (i32, i32) {
    %c0_i32 = arith.constant 0 : i32
    %c0_i32_0 = arith.constant 0 : i32
    %c0_i32_1 = arith.constant 0 : i32
    return %c0_i32, %c0_i32_0 : i32, i32
  }
  func.func @transform_5(%arg0: i32) -> (i32, i32) {
    %c0_i32 = arith.constant 0 : i32
    %c0_i32_0 = arith.constant 0 : i32
    %c0_i32_1 = arith.constant 0 : i32
    return %c0_i32, %c0_i32_0 : i32, i32
  }
  func.func @transform_6(%arg0: i32) -> (i32, i32) {
    %c0_i32 = arith.constant 0 : i32
    %c0_i32_0 = arith.constant 0 : i32
    %c0_i32_1 = arith.constant 0 : i32
    return %c0_i32, %c0_i32_0 : i32, i32
  }
  func.func @transform_7(%arg0: i32) -> (i32, i32) {
    %c0_i32 = arith.constant 0 : i32
    %c0_i32_0 = arith.constant 0 : i32
    return %arg0, %c0_i32 : i32, i32
  }
}

module attributes {stable_mosaic.version = 11 : i64} {
  func.func @_linear_residual_kernel(%arg0: i32, %arg1: memref<10x32xf32, #tpu.memory_space<vmem>>, %arg2: memref<10x32xf32, #tpu.memory_space<vmem>>, %arg3: memref<32x32xf32, #tpu.memory_space<vmem>>, %arg4: memref<1x32xf32, #tpu.memory_space<vmem>>, %arg5: memref<10x32xf32, #tpu.memory_space<vmem>>) attributes {dimension_semantics = [#tpu.dimension_semantics<parallel>], iteration_bounds = array<i64: 1>, scalar_prefetch = 0 : i64, scratch_operands = 0 : i64, tpu.core_type = #tpu.core_type<tc>, window_params = [{transform_indices = @transform_0, window_bounds = array<i64: 10, 32>}, {transform_indices = @transform_1, window_bounds = array<i64: 10, 32>}, {pipeline_mode = #tpu.pipeline_mode<synchronous>, transform_indices = @transform_2, window_bounds = array<i64: 32, 32>}, {pipeline_mode = #tpu.pipeline_mode<synchronous>, transform_indices = @transform_3, window_bounds = array<i64: 1, 32>}, {transform_indices = @transform_4, window_bounds = array<i64: 10, 32>}]} {
    %c0 = arith.constant 0 : index
    %c0_0 = arith.constant 0 : index
    %0 = vector.load %arg1[%c0, %c0_0] : memref<10x32xf32, #tpu.memory_space<vmem>>, vector<10x32xf32>
    %c0_1 = arith.constant 0 : index
    %c0_2 = arith.constant 0 : index
    %1 = vector.load %arg3[%c0_1, %c0_2] : memref<32x32xf32, #tpu.memory_space<vmem>>, vector<32x32xf32>
    %cst = arith.constant dense<0.000000e+00> : vector<10x32xf32>
    %2 = tpu.matmul %0, %1, %cst {dimension_numbers = #tpu.dot_dimension_numbers<[1], [0], [0], [1], [0, 0, 1, 1], [], []>} : vector<10x32xf32>, vector<32x32xf32>, vector<10x32xf32> -> vector<10x32xf32>
    %c0_3 = arith.constant 0 : index
    %c0_4 = arith.constant 0 : index
    %3 = vector.load %arg2[%c0_3, %c0_4] : memref<10x32xf32, #tpu.memory_space<vmem>>, vector<10x32xf32>
    %4 = arith.addf %3, %2 : vector<10x32xf32>
    %c0_5 = arith.constant 0 : index
    %c0_6 = arith.constant 0 : index
    %5 = vector.load %arg4[%c0_5, %c0_6] : memref<1x32xf32, #tpu.memory_space<vmem>>, vector<1x32xf32>
    %6 = vector.broadcast %5 : vector<1x32xf32> to vector<10x32xf32>
    %7 = arith.addf %4, %6 : vector<10x32xf32>
    %c0_7 = arith.constant 0 : index
    %c0_8 = arith.constant 0 : index
    %8 = vector.load %arg5[%c0_7, %c0_8] : memref<10x32xf32, #tpu.memory_space<vmem>>, vector<10x32xf32>
    tpu.vector_store %arg5[%c0_7, %c0_8], %7 {strides = array<i32>} : memref<10x32xf32, #tpu.memory_space<vmem>>, vector<10x32xf32>,
    return
  }
  func.func @transform_0(%arg0: i32) -> (i32, i32) {
    %c0_i32 = arith.constant 0 : i32
    %c0_i32_0 = arith.constant 0 : i32
    return %arg0, %c0_i32 : i32, i32
  }
  func.func @transform_1(%arg0: i32) -> (i32, i32) {
    %c0_i32 = arith.constant 0 : i32
    %c0_i32_0 = arith.constant 0 : i32
    return %arg0, %c0_i32 : i32, i32
  }
  func.func @transform_2(%arg0: i32) -> (i32, i32) {
    %c0_i32 = arith.constant 0 : i32
    %c0_i32_0 = arith.constant 0 : i32
    %c0_i32_1 = arith.constant 0 : i32
    return %c0_i32, %c0_i32_0 : i32, i32
  }
  func.func @transform_3(%arg0: i32) -> (i32, i32) {
    %c0_i32 = arith.constant 0 : i32
    %c0_i32_0 = arith.constant 0 : i32
    %c0_i32_1 = arith.constant 0 : i32
    return %c0_i32, %c0_i32_0 : i32, i32
  }
  func.func @transform_4(%arg0: i32) -> (i32, i32) {
    %c0_i32 = arith.constant 0 : i32
    %c0_i32_0 = arith.constant 0 : i32
    return %arg0, %c0_i32 : i32, i32
  }
}

module attributes {stable_mosaic.version = 11 : i64} {
  func.func @_layernorm_kernel(%arg0: i32, %arg1: memref<2x32xf32, #tpu.memory_space<vmem>>, %arg2: memref<1x32xf32, #tpu.memory_space<vmem>>, %arg3: memref<1x32xf32, #tpu.memory_space<vmem>>, %arg4: memref<2x32xf32, #tpu.memory_space<vmem>>) attributes {dimension_semantics = [#tpu.dimension_semantics<parallel>], iteration_bounds = array<i64: 1>, scalar_prefetch = 0 : i64, scratch_operands = 0 : i64, tpu.core_type = #tpu.core_type<tc>, window_params = [{transform_indices = @transform_0, window_bounds = array<i64: 2, 32>}, {pipeline_mode = #tpu.pipeline_mode<synchronous>, transform_indices = @transform_1, window_bounds = array<i64: 1, 32>}, {pipeline_mode = #tpu.pipeline_mode<synchronous>, transform_indices = @transform_2, window_bounds = array<i64: 1, 32>}, {transform_indices = @transform_3, window_bounds = array<i64: 2, 32>}]} {
    %c0 = arith.constant 0 : index
    %c0_0 = arith.constant 0 : index
    %0 = vector.load %arg1[%c0, %c0_0] : memref<2x32xf32, #tpu.memory_space<vmem>>, vector<2x32xf32>
    %c0_1 = arith.constant 0 : index
    %c0_2 = arith.constant 0 : index
    %1 = vector.load %arg2[%c0_1, %c0_2] : memref<1x32xf32, #tpu.memory_space<vmem>>, vector<1x32xf32>
    %c0_3 = arith.constant 0 : index
    %c0_4 = arith.constant 0 : index
    %2 = vector.load %arg3[%c0_3, %c0_4] : memref<1x32xf32, #tpu.memory_space<vmem>>, vector<1x32xf32>
    %cst = arith.constant dense<0.000000e+00> : vector<2xf32>
    %3 = vector.multi_reduction <add>, %0, %cst [1] : vector<2x32xf32> to vector<2xf32>
    %4 = vector.shape_cast %3 : vector<2xf32> to vector<2x1xf32>
    %cst_5 = arith.constant 3.200000e+01 : f32
    %5 = vector.broadcast %cst_5 : f32 to vector<2x1xf32>
    %6 = arith.divf %4, %5 : vector<2x1xf32>
    %7 = vector.broadcast %6 : vector<2x1xf32> to vector<2x32xf32>
    %8 = arith.subf %0, %7 : vector<2x32xf32>
    %9 = arith.mulf %8, %8 : vector<2x32xf32>
    %cst_6 = arith.constant dense<0.000000e+00> : vector<2xf32>
    %10 = vector.multi_reduction <add>, %9, %cst_6 [1] : vector<2x32xf32> to vector<2xf32>
    %11 = vector.shape_cast %10 : vector<2xf32> to vector<2x1xf32>
    %cst_7 = arith.constant 3.200000e+01 : f32
    %12 = vector.broadcast %cst_7 : f32 to vector<2x1xf32>
    %13 = arith.divf %11, %12 : vector<2x1xf32>
    %14 = vector.broadcast %6 : vector<2x1xf32> to vector<2x32xf32>
    %15 = arith.subf %0, %14 : vector<2x32xf32>
    %cst_8 = arith.constant 9.99999974E-6 : f32
    %16 = vector.broadcast %cst_8 : f32 to vector<2x1xf32>
    %17 = arith.addf %13, %16 : vector<2x1xf32>
    %18 = math.rsqrt %17 : vector<2x1xf32>
    %19 = vector.broadcast %18 : vector<2x1xf32> to vector<2x32xf32>
    %20 = arith.mulf %15, %19 : vector<2x32xf32>
    %21 = vector.broadcast %1 : vector<1x32xf32> to vector<2x32xf32>
    %22 = arith.mulf %20, %21 : vector<2x32xf32>
    %23 = vector.broadcast %2 : vector<1x32xf32> to vector<2x32xf32>
    %24 = arith.addf %22, %23 : vector<2x32xf32>
    %c0_9 = arith.constant 0 : index
    %c0_10 = arith.constant 0 : index
    %25 = vector.load %arg4[%c0_9, %c0_10] : memref<2x32xf32, #tpu.memory_space<vmem>>, vector<2x32xf32>
    tpu.vector_store %arg4[%c0_9, %c0_10], %24 {strides = array<i32>} : memref<2x32xf32, #tpu.memory_space<vmem>>, vector<2x32xf32>,
    return
  }
  func.func @transform_0(%arg0: i32) -> (i32, i32) {
    %c0_i32 = arith.constant 0 : i32
    %c0_i32_0 = arith.constant 0 : i32
    return %arg0, %c0_i32 : i32, i32
  }
  func.func @transform_1(%arg0: i32) -> (i32, i32) {
    %c0_i32 = arith.constant 0 : i32
    %c0_i32_0 = arith.constant 0 : i32
    %c0_i32_1 = arith.constant 0 : i32
    return %c0_i32, %c0_i32_0 : i32, i32
  }
  func.func @transform_2(%arg0: i32) -> (i32, i32) {
    %c0_i32 = arith.constant 0 : i32
    %c0_i32_0 = arith.constant 0 : i32
    %c0_i32_1 = arith.constant 0 : i32
    return %c0_i32, %c0_i32_0 : i32, i32
  }
  func.func @transform_3(%arg0: i32) -> (i32, i32) {
    %c0_i32 = arith.constant 0 : i32
    %c0_i32_0 = arith.constant 0 : i32
    return %arg0, %c0_i32 : i32, i32
  }
}

module attributes {stable_mosaic.version = 11 : i64} {
  func.func @_matmul_kernel(%arg0: i32, %arg1: memref<10x32xf32, #tpu.memory_space<vmem>>, %arg2: memref<32x16xf32, #tpu.memory_space<vmem>>, %arg3: memref<10x16xf32, #tpu.memory_space<vmem>>) attributes {dimension_semantics = [#tpu.dimension_semantics<parallel>], iteration_bounds = array<i64: 1>, scalar_prefetch = 0 : i64, scratch_operands = 0 : i64, tpu.core_type = #tpu.core_type<tc>, window_params = [{transform_indices = @transform_0, window_bounds = array<i64: 10, 32>}, {pipeline_mode = #tpu.pipeline_mode<synchronous>, transform_indices = @transform_1, window_bounds = array<i64: 32, 16>}, {transform_indices = @transform_2, window_bounds = array<i64: 10, 16>}]} {
    %c0 = arith.constant 0 : index
    %c0_0 = arith.constant 0 : index
    %0 = vector.load %arg1[%c0, %c0_0] : memref<10x32xf32, #tpu.memory_space<vmem>>, vector<10x32xf32>
    %c0_1 = arith.constant 0 : index
    %c0_2 = arith.constant 0 : index
    %1 = vector.load %arg2[%c0_1, %c0_2] : memref<32x16xf32, #tpu.memory_space<vmem>>, vector<32x16xf32>
    %cst = arith.constant dense<0.000000e+00> : vector<10x16xf32>
    %2 = tpu.matmul %0, %1, %cst {dimension_numbers = #tpu.dot_dimension_numbers<[1], [0], [0], [1], [0, 0, 1, 1], [], []>} : vector<10x32xf32>, vector<32x16xf32>, vector<10x16xf32> -> vector<10x16xf32>
    %c0_3 = arith.constant 0 : index
    %c0_4 = arith.constant 0 : index
    %3 = vector.load %arg3[%c0_3, %c0_4] : memref<10x16xf32, #tpu.memory_space<vmem>>, vector<10x16xf32>
    tpu.vector_store %arg3[%c0_3, %c0_4], %2 {strides = array<i32>} : memref<10x16xf32, #tpu.memory_space<vmem>>, vector<10x16xf32>,
    return
  }
  func.func @transform_0(%arg0: i32) -> (i32, i32) {
    %c0_i32 = arith.constant 0 : i32
    %c0_i32_0 = arith.constant 0 : i32
    return %arg0, %c0_i32 : i32, i32
  }
  func.func @transform_1(%arg0: i32) -> (i32, i32) {
    %c0_i32 = arith.constant 0 : i32
    %c0_i32_0 = arith.constant 0 : i32
    %c0_i32_1 = arith.constant 0 : i32
    return %c0_i32, %c0_i32_0 : i32, i32
  }
  func.func @transform_2(%arg0: i32) -> (i32, i32) {
    %c0_i32 = arith.constant 0 : i32
    %c0_i32_0 = arith.constant 0 : i32
    return %arg0, %c0_i32 : i32, i32
  }
}

</mosaic_0001>

<llo_original>
// kernel: vit_forward.12
$region0: #{vit_forward.12}
  #allocation0 [shape = 'u32[]', space=smem, size = 0x4, offset = 0x4, fixed_abs, tag = 'smem constant byte address 0x4 - core index']
  #allocation1 [shape = 'u32[144,128]{1,0:T(1,128)}', space=vmem, size = 0x12000, scoped, tag = 'internal scratch']
  %s0 = inlined_call_operand.vmem [shape: f32[10,32], index: 0, kind: input, shape index: {}]
  %s1 = inlined_call_operand.vmem [shape: f32[1,32], index: 1, kind: input, shape index: {}]
  %s2 = inlined_call_operand.vmem [shape: f32[1,32], index: 2, kind: input, shape index: {}]
  %s3 = inlined_call_operand.vmem [shape: f32[10,32], index: 3, kind: output, shape index: {}]
  %s4 = sld [smem:[#allocation0]]
  $region22: #{vit_forward.12} parent=0
    _
  %s6 = ssub.s32 1, %s4
  %s7 = scalar_select 0, %s6, %s4
  // Predicated region
  $region2: #{vit_forward.12} parent=0 // pred_check
    _
  $region3: #{vit_forward.12} parent=0 // pred_check_branch
    %9 = sbr.rel (0) target = $region5
  $region4: #{vit_forward.12} parent=0 // pred_region
    _
  $region5: #{vit_forward.12} parent=0 // pred_fallthru
    _
  // Predicated region
  $region6: #{vit_forward.12} parent=0 // pred_check
    _
  $region7: #{vit_forward.12} parent=0 // pred_check_branch
    %11 = sbr.rel (0) target = $region9
  $region8: #{vit_forward.12} parent=0 // pred_region
    _
  $region9: #{vit_forward.12} parent=0 // pred_fallthru
    _
  // Predicated region
  $region10: #{vit_forward.12} parent=0 // pred_check
    _
  $region11: #{vit_forward.12} parent=0 // pred_check_branch
    %13 = sbr.rel (0) target = $region13
  $region12: #{vit_forward.12} parent=0 // pred_region
    _
  $region13: #{vit_forward.12} parent=0 // pred_fallthru
    _
  %v14 = vld [vmem:[%s0] sm:$0xff]
  %v15 = vld [vmem:[%s0 + $0x8] sm:$0x3]
  %v16 = vld [vmem:[%s1] sm:$0x1]
  %v17 = vld [vmem:[%s2] sm:$0x1]
  %vm18 = vcmask 261120
  %v19 = vsel %vm18, %v14, 0.0
  %20 = vadd.xlane.f32.xlu0 %v19
  %v21 = vpop.xlane.xlu0 %20
  %vm22 = vcmask 254976
  %v23 = vsel %vm22, %v15, 0.0
  %24 = vadd.xlane.f32.xlu0 %v23
  %v25 = vpop.xlane.xlu0 %24
  %v26 = vrcp.pop 32.0
  %v27 = vmul.f32 %v21, %v26
  %v28 = vmul.f32 %v25, %v26
  %v29 = vsub.f32 %v14, %v27
  %v30 = vsub.f32 %v15, %v28
  %v31 = vmul.f32 %v29, %v29
  %v32 = vmul.f32 %v30, %v30
  %v33 = vsel %vm18, %v31, 0.0
  %34 = vadd.xlane.f32.xlu0 %v33
  %v35 = vpop.xlane.xlu0 %34
  %v36 = vsel %vm22, %v32, 0.0
  %37 = vadd.xlane.f32.xlu0 %v36
  %v38 = vpop.xlane.xlu0 %37
  %v39 = vmul.f32 %v35, %v26
  %v40 = vmul.f32 %v38, %v26
  %v41 = vadd.f32 %v39, 1e-05
  %v42 = vadd.f32 %v40, 1e-05
  %v43 = vrsqrt.pop %v41
  %v44 = vrsqrt.pop %v42
  %v45 = vmul.f32 %v29, %v43
  %v46 = vmul.f32 %v30, %v44
  %v48 = vlaneseq
  %v49 = vshrl.u32 %v48, 7
  %v50 = vsub.s32 0, %v49
  %v51 = vrot.slane %v16, %v50
  %v53 = vmul.f32 %v45, %v51
  %v54 = vmul.f32 %v46, %v51
  %v56 = vlaneseq
  %v57 = vshrl.u32 %v56, 7
  %v58 = vsub.s32 0, %v57
  %v59 = vrot.slane %v17, %v58
  %v61 = vadd.f32 %v53, %v59
  %v62 = vadd.f32 %v54, %v59
  %63 = vst.msk [vmem:[%s3] sm:$0xff] %vm18, %v61
  %64 = vst.msk [vmem:[%s3 + $0x8] sm:$0x3] %vm22, %v62
  // Predicated region
  $region14: #{vit_forward.12} parent=0 // pred_check
    _
  $region15: #{vit_forward.12} parent=0 // pred_check_branch
    %66 = sbr.rel (0) target = $region17
  $region16: #{vit_forward.12} parent=0 // pred_region
    _
  $region17: #{vit_forward.12} parent=0 // pred_fallthru
    _
  // Predicated region
  $region18: #{vit_forward.12} parent=0 // pred_check
    _
  $region19: #{vit_forward.12} parent=0 // pred_check_branch
    %68 = sbr.rel (0) target = $region21
  $region20: #{vit_forward.12} parent=0 // pred_region
    _
  $region21: #{vit_forward.12} parent=0 // pred_fallthru
    _

// kernel: vit_forward.11
$region0: #{vit_forward.11}
  #allocation0 [shape = 'u32[]', space=smem, size = 0x4, offset = 0x4, fixed_abs, tag = 'smem constant byte address 0x4 - core index']
  #allocation1 [shape = 'u32[144,128]{1,0:T(1,128)}', space=vmem, size = 0x12000, scoped, tag = 'internal scratch']
  %s0 = inlined_call_operand.vmem [shape: f32[8,192], index: 0, kind: input, shape index: {}]
  %s1 = inlined_call_operand.vmem [shape: f32[192,32], index: 1, kind: input, shape index: {}]
  %s2 = inlined_call_operand.vmem [shape: f32[8,32], index: 2, kind: output, shape index: {}]
  %s3 = sld [smem:[#allocation0]]
  $region18: #{vit_forward.11} parent=0
    _
  %s5 = ssub.s32 1, %s3
  %s6 = scalar_select 0, %s5, %s3
  // Predicated region
  $region2: #{vit_forward.11} parent=0 // pred_check
    _
  $region3: #{vit_forward.11} parent=0 // pred_check_branch
    %8 = sbr.rel (0) target = $region5
  $region4: #{vit_forward.11} parent=0 // pred_region
    _
  $region5: #{vit_forward.11} parent=0 // pred_fallthru
    _
  // Predicated region
  $region6: #{vit_forward.11} parent=0 // pred_check
    _
  $region7: #{vit_forward.11} parent=0 // pred_check_branch
    %10 = sbr.rel (0) target = $region9
  $region8: #{vit_forward.11} parent=0 // pred_region
    _
  $region9: #{vit_forward.11} parent=0 // pred_fallthru
    _
  %v11 = vld [vmem:[%s0] sm:$0xff]
  %v12 = vld [vmem:[%s0 + $0x8] sm:$0xff]
  %v13 = vld [vmem:[%s1] sm:$0xff]
  %v14 = vld [vmem:[%s1 + $0x8] sm:$0xff]
  %v15 = vld [vmem:[%s1 + $0x10] sm:$0xff]
  %v16 = vld [vmem:[%s1 + $0x18] sm:$0xff]
  %v17 = vld [vmem:[%s1 + $0x20] sm:$0xff]
  %v18 = vld [vmem:[%s1 + $0x28] sm:$0xff]
  %v19 = vld [vmem:[%s1 + $0x30] sm:$0xff]
  %v20 = vld [vmem:[%s1 + $0x38] sm:$0xff]
  %v21 = vld [vmem:[%s1 + $0x40] sm:$0xff]
  %v22 = vld [vmem:[%s1 + $0x48] sm:$0xff]
  %v23 = vld [vmem:[%s1 + $0x50] sm:$0xff]
  %v24 = vld [vmem:[%s1 + $0x58] sm:$0xff]
  %v25 = vld [vmem:[%s1 + $0x60] sm:$0xff]
  %v26 = vld [vmem:[%s1 + $0x68] sm:$0xff]
  %v27 = vld [vmem:[%s1 + $0x70] sm:$0xff]
  %v28 = vld [vmem:[%s1 + $0x78] sm:$0xff]
  %v29 = vld [vmem:[%s1 + $0x80] sm:$0xff]
  %v30 = vld [vmem:[%s1 + $0x88] sm:$0xff]
  %v31 = vld [vmem:[%s1 + $0x90] sm:$0xff]
  %v32 = vld [vmem:[%s1 + $0x98] sm:$0xff]
  %v33 = vld [vmem:[%s1 + $0xa0] sm:$0xff]
  %v34 = vld [vmem:[%s1 + $0xa8] sm:$0xff]
  %v35 = vld [vmem:[%s1 + $0xb0] sm:$0xff]
  %v36 = vld [vmem:[%s1 + $0xb8] sm:$0xff]
  %vm37 = vcmask 523264
  %v39 = vsel %vm37, %v12, 0
  %41 = vmatprep.subr.mxu0 0.0
  %42 = vmatpush1.msra.mxu0 %v28
  %43 = vmatprep.subr.mxu0 0.0
  %44 = vmatpush1.msra.mxu0 %v27
  %45 = vmatprep.subr.mxu0 0.0
  %46 = vmatpush1.msra.mxu0 %v26
  %47 = vmatprep.subr.mxu0 0.0
  %48 = vmatpush1.msra.mxu0 %v25
  %49 = vmatprep.subr.mxu0 0.0
  %50 = vmatpush1.msra.mxu0 %v24
  %51 = vmatprep.subr.mxu0 0.0
  %52 = vmatpush1.msra.mxu0 %v23
  %53 = vmatprep.subr.mxu0 0.0
  %54 = vmatpush1.msra.mxu0 %v22
  %55 = vmatprep.subr.mxu0 0.0
  %56 = vmatpush1.msra.mxu0 %v21
  %57 = vmatprep.subr.mxu0 0.0
  %58 = vmatpush1.msra.mxu0 %v20
  %59 = vmatprep.subr.mxu0 0.0
  %60 = vmatpush1.msra.mxu0 %v19
  %61 = vmatprep.subr.mxu0 0.0
  %62 = vmatpush1.msra.mxu0 %v18
  %63 = vmatprep.subr.mxu0 0.0
  %64 = vmatpush1.msra.mxu0 %v17
  %65 = vmatprep.subr.mxu0 0.0
  %66 = vmatpush1.msra.mxu0 %v16
  %67 = vmatprep.subr.mxu0 0.0
  %68 = vmatpush1.msra.mxu0 %v15
  %69 = vmatprep.subr.mxu0 0.0
  %70 = vmatpush1.msra.mxu0 %v14
  %71 = vmatprep.subr.mxu0 0.0
  %72 = vmatpush1.msra.mxu0 %v13
  %73 = vmatprep.subr.mxu0 0.0
  %74 = vmatpush2.msra.mxu0 0.0
  %75 = vmatprep.subr.mxu0 0.0
  %76 = vmatpush2.msra.mxu0 0.0
  %77 = vmatprep.subr.mxu0 0.0
  %78 = vmatpush2.msra.mxu0 0.0
  %79 = vmatprep.subr.mxu0 0.0
  %80 = vmatpush2.msra.mxu0 0.0
  %81 = vmatprep.subr.mxu0 0.0
  %82 = vmatpush2.msra.mxu0 0.0
  %83 = vmatprep.subr.mxu0 0.0
  %84 = vmatpush2.msra.mxu0 0.0
  %85 = vmatprep.subr.mxu0 0.0
  %86 = vmatpush2.msra.mxu0 0.0
  %87 = vmatprep.subr.mxu0 0.0
  %88 = vmatpush2.msra.mxu0 0.0
  %89 = vmatprep.subr.mxu0 0.0
  %90 = vmatpush2.msra.mxu0 %v36
  %91 = vmatprep.subr.mxu0 0.0
  %92 = vmatpush2.msra.mxu0 %v35
  %93 = vmatprep.subr.mxu0 0.0
  %94 = vmatpush2.msra.mxu0 %v34
  %95 = vmatprep.subr.mxu0 0.0
  %96 = vmatpush2.msra.mxu0 %v33
  %97 = vmatprep.subr.mxu0 0.0
  %98 = vmatpush2.msra.mxu0 %v32
  %99 = vmatprep.subr.mxu0 0.0
  %100 = vmatpush2.msra.mxu0 %v31
  %101 = vmatprep.subr.mxu0 0.0
  %102 = vmatpush2.msra.mxu0 %v30
  %103 = vmatprep.subr.mxu0 0.0
  %104 = vmatpush2.msra.mxu0 %v29
  %105 = vmatprep.mubr.f32.mxu0 %v39
  %106 = vmatmul.mubr.f32.gmra.mxu0 %v11
  %v107 = vpop.f32.mrf.mxu0
  %v108 = vadd.f32 0.0, %v107
  %v109 = vpop.f32.mrf.mxu0
  %110 = vdwg.mxu0
  %vm111 = vcmask 261120
  %112 = vst.msk [vmem:[%s2] sm:$0xff] %vm111, %v108
  // Predicated region
  $region10: #{vit_forward.11} parent=0 // pred_check
    _
  $region11: #{vit_forward.11} parent=0 // pred_check_branch
    %114 = sbr.rel (0) target = $region13
  $region12: #{vit_forward.11} parent=0 // pred_region
    _
  $region13: #{vit_forward.11} parent=0 // pred_fallthru
    _
  // Predicated region
  $region14: #{vit_forward.11} parent=0 // pred_check
    _
  $region15: #{vit_forward.11} parent=0 // pred_check_branch
    %116 = sbr.rel (0) target = $region17
  $region16: #{vit_forward.11} parent=0 // pred_region
    _
  $region17: #{vit_forward.11} parent=0 // pred_fallthru
    _

// kernel: vit_forward.13
$region0: #{vit_forward.13}
  #allocation0 [shape = 'u32[]', space=smem, size = 0x4, offset = 0x4, fixed_abs, tag = 'smem constant byte address 0x4 - core index']
  #allocation1 [shape = 'u32[144,128]{1,0:T(1,128)}', space=vmem, size = 0x12000, scoped, tag = 'internal scratch']
  %s0 = inlined_call_operand.vmem [shape: f32[10,32], index: 0, kind: input, shape index: {}]
  %s1 = inlined_call_operand.vmem [shape: f32[1,32], index: 1, kind: input, shape index: {}]
  %s2 = inlined_call_operand.vmem [shape: f32[1,32], index: 2, kind: input, shape index: {}]
  %s3 = inlined_call_operand.vmem [shape: f32[32,96], index: 3, kind: input, shape index: {}]
  %s4 = inlined_call_operand.vmem [shape: f32[1,96], index: 4, kind: input, shape index: {}]
  %s5 = inlined_call_operand.vmem [shape: f32[10,96], index: 5, kind: output, shape index: {}]
  %s6 = sld [smem:[#allocation0]]
  $region30: #{vit_forward.13} parent=0
    _
  %s8 = ssub.s32 1, %s6
  %s9 = scalar_select 0, %s8, %s6
  // Predicated region
  $region2: #{vit_forward.13} parent=0 // pred_check
    _
  $region3: #{vit_forward.13} parent=0 // pred_check_branch
    %11 = sbr.rel (0) target = $region5
  $region4: #{vit_forward.13} parent=0 // pred_region
    _
  $region5: #{vit_forward.13} parent=0 // pred_fallthru
    _
  // Predicated region
  $region6: #{vit_forward.13} parent=0 // pred_check
    _
  $region7: #{vit_forward.13} parent=0 // pred_check_branch
    %13 = sbr.rel (0) target = $region9
  $region8: #{vit_forward.13} parent=0 // pred_region
    _
  $region9: #{vit_forward.13} parent=0 // pred_fallthru
    _
  // Predicated region
  $region10: #{vit_forward.13} parent=0 // pred_check
    _
  $region11: #{vit_forward.13} parent=0 // pred_check_branch
    %15 = sbr.rel (0) target = $region13
  $region12: #{vit_forward.13} parent=0 // pred_region
    _
  $region13: #{vit_forward.13} parent=0 // pred_fallthru
    _
  // Predicated region
  $region14: #{vit_forward.13} parent=0 // pred_check
    _
  $region15: #{vit_forward.13} parent=0 // pred_check_branch
    %17 = sbr.rel (0) target = $region17
  $region16: #{vit_forward.13} parent=0 // pred_region
    _
  $region17: #{vit_forward.13} parent=0 // pred_fallthru
    _
  // Predicated region
  $region18: #{vit_forward.13} parent=0 // pred_check
    _
  $region19: #{vit_forward.13} parent=0 // pred_check_branch
    %19 = sbr.rel (0) target = $region21
  $region20: #{vit_forward.13} parent=0 // pred_region
    _
  $region21: #{vit_forward.13} parent=0 // pred_fallthru
    _
  %v20 = vld [vmem:[%s0] sm:$0xff]
  %v21 = vld [vmem:[%s0 + $0x8] sm:$0x3]
  %v22 = vld [vmem:[%s1] sm:$0x1]
  %v23 = vld [vmem:[%s2] sm:$0x1]
  %vm24 = vcmask 261120
  %v25 = vsel %vm24, %v20, 0.0
  %26 = vadd.xlane.f32.xlu0 %v25
  %v27 = vpop.xlane.xlu0 %26
  %vm28 = vcmask 254976
  %v29 = vsel %vm28, %v21, 0.0
  %30 = vadd.xlane.f32.xlu0 %v29
  %v31 = vpop.xlane.xlu0 %30
  %v32 = vrcp.pop 32.0
  %v33 = vmul.f32 %v27, %v32
  %v34 = vmul.f32 %v31, %v32
  %v35 = vsub.f32 %v20, %v33
  %v36 = vsub.f32 %v21, %v34
  %v37 = vmul.f32 %v35, %v35
  %v38 = vmul.f32 %v36, %v36
  %v39 = vsel %vm24, %v37, 0.0
  %40 = vadd.xlane.f32.xlu0 %v39
  %v41 = vpop.xlane.xlu0 %40
  %v42 = vsel %vm28, %v38, 0.0
  %43 = vadd.xlane.f32.xlu0 %v42
  %v44 = vpop.xlane.xlu0 %43
  %v45 = vmul.f32 %v41, %v32
  %v46 = vmul.f32 %v44, %v32
  %v47 = vadd.f32 %v45, 1e-05
  %v48 = vadd.f32 %v46, 1e-05
  %v49 = vrsqrt.pop %v47
  %v50 = vrsqrt.pop %v48
  %v51 = vmul.f32 %v35, %v49
  %v52 = vmul.f32 %v36, %v50
  %v54 = vlaneseq
  %v55 = vshrl.u32 %v54, 7
  %v56 = vsub.s32 0, %v55
  %v57 = vrot.slane %v22, %v56
  %v59 = vmul.f32 %v51, %v57
  %v60 = vmul.f32 %v52, %v57
  %v62 = vlaneseq
  %v63 = vshrl.u32 %v62, 7
  %v64 = vsub.s32 0, %v63
  %v65 = vrot.slane %v23, %v64
  %v67 = vadd.f32 %v59, %v65
  %v68 = vadd.f32 %v60, %v65
  %v69 = vld [vmem:[%s3] sm:$0xff]
  %v70 = vld [vmem:[%s3 + $0x8] sm:$0xff]
  %v71 = vld [vmem:[%s3 + $0x10] sm:$0xff]
  %v72 = vld [vmem:[%s3 + $0x18] sm:$0xff]
  %v73 = vld [vmem:[%s4] sm:$0x1]
  %v75 = vlaneseq
  %v76 = vshrl.u32 %v75, 7
  %v77 = vsub.s32 0, %v76
  %v78 = vrot.slane %v73, %v77
  %v81 = vsel %vm24, %v67, 0
  %v84 = vsel %vm24, %v68, 0
  %86 = vmatprep.subr.mxu0 0.0
  %87 = vmatpush1.msra.mxu0 0.0
  %88 = vmatprep.subr.mxu0 0.0
  %89 = vmatpush1.msra.mxu0 0.0
  %90 = vmatprep.subr.mxu0 0.0
  %91 = vmatpush1.msra.mxu0 0.0
  %92 = vmatprep.subr.mxu0 0.0
  %93 = vmatpush1.msra.mxu0 0.0
  %94 = vmatprep.subr.mxu0 0.0
  %95 = vmatpush1.msra.mxu0 0.0
  %96 = vmatprep.subr.mxu0 0.0
  %97 = vmatpush1.msra.mxu0 0.0
  %98 = vmatprep.subr.mxu0 0.0
  %99 = vmatpush1.msra.mxu0 0.0
  %100 = vmatprep.subr.mxu0 0.0
  %101 = vmatpush1.msra.mxu0 0.0
  %102 = vmatprep.subr.mxu0 0.0
  %103 = vmatpush1.msra.mxu0 0.0
  %104 = vmatprep.subr.mxu0 0.0
  %105 = vmatpush1.msra.mxu0 0.0
  %106 = vmatprep.subr.mxu0 0.0
  %107 = vmatpush1.msra.mxu0 0.0
  %108 = vmatprep.subr.mxu0 0.0
  %109 = vmatpush1.msra.mxu0 0.0
  %110 = vmatprep.subr.mxu0 0.0
  %111 = vmatpush1.msra.mxu0 %v72
  %112 = vmatprep.subr.mxu0 0.0
  %113 = vmatpush1.msra.mxu0 %v71
  %114 = vmatprep.subr.mxu0 0.0
  %115 = vmatpush1.msra.mxu0 %v70
  %116 = vmatprep.subr.mxu0 0.0
  %117 = vmatpush1.msra.mxu0 %v69
  %118 = vmatprep.subr.mxu0 0.0
  %119 = vmatpush2.msra.mxu0 0.0
  %120 = vmatprep.subr.mxu0 0.0
  %121 = vmatpush2.msra.mxu0 0.0
  %122 = vmatprep.subr.mxu0 0.0
  %123 = vmatpush2.msra.mxu0 0.0
  %124 = vmatprep.subr.mxu0 0.0
  %125 = vmatpush2.msra.mxu0 0.0
  %126 = vmatprep.subr.mxu0 0.0
  %127 = vmatpush2.msra.mxu0 0.0
  %128 = vmatprep.subr.mxu0 0.0
  %129 = vmatpush2.msra.mxu0 0.0
  %130 = vmatprep.subr.mxu0 0.0
  %131 = vmatpush2.msra.mxu0 0.0
  %132 = vmatprep.subr.mxu0 0.0
  %133 = vmatpush2.msra.mxu0 0.0
  %134 = vmatprep.subr.mxu0 0.0
  %135 = vmatpush2.msra.mxu0 0.0
  %136 = vmatprep.subr.mxu0 0.0
  %137 = vmatpush2.msra.mxu0 0.0
  %138 = vmatprep.subr.mxu0 0.0
  %139 = vmatpush2.msra.mxu0 0.0
  %140 = vmatprep.subr.mxu0 0.0
  %141 = vmatpush2.msra.mxu0 0.0
  %142 = vmatprep.subr.mxu0 0.0
  %143 = vmatpush2.msra.mxu0 0.0
  %144 = vmatprep.subr.mxu0 0.0
  %145 = vmatpush2.msra.mxu0 0.0
  %146 = vmatprep.subr.mxu0 0.0
  %147 = vmatpush2.msra.mxu0 0.0
  %148 = vmatprep.subr.mxu0 0.0
  %149 = vmatpush2.msra.mxu0 0.0
  %150 = vmatprep.mubr.f32.mxu0 0.0
  %151 = vmatmul.mubr.f32.gmra.mxu0 %v81
  %v152 = vpop.f32.mrf.mxu0
  %v153 = vadd.f32 %v78, %v152
  %v154 = vpop.f32.mrf.mxu0
  %155 = vmatprep.mubr.f32.mxu0 0.0
  %156 = vmatmul.mubr.f32.gmra.mxu0 %v84
  %v157 = vpop.f32.mrf.mxu0
  %v158 = vadd.f32 %v78, %v157
  %v159 = vpop.f32.mrf.mxu0
  %160 = vdwg.mxu0
  %vm161 = vcmask 785408
  %162 = vst.msk [vmem:[%s5] sm:$0xff] %vm161, %v153
  %vm163 = vcmask 779264
  %164 = vst.msk [vmem:[%s5 + $0x8] sm:$0x3] %vm163, %v158
  // Predicated region
  $region22: #{vit_forward.13} parent=0 // pred_check
    _
  $region23: #{vit_forward.13} parent=0 // pred_check_branch
    %166 = sbr.rel (0) target = $region25
  $region24: #{vit_forward.13} parent=0 // pred_region
    _
  $region25: #{vit_forward.13} parent=0 // pred_fallthru
    _
  // Predicated region
  $region26: #{vit_forward.13} parent=0 // pred_check
    _
  $region27: #{vit_forward.13} parent=0 // pred_check_branch
    %168 = sbr.rel (0) target = $region29
  $region28: #{vit_forward.13} parent=0 // pred_region
    _
  $region29: #{vit_forward.13} parent=0 // pred_fallthru
    _

// kernel: vit_forward.14
$region0: #{vit_forward.14}
  #allocation0 [shape = 'u32[]', space=smem, size = 0x4, offset = 0x4, fixed_abs, tag = 'smem constant byte address 0x4 - core index']
  #allocation1 [shape = 'u32[144,128]{1,0:T(1,128)}', space=vmem, size = 0x12000, scoped, tag = 'internal scratch']
  %s0 = inlined_call_operand.vmem [shape: f32[2,5,96], index: 0, kind: input, shape index: {}]
  %s1 = inlined_call_operand.vmem [shape: f32[2,5,32], index: 1, kind: input, shape index: {}]
  %s2 = inlined_call_operand.vmem [shape: f32[32,32], index: 2, kind: input, shape index: {}]
  %s3 = inlined_call_operand.vmem [shape: f32[1,32], index: 3, kind: input, shape index: {}]
  %s4 = inlined_call_operand.vmem [shape: f32[2,5,32], index: 4, kind: output, shape index: {}]
  %s5 = sld [smem:[#allocation0]]
  $region49: #{vit_forward.14} parent=0
    _
  %s7 = ssub.s32 1, %s5
  %s8 = scalar_select 0, %s7, %s5
  loop: start=0, step=1, limit=4
  $region2: #{vit_forward.14} parent=0 // loop_pre_header
    _
  $region3: #{vit_forward.14} parent=0 // loop_header
    %s10 = sphi 0, %s14
    %p11 = scmp.ge.s32.totalorder %s10, 4
    %s20 = sphi 0, %s22
    %s23 = sphi 0, %s20
    %s24 = sphi 0, %s23
    %s40 = sphi 0, %s24
    %s46 = sphi 0, %s48
    %s49 = sphi 0, %s46
    %s50 = sphi 0, %s49
    %s66 = sphi 0, %s50
    %s70 = sphi 0, %s70
    %s72 = sphi 0, %s70
    %s73 = sphi 0, %s72
    %s87 = sphi 0, %s73
    %s91 = sphi 0, %s91
    %s93 = sphi 0, %s91
    %s94 = sphi 0, %s93
    %s108 = sphi 0, %s94
    %s114 = sphi 0, %s116
    %s117 = sphi 0, %s114
    %s118 = sphi 0, %s117
    %s134 = sphi 0, %s118
  $region4: #{vit_forward.14} parent=0 // loop_header_branch
    %13 = sbr.rel (%p11) target = $region8
  $region5: #{vit_forward.14} parent=0 // loop_body
    %s15 = ssub.s32 %s10, 1
    %s16 = ssub.s32 %s10, 2
    %s17 = sadd.s32 %s10, 1
    %s18 = ssub.s32 %s10, %s17
    %p19 = scmp.eq.s32.totalorder %s18, 0
    %s21 = sadd.s32 %s20, 1
    %s22 = scalar_select %p19, %s20, %s21
    %p25 = pneg %p19
    %p26 = scmp.eq.s32.totalorder %s10, 1
    %p27 = por %p25, %p26
    %p28 = scmp.ne.s32.totalorder %s20, %s23
    %p29 = scmp.eq.s32.totalorder %s10, 0
    %p30 = por %p28, %p29
    %p31 = scmp.ne.s32.totalorder %s20, %s23
    %p32 = scmp.eq.s32.totalorder %s15, 1
    %p33 = por %p31, %p32
    %p34 = scmp.ne.s32.totalorder %s23, %s24
    %p35 = scmp.eq.s32.totalorder %s15, 0
    %p36 = por %p34, %p35
    %p37 = scmp.ne.s32.totalorder %s23, %s24
    %p38 = scmp.eq.s32.totalorder %s16, 1
    %p39 = por %p37, %p38
    %p41 = scmp.ne.s32.totalorder %s24, %s40
    %p42 = scmp.eq.s32.totalorder %s16, 0
    %p43 = por %p41, %p42
    %s44 = ssub.s32 %s10, %s17
    %p45 = scmp.eq.s32.totalorder %s44, 0
    %s47 = sadd.s32 %s46, 1
    %s48 = scalar_select %p45, %s46, %s47
    %p51 = pneg %p45
    %p52 = scmp.eq.s32.totalorder %s10, 1
    %p53 = por %p51, %p52
    %p54 = scmp.ne.s32.totalorder %s46, %s49
    %p55 = scmp.eq.s32.totalorder %s10, 0
    %p56 = por %p54, %p55
    %p57 = scmp.ne.s32.totalorder %s46, %s49
    %p58 = scmp.eq.s32.totalorder %s15, 1
    %p59 = por %p57, %p58
    %p60 = scmp.ne.s32.totalorder %s49, %s50
    %p61 = scmp.eq.s32.totalorder %s15, 0
    %p62 = por %p60, %p61
    %p63 = scmp.ne.s32.totalorder %s49, %s50
    %p64 = scmp.eq.s32.totalorder %s16, 1
    %p65 = por %p63, %p64
    %p67 = scmp.ne.s32.totalorder %s50, %s66
    %p68 = scmp.eq.s32.totalorder %s16, 0
    %p69 = por %p67, %p68
    %s71 = sadd.s32 %s70, 1
    %p74 = scmp.eq.s32.totalorder %s10, 1
    %p75 = scmp.ne.s32.totalorder %s70, %s72
    %p76 = scmp.eq.s32.totalorder %s10, 0
    %p77 = por %p75, %p76
    %p78 = scmp.ne.s32.totalorder %s70, %s72
    %p79 = scmp.eq.s32.totalorder %s15, 1
    %p80 = por %p78, %p79
    %p81 = scmp.ne.s32.totalorder %s72, %s73
    %p82 = scmp.eq.s32.totalorder %s15, 0
    %p83 = por %p81, %p82
    %p84 = scmp.ne.s32.totalorder %s72, %s73
    %p85 = scmp.eq.s32.totalorder %s16, 1
    %p86 = por %p84, %p85
    %p88 = scmp.ne.s32.totalorder %s73, %s87
    %p89 = scmp.eq.s32.totalorder %s16, 0
    %p90 = por %p88, %p89
    %s92 = sadd.s32 %s91, 1
    %p95 = scmp.eq.s32.totalorder %s10, 1
    %p96 = scmp.ne.s32.totalorder %s91, %s93
    %p97 = scmp.eq.s32.totalorder %s10, 0
    %p98 = por %p96, %p97
    %p99 = scmp.ne.s32.totalorder %s91, %s93
    %p100 = scmp.eq.s32.totalorder %s15, 1
    %p101 = por %p99, %p100
    %p102 = scmp.ne.s32.totalorder %s93, %s94
    %p103 = scmp.eq.s32.totalorder %s15, 0
    %p104 = por %p102, %p103
    %p105 = scmp.ne.s32.totalorder %s93, %s94
    %p106 = scmp.eq.s32.totalorder %s16, 1
    %p107 = por %p105, %p106
    %p109 = scmp.ne.s32.totalorder %s94, %s108
    %p110 = scmp.eq.s32.totalorder %s16, 0
    %p111 = por %p109, %p110
    %s112 = ssub.s32 %s10, %s17
    %p113 = scmp.eq.s32.totalorder %s112, 0
    %s115 = sadd.s32 %s114, 1
    %s116 = scalar_select %p113, %s114, %s115
    %p119 = pneg %p113
    %p120 = scmp.eq.s32.totalorder %s10, 1
    %p121 = por %p119, %p120
    %p122 = scmp.ne.s32.totalorder %s114, %s117
    %p123 = scmp.eq.s32.totalorder %s10, 0
    %p124 = por %p122, %p123
    %p125 = scmp.ne.s32.totalorder %s114, %s117
    %p126 = scmp.eq.s32.totalorder %s15, 1
    %p127 = por %p125, %p126
    %p128 = scmp.ne.s32.totalorder %s117, %s118
    %p129 = scmp.eq.s32.totalorder %s15, 0
    %p130 = por %p128, %p129
    %p131 = scmp.ne.s32.totalorder %s117, %s118
    %p132 = scmp.eq.s32.totalorder %s16, 1
    %p133 = por %p131, %p132
    %p135 = scmp.ne.s32.totalorder %s118, %s134
    %p136 = scmp.eq.s32.totalorder %s16, 0
    %p137 = por %p135, %p136
    %p138 = scmp.le.s32.totalorder 1, %s10
    %p139 = scmp.lt.s32.totalorder %s10, 3
    %p140 = pnand %p138, %p139
    %p141 = pneg %p140
    // Predicated region
    $region9: #{vit_forward.14} parent=5 // pred_check
      _
    $region10: #{vit_forward.14} parent=5 // pred_check_branch
      %143 = sbr.rel (%p140) target = $region12
    $region11: #{vit_forward.14} parent=5 // pred_region
      %s144 = ssub.s32 %s10, 1
      // Predicated region
      $region13: #{vit_forward.14} parent=11 // pred_check
        %p145 = pneg %p83
      $region14: #{vit_forward.14} parent=11 // pred_check_branch
        %147 = sbr.rel (%p145) target = $region16
      $region15: #{vit_forward.14} parent=11 // pred_region
        _
      $region16: #{vit_forward.14} parent=11 // pred_fallthru
        _
      // Predicated region
      $region17: #{vit_forward.14} parent=11 // pred_check
        %p148 = pneg %p104
      $region18: #{vit_forward.14} parent=11 // pred_check_branch
        %150 = sbr.rel (%p148) target = $region20
      $region19: #{vit_forward.14} parent=11 // pred_region
        _
      $region20: #{vit_forward.14} parent=11 // pred_fallthru
        _
    $region12: #{vit_forward.14} parent=5 // pred_fallthru
      _
    %p151 = scmp.lt.s32.totalorder %s10, 2
    // Predicated region
    $region21: #{vit_forward.14} parent=5 // pred_check
      %p152 = pneg %p151
    $region22: #{vit_forward.14} parent=5 // pred_check_branch
      %154 = sbr.rel (%p152) target = $region24
    $region23: #{vit_forward.14} parent=5 // pred_region
      // Predicated region
      $region25: #{vit_forward.14} parent=23 // pred_check
        %p155 = pneg %p30
      $region26: #{vit_forward.14} parent=23 // pred_check_branch
        %157 = sbr.rel (%p155) target = $region28
      $region27: #{vit_forward.14} parent=23 // pred_region
        %p158 = scmp.lt.s32.totalorder %s10, 1
        %s159 = scalar_select %p158, %s10, 1
        %s160 = smul.addr %s159, 8
        %s161 = scalar_lea.vmem %s0, %s160
      $region28: #{vit_forward.14} parent=23 // pred_fallthru
        _
      // Predicated region
      $region29: #{vit_forward.14} parent=23 // pred_check
        %p162 = pneg %p56
      $region30: #{vit_forward.14} parent=23 // pred_check_branch
        %164 = sbr.rel (%p162) target = $region32
      $region31: #{vit_forward.14} parent=23 // pred_region
        %p165 = scmp.lt.s32.totalorder %s10, 1
        %s166 = scalar_select %p165, %s10, 1
        %s167 = smul.addr %s166, 8
        %s168 = scalar_lea.vmem %s1, %s167
      $region32: #{vit_forward.14} parent=23 // pred_fallthru
        _
    $region24: #{vit_forward.14} parent=5 // pred_fallthru
      _
    %p169 = scmp.le.s32.totalorder 1, %s10
    %p170 = scmp.lt.s32.totalorder %s10, 3
    %p171 = pnand %p169, %p170
    %p172 = pneg %p171
    // Predicated region
    $region33: #{vit_forward.14} parent=5 // pred_check
      _
    $region34: #{vit_forward.14} parent=5 // pred_check_branch
      %174 = sbr.rel (%p171) target = $region36
    $region35: #{vit_forward.14} parent=5 // pred_region
      %s175 = ssub.s32 %s10, 1
      %p176 = scmp.lt.s32.totalorder %s15, 1
      %s177 = scalar_select %p176, %s15, 1
      %s178 = smul.addr %s177, 8
      %s179 = scalar_lea.vmem %s0, %s178
      %p180 = pneg %p36
      %p181 = pneg %p33
      %p182 = scmp.lt.s32.totalorder %s15, 1
      %s183 = scalar_select %p182, %s15, 1
      %s184 = smul.addr %s183, 8
      %s185 = scalar_lea.vmem %s1, %s184
      %p186 = pneg %p62
      %p187 = pneg %p59
      %p188 = pneg %p83
      %p189 = pneg %p80
      %p190 = pneg %p104
      %p191 = pneg %p101
      %p192 = pneg %p130
      %p193 = pneg %p127
      %p194 = scmp.lt.s32.totalorder %s15, 1
      %s195 = scalar_select %p194, %s15, 1
      %s196 = smul.addr %s195, 8
      %s197 = scalar_lea.vmem %s4, %s196
      %p198 = scmp.lt.s32.totalorder %s15, 1
      %s199 = scalar_select %p198, %s15, 1
      %s200 = smul.addr %s199, 8
      %s201 = scalar_lea.vmem %s0, %s200
      %p202 = scmp.lt.s32.totalorder %s15, 1
      %s203 = scalar_select %p202, %s15, 1
      %s204 = smul.addr %s203, 8
      %s205 = scalar_lea.vmem %s1, %s204
      %p206 = scmp.lt.s32.totalorder %s15, 1
      %s207 = scalar_select %p206, %s15, 1
      %s208 = smul.addr %s207, 8
      %s209 = scalar_lea.vmem %s4, %s208
      %v210 = vld [vmem:[%s201] sm:$0x1f]
      %v211 = vld [vmem:[%s2] sm:$0xff]
      %v212 = vld [vmem:[%s2 + $0x8] sm:$0xff]
      %v213 = vld [vmem:[%s2 + $0x10] sm:$0xff]
      %v214 = vld [vmem:[%s2 + $0x18] sm:$0xff]
      %v215 = vld [vmem:[%s205] sm:$0x1f]
      %v216 = vld [vmem:[%s3] sm:$0x1]
      %v218 = vlaneseq
      %v219 = vshrl.u32 %v218, 7
      %v220 = vsub.s32 0, %v219
      %v221 = vrot.slane %v216, %v220
      %v223 = vadd.f32 %v215, %v221
      %v224 = vmul.f32 %v210, 0.35355338
      %226 = vrot.lane.b32.xlu0 %v210, 96
      %v227 = vpop.permute.xlu0 %226
      %vm228 = vcmask 64512
      %v230 = vsel %vm228, %v224, 0
      %v232 = vsel %vm228, %v227, 0
      %234 = vmatprep.subr.mxu0 0.0
      %235 = vmatpush1.xpose.msra.mxu0 0.0
      %236 = vmatprep.subr.mxu0 0.0
      %237 = vmatpush1.xpose.msra.mxu0 0.0
      %238 = vmatprep.subr.mxu0 0.0
      %239 = vmatpush1.xpose.msra.mxu0 0.0
      %240 = vmatprep.subr.mxu0 0.0
      %241 = vmatpush1.xpose.msra.mxu0 0.0
      %242 = vmatprep.subr.mxu0 0.0
      %243 = vmatpush1.xpose.msra.mxu0 0.0
      %244 = vmatprep.subr.mxu0 0.0
      %245 = vmatpush1.xpose.msra.mxu0 0.0
      %246 = vmatprep.subr.mxu0 0.0
      %247 = vmatpush1.xpose.msra.mxu0 0.0
      %248 = vmatprep.subr.mxu0 0.0
      %249 = vmatpush1.xpose.msra.mxu0 0.0
      %250 = vmatprep.subr.mxu0 0.0
      %251 = vmatpush1.xpose.msra.mxu0 0.0
      %252 = vmatprep.subr.mxu0 0.0
      %253 = vmatpush1.xpose.msra.mxu0 0.0
      %254 = vmatprep.subr.mxu0 0.0
      %255 = vmatpush1.xpose.msra.mxu0 0.0
      %256 = vmatprep.subr.mxu0 0.0
      %257 = vmatpush1.xpose.msra.mxu0 0.0
      %258 = vmatprep.subr.mxu0 0.0
      %259 = vmatpush1.xpose.msra.mxu0 0.0
      %260 = vmatprep.subr.mxu0 0.0
      %261 = vmatpush1.xpose.msra.mxu0 0.0
      %262 = vmatprep.subr.mxu0 0.0
      %263 = vmatpush1.xpose.msra.mxu0 0.0
      %264 = vmatprep.subr.mxu0 0.0
      %265 = vmatpush1.xpose.msra.mxu0 %v232
      %266 = vmatprep.subr.mxu0 0.0
      %267 = vmatpush2.xpose.msra.mxu0 0.0
      %268 = vmatprep.subr.mxu0 0.0
      %269 = vmatpush2.xpose.msra.mxu0 0.0
      %270 = vmatprep.subr.mxu0 0.0
      %271 = vmatpush2.xpose.msra.mxu0 0.0
      %272 = vmatprep.subr.mxu0 0.0
      %273 = vmatpush2.xpose.msra.mxu0 0.0
      %274 = vmatprep.subr.mxu0 0.0
      %275 = vmatpush2.xpose.msra.mxu0 0.0
      %276 = vmatprep.subr.mxu0 0.0
      %277 = vmatpush2.xpose.msra.mxu0 0.0
      %278 = vmatprep.subr.mxu0 0.0
      %279 = vmatpush2.xpose.msra.mxu0 0.0
      %280 = vmatprep.subr.mxu0 0.0
      %281 = vmatpush2.xpose.msra.mxu0 0.0
      %282 = vmatprep.subr.mxu0 0.0
      %283 = vmatpush2.xpose.msra.mxu0 0.0
      %284 = vmatprep.subr.mxu0 0.0
      %285 = vmatpush2.xpose.msra.mxu0 0.0
      %286 = vmatprep.subr.mxu0 0.0
      %287 = vmatpush2.xpose.msra.mxu0 0.0
      %288 = vmatprep.subr.mxu0 0.0
      %289 = vmatpush2.xpose.msra.mxu0 0.0
      %290 = vmatprep.subr.mxu0 0.0
      %291 = vmatpush2.xpose.msra.mxu0 0.0
      %292 = vmatprep.subr.mxu0 0.0
      %293 = vmatpush2.xpose.msra.mxu0 0.0
      %294 = vmatprep.subr.mxu0 0.0
      %295 = vmatpush2.xpose.msra.mxu0 0.0
      %296 = vmatprep.subr.mxu0 0.0
      %297 = vmatpush2.xpose.msra.mxu0 0.0
      %298 = vmatprep.mubr.f32.mxu0 0.0
      %299 = vmatmul.mubr.f32.gmra.mxu0 %v230
      %v300 = vpop.f32.mrf.mxu0
      %v301 = vadd.f32 0.0, %v300
      %v302 = vpop.f32.mrf.mxu0
      %303 = vdwg.mxu0
      %vm304 = vcmask 36864
      %v305 = vsel %vm304, %v301, -inf
      %306 = vmax.xlane.f32.xlu0 %v305
      %v307 = vpop.xlane.xlu0 %306
      %v308 = vsub.f32 %v301, %v307
      %v309 = vmul.f32 %v308, 1.442695
      %v310 = vpow.pop %v309
      %v311 = vsel %vm304, %v310, 0.0
      %312 = vadd.xlane.f32.xlu0 %v311
      %v313 = vpop.xlane.xlu0 %312
      %v314 = vrcp.pop %v313
      %v315 = vmul.f32 %v310, %v314
      %316 = vrot.lane.b32.xlu0 %v210, 64
      %v317 = vpop.permute.xlu0 %316
      %vm318 = vcmask 39936
      %v320 = vsel %vm318, %v315, 0
      %vm322 = vcmask 1044480
      %v323 = vsel %vm322, %v317, 0
      %325 = vmatprep.subr.mxu0 0.0
      %326 = vmatpush1.msra.mxu0 0.0
      %327 = vmatprep.subr.mxu0 0.0
      %328 = vmatpush1.msra.mxu0 0.0
      %329 = vmatprep.subr.mxu0 0.0
      %330 = vmatpush1.msra.mxu0 0.0
      %331 = vmatprep.subr.mxu0 0.0
      %332 = vmatpush1.msra.mxu0 0.0
      %333 = vmatprep.subr.mxu0 0.0
      %334 = vmatpush1.msra.mxu0 0.0
      %335 = vmatprep.subr.mxu0 0.0
      %336 = vmatpush1.msra.mxu0 0.0
      %337 = vmatprep.subr.mxu0 0.0
      %338 = vmatpush1.msra.mxu0 0.0
      %339 = vmatprep.subr.mxu0 0.0
      %340 = vmatpush1.msra.mxu0 0.0
      %341 = vmatprep.subr.mxu0 0.0
      %342 = vmatpush1.msra.mxu0 0.0
      %343 = vmatprep.subr.mxu0 0.0
      %344 = vmatpush1.msra.mxu0 0.0
      %345 = vmatprep.subr.mxu0 0.0
      %346 = vmatpush1.msra.mxu0 0.0
      %347 = vmatprep.subr.mxu0 0.0
      %348 = vmatpush1.msra.mxu0 0.0
      %349 = vmatprep.subr.mxu0 0.0
      %350 = vmatpush1.msra.mxu0 0.0
      %351 = vmatprep.subr.mxu0 0.0
      %352 = vmatpush1.msra.mxu0 0.0
      %353 = vmatprep.subr.mxu0 0.0
      %354 = vmatpush1.msra.mxu0 0.0
      %355 = vmatprep.subr.mxu0 0.0
      %356 = vmatpush1.msra.mxu0 %v323
      %357 = vmatprep.subr.mxu0 0.0
      %358 = vmatpush2.msra.mxu0 0.0
      %359 = vmatprep.subr.mxu0 0.0
      %360 = vmatpush2.msra.mxu0 0.0
      %361 = vmatprep.subr.mxu0 0.0
      %362 = vmatpush2.msra.mxu0 0.0
      %363 = vmatprep.subr.mxu0 0.0
      %364 = vmatpush2.msra.mxu0 0.0
      %365 = vmatprep.subr.mxu0 0.0
      %366 = vmatpush2.msra.mxu0 0.0
      %367 = vmatprep.subr.mxu0 0.0
      %368 = vmatpush2.msra.mxu0 0.0
      %369 = vmatprep.subr.mxu0 0.0
      %370 = vmatpush2.msra.mxu0 0.0
      %371 = vmatprep.subr.mxu0 0.0
      %372 = vmatpush2.msra.mxu0 0.0
      %373 = vmatprep.subr.mxu0 0.0
      %374 = vmatpush2.msra.mxu0 0.0
      %375 = vmatprep.subr.mxu0 0.0
      %376 = vmatpush2.msra.mxu0 0.0
      %377 = vmatprep.subr.mxu0 0.0
      %378 = vmatpush2.msra.mxu0 0.0
      %379 = vmatprep.subr.mxu0 0.0
      %380 = vmatpush2.msra.mxu0 0.0
      %381 = vmatprep.subr.mxu0 0.0
      %382 = vmatpush2.msra.mxu0 0.0
      %383 = vmatprep.subr.mxu0 0.0
      %384 = vmatpush2.msra.mxu0 0.0
      %385 = vmatprep.subr.mxu0 0.0
      %386 = vmatpush2.msra.mxu0 0.0
      %387 = vmatprep.subr.mxu0 0.0
      %388 = vmatpush2.msra.mxu0 0.0
      %389 = vmatprep.mubr.f32.mxu0 0.0
      %390 = vmatmul.mubr.f32.gmra.mxu0 %v320
      %v391 = vpop.f32.mrf.mxu0
      %v392 = vadd.f32 0.0, %v391
      %v393 = vpop.f32.mrf.mxu0
      %394 = vdwg.mxu0
      %v396 = vsel %vm228, %v392, 0
      %398 = vmatprep.subr.mxu0 0.0
      %399 = vmatpush1.msra.mxu0 0.0
      %400 = vmatprep.subr.mxu0 0.0
      %401 = vmatpush1.msra.mxu0 0.0
      %402 = vmatprep.subr.mxu0 0.0
      %403 = vmatpush1.msra.mxu0 0.0
      %404 = vmatprep.subr.mxu0 0.0
      %405 = vmatpush1.msra.mxu0 0.0
      %406 = vmatprep.subr.mxu0 0.0
      %407 = vmatpush1.msra.mxu0 0.0
      %408 = vmatprep.subr.mxu0 0.0
      %409 = vmatpush1.msra.mxu0 0.0
      %410 = vmatprep.subr.mxu0 0.0
      %411 = vmatpush1.msra.mxu0 0.0
      %412 = vmatprep.subr.mxu0 0.0
      %413 = vmatpush1.msra.mxu0 0.0
      %414 = vmatprep.subr.mxu0 0.0
      %415 = vmatpush1.msra.mxu0 0.0
      %416 = vmatprep.subr.mxu0 0.0
      %417 = vmatpush1.msra.mxu0 0.0
      %418 = vmatprep.subr.mxu0 0.0
      %419 = vmatpush1.msra.mxu0 0.0
      %420 = vmatprep.subr.mxu0 0.0
      %421 = vmatpush1.msra.mxu0 0.0
      %422 = vmatprep.subr.mxu0 0.0
      %423 = vmatpush1.msra.mxu0 0.0
      %424 = vmatprep.subr.mxu0 0.0
      %425 = vmatpush1.msra.mxu0 0.0
      %426 = vmatprep.subr.mxu0 0.0
      %427 = vmatpush1.msra.mxu0 0.0
      %428 = vmatprep.subr.mxu0 0.0
      %429 = vmatpush1.msra.mxu0 %v211
      %430 = vmatprep.subr.mxu0 0.0
      %431 = vmatpush2.msra.mxu0 0.0
      %432 = vmatprep.subr.mxu0 0.0
      %433 = vmatpush2.msra.mxu0 0.0
      %434 = vmatprep.subr.mxu0 0.0
      %435 = vmatpush2.msra.mxu0 0.0
      %436 = vmatprep.subr.mxu0 0.0
      %437 = vmatpush2.msra.mxu0 0.0
      %438 = vmatprep.subr.mxu0 0.0
      %439 = vmatpush2.msra.mxu0 0.0
      %440 = vmatprep.subr.mxu0 0.0
      %441 = vmatpush2.msra.mxu0 0.0
      %442 = vmatprep.subr.mxu0 0.0
      %443 = vmatpush2.msra.mxu0 0.0
      %444 = vmatprep.subr.mxu0 0.0
      %445 = vmatpush2.msra.mxu0 0.0
      %446 = vmatprep.subr.mxu0 0.0
      %447 = vmatpush2.msra.mxu0 0.0
      %448 = vmatprep.subr.mxu0 0.0
      %449 = vmatpush2.msra.mxu0 0.0
      %450 = vmatprep.subr.mxu0 0.0
      %451 = vmatpush2.msra.mxu0 0.0
      %452 = vmatprep.subr.mxu0 0.0
      %453 = vmatpush2.msra.mxu0 0.0
      %454 = vmatprep.subr.mxu0 0.0
      %455 = vmatpush2.msra.mxu0 0.0
      %456 = vmatprep.subr.mxu0 0.0
      %457 = vmatpush2.msra.mxu0 0.0
      %458 = vmatprep.subr.mxu0 0.0
      %459 = vmatpush2.msra.mxu0 0.0
      %460 = vmatprep.subr.mxu0 0.0
      %461 = vmatpush2.msra.mxu0 0.0
      %462 = vmatprep.mubr.f32.mxu0 0.0
      %463 = vmatmul.mubr.f32.gmra.mxu0 %v396
      %v464 = vpop.f32.mrf.mxu0
      %v465 = vadd.f32 0.0, %v464
      %v466 = vpop.f32.mrf.mxu0
      %467 = vdwg.mxu0
      %v468 = vadd.f32 %v223, %v465
      %469 = vrot.lane.b32.xlu0 %v224, 120
      %v470 = vpop.permute.xlu0 %469
      %471 = vrot.lane.b32.xlu0 %v210, 88
      %v472 = vpop.permute.xlu0 %471
      %v473 = vsel %vm228, %v470, 0
      %v475 = vsel %vm228, %v472, 0
      %477 = vmatprep.subr.mxu0 0.0
      %478 = vmatpush1.xpose.msra.mxu0 0.0
      %479 = vmatprep.subr.mxu0 0.0
      %480 = vmatpush1.xpose.msra.mxu0 0.0
      %481 = vmatprep.subr.mxu0 0.0
      %482 = vmatpush1.xpose.msra.mxu0 0.0
      %483 = vmatprep.subr.mxu0 0.0
      %484 = vmatpush1.xpose.msra.mxu0 0.0
      %485 = vmatprep.subr.mxu0 0.0
      %486 = vmatpush1.xpose.msra.mxu0 0.0
      %487 = vmatprep.subr.mxu0 0.0
      %488 = vmatpush1.xpose.msra.mxu0 0.0
      %489 = vmatprep.subr.mxu0 0.0
      %490 = vmatpush1.xpose.msra.mxu0 0.0
      %491 = vmatprep.subr.mxu0 0.0
      %492 = vmatpush1.xpose.msra.mxu0 0.0
      %493 = vmatprep.subr.mxu0 0.0
      %494 = vmatpush1.xpose.msra.mxu0 0.0
      %495 = vmatprep.subr.mxu0 0.0
      %496 = vmatpush1.xpose.msra.mxu0 0.0
      %497 = vmatprep.subr.mxu0 0.0
      %498 = vmatpush1.xpose.msra.mxu0 0.0
      %499 = vmatprep.subr.mxu0 0.0
      %500 = vmatpush1.xpose.msra.mxu0 0.0
      %501 = vmatprep.subr.mxu0 0.0
      %502 = vmatpush1.xpose.msra.mxu0 0.0
      %503 = vmatprep.subr.mxu0 0.0
      %504 = vmatpush1.xpose.msra.mxu0 0.0
      %505 = vmatprep.subr.mxu0 0.0
      %506 = vmatpush1.xpose.msra.mxu0 0.0
      %507 = vmatprep.subr.mxu0 0.0
      %508 = vmatpush1.xpose.msra.mxu0 %v475
      %509 = vmatprep.subr.mxu0 0.0
      %510 = vmatpush2.xpose.msra.mxu0 0.0
      %511 = vmatprep.subr.mxu0 0.0
      %512 = vmatpush2.xpose.msra.mxu0 0.0
      %513 = vmatprep.subr.mxu0 0.0
      %514 = vmatpush2.xpose.msra.mxu0 0.0
      %515 = vmatprep.subr.mxu0 0.0
      %516 = vmatpush2.xpose.msra.mxu0 0.0
      %517 = vmatprep.subr.mxu0 0.0
      %518 = vmatpush2.xpose.msra.mxu0 0.0
      %519 = vmatprep.subr.mxu0 0.0
      %520 = vmatpush2.xpose.msra.mxu0 0.0
      %521 = vmatprep.subr.mxu0 0.0
      %522 = vmatpush2.xpose.msra.mxu0 0.0
      %523 = vmatprep.subr.mxu0 0.0
      %524 = vmatpush2.xpose.msra.mxu0 0.0
      %525 = vmatprep.subr.mxu0 0.0
      %526 = vmatpush2.xpose.msra.mxu0 0.0
      %527 = vmatprep.subr.mxu0 0.0
      %528 = vmatpush2.xpose.msra.mxu0 0.0
      %529 = vmatprep.subr.mxu0 0.0
      %530 = vmatpush2.xpose.msra.mxu0 0.0
      %531 = vmatprep.subr.mxu0 0.0
      %532 = vmatpush2.xpose.msra.mxu0 0.0
      %533 = vmatprep.subr.mxu0 0.0
      %534 = vmatpush2.xpose.msra.mxu0 0.0
      %535 = vmatprep.subr.mxu0 0.0
      %536 = vmatpush2.xpose.msra.mxu0 0.0
      %537 = vmatprep.subr.mxu0 0.0
      %538 = vmatpush2.xpose.msra.mxu0 0.0
      %539 = vmatprep.subr.mxu0 0.0
      %540 = vmatpush2.xpose.msra.mxu0 0.0
      %541 = vmatprep.mubr.f32.mxu0 0.0
      %542 = vmatmul.mubr.f32.gmra.mxu0 %v473
      %v543 = vpop.f32.mrf.mxu0
      %v544 = vadd.f32 0.0, %v543
      %v545 = vpop.f32.mrf.mxu0
      %546 = vdwg.mxu0
      %v547 = vsel %vm304, %v544, -inf
      %548 = vmax.xlane.f32.xlu0 %v547
      %v549 = vpop.xlane.xlu0 %548
      %v550 = vsub.f32 %v544, %v549
      %v551 = vmul.f32 %v550, 1.442695
      %v552 = vpow.pop %v551
      %v553 = vsel %vm304, %v552, 0.0
      %554 = vadd.xlane.f32.xlu0 %v553
      %v555 = vpop.xlane.xlu0 %554
      %v556 = vrcp.pop %v555
      %v557 = vmul.f32 %v552, %v556
      %558 = vrot.lane.b32.xlu0 %v210, 56
      %v559 = vpop.permute.xlu0 %558
      %v561 = vsel %vm318, %v557, 0
      %v563 = vsel %vm322, %v559, 0
      %565 = vmatprep.subr.mxu0 0.0
      %566 = vmatpush1.msra.mxu0 0.0
      %567 = vmatprep.subr.mxu0 0.0
      %568 = vmatpush1.msra.mxu0 0.0
      %569 = vmatprep.subr.mxu0 0.0
      %570 = vmatpush1.msra.mxu0 0.0
      %571 = vmatprep.subr.mxu0 0.0
      %572 = vmatpush1.msra.mxu0 0.0
      %573 = vmatprep.subr.mxu0 0.0
      %574 = vmatpush1.msra.mxu0 0.0
      %575 = vmatprep.subr.mxu0 0.0
      %576 = vmatpush1.msra.mxu0 0.0
      %577 = vmatprep.subr.mxu0 0.0
      %578 = vmatpush1.msra.mxu0 0.0
      %579 = vmatprep.subr.mxu0 0.0
      %580 = vmatpush1.msra.mxu0 0.0
      %581 = vmatprep.subr.mxu0 0.0
      %582 = vmatpush1.msra.mxu0 0.0
      %583 = vmatprep.subr.mxu0 0.0
      %584 = vmatpush1.msra.mxu0 0.0
      %585 = vmatprep.subr.mxu0 0.0
      %586 = vmatpush1.msra.mxu0 0.0
      %587 = vmatprep.subr.mxu0 0.0
      %588 = vmatpush1.msra.mxu0 0.0
      %589 = vmatprep.subr.mxu0 0.0
      %590 = vmatpush1.msra.mxu0 0.0
      %591 = vmatprep.subr.mxu0 0.0
      %592 = vmatpush1.msra.mxu0 0.0
      %593 = vmatprep.subr.mxu0 0.0
      %594 = vmatpush1.msra.mxu0 0.0
      %595 = vmatprep.subr.mxu0 0.0
      %596 = vmatpush1.msra.mxu0 %v563
      %597 = vmatprep.subr.mxu0 0.0
      %598 = vmatpush2.msra.mxu0 0.0
      %599 = vmatprep.subr.mxu0 0.0
      %600 = vmatpush2.msra.mxu0 0.0
      %601 = vmatprep.subr.mxu0 0.0
      %602 = vmatpush2.msra.mxu0 0.0
      %603 = vmatprep.subr.mxu0 0.0
      %604 = vmatpush2.msra.mxu0 0.0
      %605 = vmatprep.subr.mxu0 0.0
      %606 = vmatpush2.msra.mxu0 0.0
      %607 = vmatprep.subr.mxu0 0.0
      %608 = vmatpush2.msra.mxu0 0.0
      %609 = vmatprep.subr.mxu0 0.0
      %610 = vmatpush2.msra.mxu0 0.0
      %611 = vmatprep.subr.mxu0 0.0
      %612 = vmatpush2.msra.mxu0 0.0
      %613 = vmatprep.subr.mxu0 0.0
      %614 = vmatpush2.msra.mxu0 0.0
      %615 = vmatprep.subr.mxu0 0.0
      %616 = vmatpush2.msra.mxu0 0.0
      %617 = vmatprep.subr.mxu0 0.0
      %618 = vmatpush2.msra.mxu0 0.0
      %619 = vmatprep.subr.mxu0 0.0
      %620 = vmatpush2.msra.mxu0 0.0
      %621 = vmatprep.subr.mxu0 0.0
      %622 = vmatpush2.msra.mxu0 0.0
      %623 = vmatprep.subr.mxu0 0.0
      %624 = vmatpush2.msra.mxu0 0.0
      %625 = vmatprep.subr.mxu0 0.0
      %626 = vmatpush2.msra.mxu0 0.0
      %627 = vmatprep.subr.mxu0 0.0
      %628 = vmatpush2.msra.mxu0 0.0
      %629 = vmatprep.mubr.f32.mxu0 0.0
      %630 = vmatmul.mubr.f32.gmra.mxu0 %v561
      %v631 = vpop.f32.mrf.mxu0
      %v632 = vadd.f32 0.0, %v631
      %v633 = vpop.f32.mrf.mxu0
      %634 = vdwg.mxu0
      %v636 = vsel %vm228, %v632, 0
      %638 = vmatprep.subr.mxu0 0.0
      %639 = vmatpush1.msra.mxu0 0.0
      %640 = vmatprep.subr.mxu0 0.0
      %641 = vmatpush1.msra.mxu0 0.0
      %642 = vmatprep.subr.mxu0 0.0
      %643 = vmatpush1.msra.mxu0 0.0
      %644 = vmatprep.subr.mxu0 0.0
      %645 = vmatpush1.msra.mxu0 0.0
      %646 = vmatprep.subr.mxu0 0.0
      %647 = vmatpush1.msra.mxu0 0.0
      %648 = vmatprep.subr.mxu0 0.0
      %649 = vmatpush1.msra.mxu0 0.0
      %650 = vmatprep.subr.mxu0 0.0
      %651 = vmatpush1.msra.mxu0 0.0
      %652 = vmatprep.subr.mxu0 0.0
      %653 = vmatpush1.msra.mxu0 0.0
      %654 = vmatprep.subr.mxu0 0.0
      %655 = vmatpush1.msra.mxu0 0.0
      %656 = vmatprep.subr.mxu0 0.0
      %657 = vmatpush1.msra.mxu0 0.0
      %658 = vmatprep.subr.mxu0 0.0
      %659 = vmatpush1.msra.mxu0 0.0
      %660 = vmatprep.subr.mxu0 0.0
      %661 = vmatpush1.msra.mxu0 0.0
      %662 = vmatprep.subr.mxu0 0.0
      %663 = vmatpush1.msra.mxu0 0.0
      %664 = vmatprep.subr.mxu0 0.0
      %665 = vmatpush1.msra.mxu0 0.0
      %666 = vmatprep.subr.mxu0 0.0
      %667 = vmatpush1.msra.mxu0 0.0
      %668 = vmatprep.subr.mxu0 0.0
      %669 = vmatpush1.msra.mxu0 %v212
      %670 = vmatprep.subr.mxu0 0.0
      %671 = vmatpush2.msra.mxu0 0.0
      %672 = vmatprep.subr.mxu0 0.0
      %673 = vmatpush2.msra.mxu0 0.0
      %674 = vmatprep.subr.mxu0 0.0
      %675 = vmatpush2.msra.mxu0 0.0
      %676 = vmatprep.subr.mxu0 0.0
      %677 = vmatpush2.msra.mxu0 0.0
      %678 = vmatprep.subr.mxu0 0.0
      %679 = vmatpush2.msra.mxu0 0.0
      %680 = vmatprep.subr.mxu0 0.0
      %681 = vmatpush2.msra.mxu0 0.0
      %682 = vmatprep.subr.mxu0 0.0
      %683 = vmatpush2.msra.mxu0 0.0
      %684 = vmatprep.subr.mxu0 0.0
      %685 = vmatpush2.msra.mxu0 0.0
      %686 = vmatprep.subr.mxu0 0.0
      %687 = vmatpush2.msra.mxu0 0.0
      %688 = vmatprep.subr.mxu0 0.0
      %689 = vmatpush2.msra.mxu0 0.0
      %690 = vmatprep.subr.mxu0 0.0
      %691 = vmatpush2.msra.mxu0 0.0
      %692 = vmatprep.subr.mxu0 0.0
      %693 = vmatpush2.msra.mxu0 0.0
      %694 = vmatprep.subr.mxu0 0.0
      %695 = vmatpush2.msra.mxu0 0.0
      %696 = vmatprep.subr.mxu0 0.0
      %697 = vmatpush2.msra.mxu0 0.0
      %698 = vmatprep.subr.mxu0 0.0
      %699 = vmatpush2.msra.mxu0 0.0
      %700 = vmatprep.subr.mxu0 0.0
      %701 = vmatpush2.msra.mxu0 0.0
      %702 = vmatprep.mubr.f32.mxu0 0.0
      %703 = vmatmul.mubr.f32.gmra.mxu0 %v636
      %v704 = vpop.f32.mrf.mxu0
      %v705 = vadd.f32 0.0, %v704
      %v706 = vpop.f32.mrf.mxu0
      %707 = vdwg.mxu0
      %v708 = vadd.f32 %v468, %v705
      %709 = vrot.lane.b32.xlu0 %v224, 112
      %v710 = vpop.permute.xlu0 %709
      %711 = vrot.lane.b32.xlu0 %v210, 80
      %v712 = vpop.permute.xlu0 %711
      %v713 = vsel %vm228, %v710, 0
      %v715 = vsel %vm228, %v712, 0
      %717 = vmatprep.subr.mxu0 0.0
      %718 = vmatpush1.xpose.msra.mxu0 0.0
      %719 = vmatprep.subr.mxu0 0.0
      %720 = vmatpush1.xpose.msra.mxu0 0.0
      %721 = vmatprep.subr.mxu0 0.0
      %722 = vmatpush1.xpose.msra.mxu0 0.0
      %723 = vmatprep.subr.mxu0 0.0
      %724 = vmatpush1.xpose.msra.mxu0 0.0
      %725 = vmatprep.subr.mxu0 0.0
      %726 = vmatpush1.xpose.msra.mxu0 0.0
      %727 = vmatprep.subr.mxu0 0.0
      %728 = vmatpush1.xpose.msra.mxu0 0.0
      %729 = vmatprep.subr.mxu0 0.0
      %730 = vmatpush1.xpose.msra.mxu0 0.0
      %731 = vmatprep.subr.mxu0 0.0
      %732 = vmatpush1.xpose.msra.mxu0 0.0
      %733 = vmatprep.subr.mxu0 0.0
      %734 = vmatpush1.xpose.msra.mxu0 0.0
      %735 = vmatprep.subr.mxu0 0.0
      %736 = vmatpush1.xpose.msra.mxu0 0.0
      %737 = vmatprep.subr.mxu0 0.0
      %738 = vmatpush1.xpose.msra.mxu0 0.0
      %739 = vmatprep.subr.mxu0 0.0
      %740 = vmatpush1.xpose.msra.mxu0 0.0
      %741 = vmatprep.subr.mxu0 0.0
      %742 = vmatpush1.xpose.msra.mxu0 0.0
      %743 = vmatprep.subr.mxu0 0.0
      %744 = vmatpush1.xpose.msra.mxu0 0.0
      %745 = vmatprep.subr.mxu0 0.0
      %746 = vmatpush1.xpose.msra.mxu0 0.0
      %747 = vmatprep.subr.mxu0 0.0
      %748 = vmatpush1.xpose.msra.mxu0 %v715
      %749 = vmatprep.subr.mxu0 0.0
      %750 = vmatpush2.xpose.msra.mxu0 0.0
      %751 = vmatprep.subr.mxu0 0.0
      %752 = vmatpush2.xpose.msra.mxu0 0.0
      %753 = vmatprep.subr.mxu0 0.0
      %754 = vmatpush2.xpose.msra.mxu0 0.0
      %755 = vmatprep.subr.mxu0 0.0
      %756 = vmatpush2.xpose.msra.mxu0 0.0
      %757 = vmatprep.subr.mxu0 0.0
      %758 = vmatpush2.xpose.msra.mxu0 0.0
      %759 = vmatprep.subr.mxu0 0.0
      %760 = vmatpush2.xpose.msra.mxu0 0.0
      %761 = vmatprep.subr.mxu0 0.0
      %762 = vmatpush2.xpose.msra.mxu0 0.0
      %763 = vmatprep.subr.mxu0 0.0
      %764 = vmatpush2.xpose.msra.mxu0 0.0
      %765 = vmatprep.subr.mxu0 0.0
      %766 = vmatpush2.xpose.msra.mxu0 0.0
      %767 = vmatprep.subr.mxu0 0.0
      %768 = vmatpush2.xpose.msra.mxu0 0.0
      %769 = vmatprep.subr.mxu0 0.0
      %770 = vmatpush2.xpose.msra.mxu0 0.0
      %771 = vmatprep.subr.mxu0 0.0
      %772 = vmatpush2.xpose.msra.mxu0 0.0
      %773 = vmatprep.subr.mxu0 0.0
      %774 = vmatpush2.xpose.msra.mxu0 0.0
      %775 = vmatprep.subr.mxu0 0.0
      %776 = vmatpush2.xpose.msra.mxu0 0.0
      %777 = vmatprep.subr.mxu0 0.0
      %778 = vmatpush2.xpose.msra.mxu0 0.0
      %779 = vmatprep.subr.mxu0 0.0
      %780 = vmatpush2.xpose.msra.mxu0 0.0
      %781 = vmatprep.mubr.f32.mxu0 0.0
      %782 = vmatmul.mubr.f32.gmra.mxu0 %v713
      %v783 = vpop.f32.mrf.mxu0
      %v784 = vadd.f32 0.0, %v783
      %v785 = vpop.f32.mrf.mxu0
      %786 = vdwg.mxu0
      %v787 = vsel %vm304, %v784, -inf
      %788 = vmax.xlane.f32.xlu0 %v787
      %v789 = vpop.xlane.xlu0 %788
      %v790 = vsub.f32 %v784, %v789
      %v791 = vmul.f32 %v790, 1.442695
      %v792 = vpow.pop %v791
      %v793 = vsel %vm304, %v792, 0.0
      %794 = vadd.xlane.f32.xlu0 %v793
      %v795 = vpop.xlane.xlu0 %794
      %v796 = vrcp.pop %v795
      %v797 = vmul.f32 %v792, %v796
      %798 = vrot.lane.b32.xlu0 %v210, 48
      %v799 = vpop.permute.xlu0 %798
      %v801 = vsel %vm318, %v797, 0
      %v803 = vsel %vm322, %v799, 0
      %805 = vmatprep.subr.mxu0 0.0
      %806 = vmatpush1.msra.mxu0 0.0
      %807 = vmatprep.subr.mxu0 0.0
      %808 = vmatpush1.msra.mxu0 0.0
      %809 = vmatprep.subr.mxu0 0.0
      %810 = vmatpush1.msra.mxu0 0.0
      %811 = vmatprep.subr.mxu0 0.0
      %812 = vmatpush1.msra.mxu0 0.0
      %813 = vmatprep.subr.mxu0 0.0
      %814 = vmatpush1.msra.mxu0 0.0
      %815 = vmatprep.subr.mxu0 0.0
      %816 = vmatpush1.msra.mxu0 0.0
      %817 = vmatprep.subr.mxu0 0.0
      %818 = vmatpush1.msra.mxu0 0.0
      %819 = vmatprep.subr.mxu0 0.0
      %820 = vmatpush1.msra.mxu0 0.0
      %821 = vmatprep.subr.mxu0 0.0
      %822 = vmatpush1.msra.mxu0 0.0
      %823 = vmatprep.subr.mxu0 0.0
      %824 = vmatpush1.msra.mxu0 0.0
      %825 = vmatprep.subr.mxu0 0.0
      %826 = vmatpush1.msra.mxu0 0.0
      %827 = vmatprep.subr.mxu0 0.0
      %828 = vmatpush1.msra.mxu0 0.0
      %829 = vmatprep.subr.mxu0 0.0
      %830 = vmatpush1.msra.mxu0 0.0
      %831 = vmatprep.subr.mxu0 0.0
      %832 = vmatpush1.msra.mxu0 0.0
      %833 = vmatprep.subr.mxu0 0.0
      %834 = vmatpush1.msra.mxu0 0.0
      %835 = vmatprep.subr.mxu0 0.0
      %836 = vmatpush1.msra.mxu0 %v803
      %837 = vmatprep.subr.mxu0 0.0
      %838 = vmatpush2.msra.mxu0 0.0
      %839 = vmatprep.subr.mxu0 0.0
      %840 = vmatpush2.msra.mxu0 0.0
      %841 = vmatprep.subr.mxu0 0.0
      %842 = vmatpush2.msra.mxu0 0.0
      %843 = vmatprep.subr.mxu0 0.0
      %844 = vmatpush2.msra.mxu0 0.0
      %845 = vmatprep.subr.mxu0 0.0
      %846 = vmatpush2.msra.mxu0 0.0
      %847 = vmatprep.subr.mxu0 0.0
      %848 = vmatpush2.msra.mxu0 0.0
      %849 = vmatprep.subr.mxu0 0.0
      %850 = vmatpush2.msra.mxu0 0.0
      %851 = vmatprep.subr.mxu0 0.0
      %852 = vmatpush2.msra.mxu0 0.0
      %853 = vmatprep.subr.mxu0 0.0
      %854 = vmatpush2.msra.mxu0 0.0
      %855 = vmatprep.subr.mxu0 0.0
      %856 = vmatpush2.msra.mxu0 0.0
      %857 = vmatprep.subr.mxu0 0.0
      %858 = vmatpush2.msra.mxu0 0.0
      %859 = vmatprep.subr.mxu0 0.0
      %860 = vmatpush2.msra.mxu0 0.0
      %861 = vmatprep.subr.mxu0 0.0
      %862 = vmatpush2.msra.mxu0 0.0
      %863 = vmatprep.subr.mxu0 0.0
      %864 = vmatpush2.msra.mxu0 0.0
      %865 = vmatprep.subr.mxu0 0.0
      %866 = vmatpush2.msra.mxu0 0.0
      %867 = vmatprep.subr.mxu0 0.0
      %868 = vmatpush2.msra.mxu0 0.0
      %869 = vmatprep.mubr.f32.mxu0 0.0
      %870 = vmatmul.mubr.f32.gmra.mxu0 %v801
      %v871 = vpop.f32.mrf.mxu0
      %v872 = vadd.f32 0.0, %v871
      %v873 = vpop.f32.mrf.mxu0
      %874 = vdwg.mxu0
      %v876 = vsel %vm228, %v872, 0
      %878 = vmatprep.subr.mxu0 0.0
      %879 = vmatpush1.msra.mxu0 0.0
      %880 = vmatprep.subr.mxu0 0.0
      %881 = vmatpush1.msra.mxu0 0.0
      %882 = vmatprep.subr.mxu0 0.0
      %883 = vmatpush1.msra.mxu0 0.0
      %884 = vmatprep.subr.mxu0 0.0
      %885 = vmatpush1.msra.mxu0 0.0
      %886 = vmatprep.subr.mxu0 0.0
      %887 = vmatpush1.msra.mxu0 0.0
      %888 = vmatprep.subr.mxu0 0.0
      %889 = vmatpush1.msra.mxu0 0.0
      %890 = vmatprep.subr.mxu0 0.0
      %891 = vmatpush1.msra.mxu0 0.0
      %892 = vmatprep.subr.mxu0 0.0
      %893 = vmatpush1.msra.mxu0 0.0
      %894 = vmatprep.subr.mxu0 0.0
      %895 = vmatpush1.msra.mxu0 0.0
      %896 = vmatprep.subr.mxu0 0.0
      %897 = vmatpush1.msra.mxu0 0.0
      %898 = vmatprep.subr.mxu0 0.0
      %899 = vmatpush1.msra.mxu0 0.0
      %900 = vmatprep.subr.mxu0 0.0
      %901 = vmatpush1.msra.mxu0 0.0
      %902 = vmatprep.subr.mxu0 0.0
      %903 = vmatpush1.msra.mxu0 0.0
      %904 = vmatprep.subr.mxu0 0.0
      %905 = vmatpush1.msra.mxu0 0.0
      %906 = vmatprep.subr.mxu0 0.0
      %907 = vmatpush1.msra.mxu0 0.0
      %908 = vmatprep.subr.mxu0 0.0
      %909 = vmatpush1.msra.mxu0 %v213
      %910 = vmatprep.subr.mxu0 0.0
      %911 = vmatpush2.msra.mxu0 0.0
      %912 = vmatprep.subr.mxu0 0.0
      %913 = vmatpush2.msra.mxu0 0.0
      %914 = vmatprep.subr.mxu0 0.0
      %915 = vmatpush2.msra.mxu0 0.0
      %916 = vmatprep.subr.mxu0 0.0
      %917 = vmatpush2.msra.mxu0 0.0
      %918 = vmatprep.subr.mxu0 0.0
      %919 = vmatpush2.msra.mxu0 0.0
      %920 = vmatprep.subr.mxu0 0.0
      %921 = vmatpush2.msra.mxu0 0.0
      %922 = vmatprep.subr.mxu0 0.0
      %923 = vmatpush2.msra.mxu0 0.0
      %924 = vmatprep.subr.mxu0 0.0
      %925 = vmatpush2.msra.mxu0 0.0
      %926 = vmatprep.subr.mxu0 0.0
      %927 = vmatpush2.msra.mxu0 0.0
      %928 = vmatprep.subr.mxu0 0.0
      %929 = vmatpush2.msra.mxu0 0.0
      %930 = vmatprep.subr.mxu0 0.0
      %931 = vmatpush2.msra.mxu0 0.0
      %932 = vmatprep.subr.mxu0 0.0
      %933 = vmatpush2.msra.mxu0 0.0
      %934 = vmatprep.subr.mxu0 0.0
      %935 = vmatpush2.msra.mxu0 0.0
      %936 = vmatprep.subr.mxu0 0.0
      %937 = vmatpush2.msra.mxu0 0.0
      %938 = vmatprep.subr.mxu0 0.0
      %939 = vmatpush2.msra.mxu0 0.0
      %940 = vmatprep.subr.mxu0 0.0
      %941 = vmatpush2.msra.mxu0 0.0
      %942 = vmatprep.mubr.f32.mxu0 0.0
      %943 = vmatmul.mubr.f32.gmra.mxu0 %v876
      %v944 = vpop.f32.mrf.mxu0
      %v945 = vadd.f32 0.0, %v944
      %v946 = vpop.f32.mrf.mxu0
      %947 = vdwg.mxu0
      %v948 = vadd.f32 %v708, %v945
      %949 = vrot.lane.b32.xlu0 %v224, 104
      %v950 = vpop.permute.xlu0 %949
      %951 = vrot.lane.b32.xlu0 %v210, 72
      %v952 = vpop.permute.xlu0 %951
      %v953 = vsel %vm228, %v950, 0
      %v955 = vsel %vm228, %v952, 0
      %957 = vmatprep.subr.mxu0 0.0
      %958 = vmatpush1.xpose.msra.mxu0 0.0
      %959 = vmatprep.subr.mxu0 0.0
      %960 = vmatpush1.xpose.msra.mxu0 0.0
      %961 = vmatprep.subr.mxu0 0.0
      %962 = vmatpush1.xpose.msra.mxu0 0.0
      %963 = vmatprep.subr.mxu0 0.0
      %964 = vmatpush1.xpose.msra.mxu0 0.0
      %965 = vmatprep.subr.mxu0 0.0
      %966 = vmatpush1.xpose.msra.mxu0 0.0
      %967 = vmatprep.subr.mxu0 0.0
      %968 = vmatpush1.xpose.msra.mxu0 0.0
      %969 = vmatprep.subr.mxu0 0.0
      %970 = vmatpush1.xpose.msra.mxu0 0.0
      %971 = vmatprep.subr.mxu0 0.0
      %972 = vmatpush1.xpose.msra.mxu0 0.0
      %973 = vmatprep.subr.mxu0 0.0
      %974 = vmatpush1.xpose.msra.mxu0 0.0
      %975 = vmatprep.subr.mxu0 0.0
      %976 = vmatpush1.xpose.msra.mxu0 0.0
      %977 = vmatprep.subr.mxu0 0.0
      %978 = vmatpush1.xpose.msra.mxu0 0.0
      %979 = vmatprep.subr.mxu0 0.0
      %980 = vmatpush1.xpose.msra.mxu0 0.0
      %981 = vmatprep.subr.mxu0 0.0
      %982 = vmatpush1.xpose.msra.mxu0 0.0
      %983 = vmatprep.subr.mxu0 0.0
      %984 = vmatpush1.xpose.msra.mxu0 0.0
      %985 = vmatprep.subr.mxu0 0.0
      %986 = vmatpush1.xpose.msra.mxu0 0.0
      %987 = vmatprep.subr.mxu0 0.0
      %988 = vmatpush1.xpose.msra.mxu0 %v955
      %989 = vmatprep.subr.mxu0 0.0
      %990 = vmatpush2.xpose.msra.mxu0 0.0
      %991 = vmatprep.subr.mxu0 0.0
      %992 = vmatpush2.xpose.msra.mxu0 0.0
      %993 = vmatprep.subr.mxu0 0.0
      %994 = vmatpush2.xpose.msra.mxu0 0.0
      %995 = vmatprep.subr.mxu0 0.0
      %996 = vmatpush2.xpose.msra.mxu0 0.0
      %997 = vmatprep.subr.mxu0 0.0
      %998 = vmatpush2.xpose.msra.mxu0 0.0
      %999 = vmatprep.subr.mxu0 0.0
      %1000 = vmatpush2.xpose.msra.mxu0 0.0
      %1001 = vmatprep.subr.mxu0 0.0
      %1002 = vmatpush2.xpose.msra.mxu0 0.0
      %1003 = vmatprep.subr.mxu0 0.0
      %1004 = vmatpush2.xpose.msra.mxu0 0.0
      %1005 = vmatprep.subr.mxu0 0.0
      %1006 = vmatpush2.xpose.msra.mxu0 0.0
      %1007 = vmatprep.subr.mxu0 0.0
      %1008 = vmatpush2.xpose.msra.mxu0 0.0
      %1009 = vmatprep.subr.mxu0 0.0
      %1010 = vmatpush2.xpose.msra.mxu0 0.0
      %1011 = vmatprep.subr.mxu0 0.0
      %1012 = vmatpush2.xpose.msra.mxu0 0.0
      %1013 = vmatprep.subr.mxu0 0.0
      %1014 = vmatpush2.xpose.msra.mxu0 0.0
      %1015 = vmatprep.subr.mxu0 0.0
      %1016 = vmatpush2.xpose.msra.mxu0 0.0
      %1017 = vmatprep.subr.mxu0 0.0
      %1018 = vmatpush2.xpose.msra.mxu0 0.0
      %1019 = vmatprep.subr.mxu0 0.0
      %1020 = vmatpush2.xpose.msra.mxu0 0.0
      %1021 = vmatprep.mubr.f32.mxu0 0.0
      %1022 = vmatmul.mubr.f32.gmra.mxu0 %v953
      %v1023 = vpop.f32.mrf.mxu0
      %v1024 = vadd.f32 0.0, %v1023
      %v1025 = vpop.f32.mrf.mxu0
      %1026 = vdwg.mxu0
      %v1027 = vsel %vm304, %v1024, -inf
      %1028 = vmax.xlane.f32.xlu0 %v1027
      %v1029 = vpop.xlane.xlu0 %1028
      %v1030 = vsub.f32 %v1024, %v1029
      %v1031 = vmul.f32 %v1030, 1.442695
      %v1032 = vpow.pop %v1031
      %v1033 = vsel %vm304, %v1032, 0.0
      %1034 = vadd.xlane.f32.xlu0 %v1033
      %v1035 = vpop.xlane.xlu0 %1034
      %v1036 = vrcp.pop %v1035
      %v1037 = vmul.f32 %v1032, %v1036
      %1038 = vrot.lane.b32.xlu0 %v210, 40
      %v1039 = vpop.permute.xlu0 %1038
      %v1041 = vsel %vm318, %v1037, 0
      %v1043 = vsel %vm322, %v1039, 0
      %1045 = vmatprep.subr.mxu0 0.0
      %1046 = vmatpush1.msra.mxu0 0.0
      %1047 = vmatprep.subr.mxu0 0.0
      %1048 = vmatpush1.msra.mxu0 0.0
      %1049 = vmatprep.subr.mxu0 0.0
      %1050 = vmatpush1.msra.mxu0 0.0
      %1051 = vmatprep.subr.mxu0 0.0
      %1052 = vmatpush1.msra.mxu0 0.0
      %1053 = vmatprep.subr.mxu0 0.0
      %1054 = vmatpush1.msra.mxu0 0.0
      %1055 = vmatprep.subr.mxu0 0.0
      %1056 = vmatpush1.msra.mxu0 0.0
      %1057 = vmatprep.subr.mxu0 0.0
      %1058 = vmatpush1.msra.mxu0 0.0
      %1059 = vmatprep.subr.mxu0 0.0
      %1060 = vmatpush1.msra.mxu0 0.0
      %1061 = vmatprep.subr.mxu0 0.0
      %1062 = vmatpush1.msra.mxu0 0.0
      %1063 = vmatprep.subr.mxu0 0.0
      %1064 = vmatpush1.msra.mxu0 0.0
      %1065 = vmatprep.subr.mxu0 0.0
      %1066 = vmatpush1.msra.mxu0 0.0
      %1067 = vmatprep.subr.mxu0 0.0
      %1068 = vmatpush1.msra.mxu0 0.0
      %1069 = vmatprep.subr.mxu0 0.0
      %1070 = vmatpush1.msra.mxu0 0.0
      %1071 = vmatprep.subr.mxu0 0.0
      %1072 = vmatpush1.msra.mxu0 0.0
      %1073 = vmatprep.subr.mxu0 0.0
      %1074 = vmatpush1.msra.mxu0 0.0
      %1075 = vmatprep.subr.mxu0 0.0
      %1076 = vmatpush1.msra.mxu0 %v1043
      %1077 = vmatprep.subr.mxu0 0.0
      %1078 = vmatpush2.msra.mxu0 0.0
      %1079 = vmatprep.subr.mxu0 0.0
      %1080 = vmatpush2.msra.mxu0 0.0
      %1081 = vmatprep.subr.mxu0 0.0
      %1082 = vmatpush2.msra.mxu0 0.0
      %1083 = vmatprep.subr.mxu0 0.0
      %1084 = vmatpush2.msra.mxu0 0.0
      %1085 = vmatprep.subr.mxu0 0.0
      %1086 = vmatpush2.msra.mxu0 0.0
      %1087 = vmatprep.subr.mxu0 0.0
      %1088 = vmatpush2.msra.mxu0 0.0
      %1089 = vmatprep.subr.mxu0 0.0
      %1090 = vmatpush2.msra.mxu0 0.0
      %1091 = vmatprep.subr.mxu0 0.0
      %1092 = vmatpush2.msra.mxu0 0.0
      %1093 = vmatprep.subr.mxu0 0.0
      %1094 = vmatpush2.msra.mxu0 0.0
      %1095 = vmatprep.subr.mxu0 0.0
      %1096 = vmatpush2.msra.mxu0 0.0
      %1097 = vmatprep.subr.mxu0 0.0
      %1098 = vmatpush2.msra.mxu0 0.0
      %1099 = vmatprep.subr.mxu0 0.0
      %1100 = vmatpush2.msra.mxu0 0.0
      %1101 = vmatprep.subr.mxu0 0.0
      %1102 = vmatpush2.msra.mxu0 0.0
      %1103 = vmatprep.subr.mxu0 0.0
      %1104 = vmatpush2.msra.mxu0 0.0
      %1105 = vmatprep.subr.mxu0 0.0
      %1106 = vmatpush2.msra.mxu0 0.0
      %1107 = vmatprep.subr.mxu0 0.0
      %1108 = vmatpush2.msra.mxu0 0.0
      %1109 = vmatprep.mubr.f32.mxu0 0.0
      %1110 = vmatmul.mubr.f32.gmra.mxu0 %v1041
      %v1111 = vpop.f32.mrf.mxu0
      %v1112 = vadd.f32 0.0, %v1111
      %v1113 = vpop.f32.mrf.mxu0
      %1114 = vdwg.mxu0
      %v1116 = vsel %vm228, %v1112, 0
      %1118 = vmatprep.subr.mxu0 0.0
      %1119 = vmatpush1.msra.mxu0 0.0
      %1120 = vmatprep.subr.mxu0 0.0
      %1121 = vmatpush1.msra.mxu0 0.0
      %1122 = vmatprep.subr.mxu0 0.0
      %1123 = vmatpush1.msra.mxu0 0.0
      %1124 = vmatprep.subr.mxu0 0.0
      %1125 = vmatpush1.msra.mxu0 0.0
      %1126 = vmatprep.subr.mxu0 0.0
      %1127 = vmatpush1.msra.mxu0 0.0
      %1128 = vmatprep.subr.mxu0 0.0
      %1129 = vmatpush1.msra.mxu0 0.0
      %1130 = vmatprep.subr.mxu0 0.0
      %1131 = vmatpush1.msra.mxu0 0.0
      %1132 = vmatprep.subr.mxu0 0.0
      %1133 = vmatpush1.msra.mxu0 0.0
      %1134 = vmatprep.subr.mxu0 0.0
      %1135 = vmatpush1.msra.mxu0 0.0
      %1136 = vmatprep.subr.mxu0 0.0
      %1137 = vmatpush1.msra.mxu0 0.0
      %1138 = vmatprep.subr.mxu0 0.0
      %1139 = vmatpush1.msra.mxu0 0.0
      %1140 = vmatprep.subr.mxu0 0.0
      %1141 = vmatpush1.msra.mxu0 0.0
      %1142 = vmatprep.subr.mxu0 0.0
      %1143 = vmatpush1.msra.mxu0 0.0
      %1144 = vmatprep.subr.mxu0 0.0
      %1145 = vmatpush1.msra.mxu0 0.0
      %1146 = vmatprep.subr.mxu0 0.0
      %1147 = vmatpush1.msra.mxu0 0.0
      %1148 = vmatprep.subr.mxu0 0.0
      %1149 = vmatpush1.msra.mxu0 %v214
      %1150 = vmatprep.subr.mxu0 0.0
      %1151 = vmatpush2.msra.mxu0 0.0
      %1152 = vmatprep.subr.mxu0 0.0
      %1153 = vmatpush2.msra.mxu0 0.0
      %1154 = vmatprep.subr.mxu0 0.0
      %1155 = vmatpush2.msra.mxu0 0.0
      %1156 = vmatprep.subr.mxu0 0.0
      %1157 = vmatpush2.msra.mxu0 0.0
      %1158 = vmatprep.subr.mxu0 0.0
      %1159 = vmatpush2.msra.mxu0 0.0
      %1160 = vmatprep.subr.mxu0 0.0
      %1161 = vmatpush2.msra.mxu0 0.0
      %1162 = vmatprep.subr.mxu0 0.0
      %1163 = vmatpush2.msra.mxu0 0.0
      %1164 = vmatprep.subr.mxu0 0.0
      %1165 = vmatpush2.msra.mxu0 0.0
      %1166 = vmatprep.subr.mxu0 0.0
      %1167 = vmatpush2.msra.mxu0 0.0
      %1168 = vmatprep.subr.mxu0 0.0
      %1169 = vmatpush2.msra.mxu0 0.0
      %1170 = vmatprep.subr.mxu0 0.0
      %1171 = vmatpush2.msra.mxu0 0.0
      %1172 = vmatprep.subr.mxu0 0.0
      %1173 = vmatpush2.msra.mxu0 0.0
      %1174 = vmatprep.subr.mxu0 0.0
      %1175 = vmatpush2.msra.mxu0 0.0
      %1176 = vmatprep.subr.mxu0 0.0
      %1177 = vmatpush2.msra.mxu0 0.0
      %1178 = vmatprep.subr.mxu0 0.0
      %1179 = vmatpush2.msra.mxu0 0.0
      %1180 = vmatprep.subr.mxu0 0.0
      %1181 = vmatpush2.msra.mxu0 0.0
      %1182 = vmatprep.mubr.f32.mxu0 0.0
      %1183 = vmatmul.mubr.f32.gmra.mxu0 %v1116
      %v1184 = vpop.f32.mrf.mxu0
      %v1185 = vadd.f32 0.0, %v1184
      %v1186 = vpop.f32.mrf.mxu0
      %1187 = vdwg.mxu0
      %v1188 = vadd.f32 %v948, %v1185
      %vm1189 = vcmask 258048
      %1190 = vst.msk [vmem:[%s209] sm:$0x1f] %vm1189, %v1188
      %p1191 = scmp.lt.s32.totalorder %s15, 1
      %s1192 = scalar_select %p1191, %s15, 1
      %s1193 = smul.addr %s1192, 8
      %s1194 = scalar_lea.vmem %s4, %s1193
      // Predicated region
      $region37: #{vit_forward.14} parent=35 // pred_check
        %p1195 = pneg %p127
      $region38: #{vit_forward.14} parent=35 // pred_check_branch
        %1197 = sbr.rel (%p1195) target = $region40
      $region39: #{vit_forward.14} parent=35 // pred_region
        _
      $region40: #{vit_forward.14} parent=35 // pred_fallthru
        _
    $region36: #{vit_forward.14} parent=5 // pred_fallthru
      _
    %p1198 = scmp.le.s32.totalorder 2, %s10
    // Predicated region
    $region41: #{vit_forward.14} parent=5 // pred_check
      %p1199 = pneg %p1198
    $region42: #{vit_forward.14} parent=5 // pred_check_branch
      %1201 = sbr.rel (%p1199) target = $region44
    $region43: #{vit_forward.14} parent=5 // pred_region
      %s1202 = ssub.s32 %s10, 2
      // Predicated region
      $region45: #{vit_forward.14} parent=43 // pred_check
        %p1203 = pneg %p133
      $region46: #{vit_forward.14} parent=43 // pred_check_branch
        %1205 = sbr.rel (%p1203) target = $region48
      $region47: #{vit_forward.14} parent=43 // pred_region
        %p1206 = scmp.lt.s32.totalorder %s16, 1
        %s1207 = scalar_select %p1206, %s16, 1
        %s1208 = smul.addr %s1207, 8
        %s1209 = scalar_lea.vmem %s4, %s1208
      $region48: #{vit_forward.14} parent=43 // pred_fallthru
        _
    $region44: #{vit_forward.14} parent=5 // pred_fallthru
      _
  $region6: #{vit_forward.14} parent=0 // loop_footer
    %s14 = sadd.s32 1, %s10
  $region7: #{vit_forward.14} parent=0 // loop_footer_branch
    %9 = sbr.rel target = $region3
  $region8: #{vit_forward.14} parent=0 // loop_exit
    _

// kernel: vit_forward.19
$region0: #{vit_forward.19}
  #allocation0 [shape = 'u32[]', space=smem, size = 0x4, offset = 0x4, fixed_abs, tag = 'smem constant byte address 0x4 - core index']
  #allocation1 [shape = 'u32[144,128]{1,0:T(1,128)}', space=vmem, size = 0x12000, scoped, tag = 'internal scratch']
  %s0 = inlined_call_operand.vmem [shape: f32[10,32], index: 0, kind: input, shape index: {}]
  %s1 = inlined_call_operand.vmem [shape: f32[10,32], index: 1, kind: input, shape index: {}]
  %s2 = inlined_call_operand.vmem [shape: f32[32,32], index: 2, kind: input, shape index: {}]
  %s3 = inlined_call_operand.vmem [shape: f32[1,32], index: 3, kind: input, shape index: {}]
  %s4 = inlined_call_operand.vmem [shape: f32[10,32], index: 4, kind: output, shape index: {}]
  %s5 = sld [smem:[#allocation0]]
  $region26: #{vit_forward.19} parent=0
    _
  %s7 = ssub.s32 1, %s5
  %s8 = scalar_select 0, %s7, %s5
  // Predicated region
  $region2: #{vit_forward.19} parent=0 // pred_check
    _
  $region3: #{vit_forward.19} parent=0 // pred_check_branch
    %10 = sbr.rel (0) target = $region5
  $region4: #{vit_forward.19} parent=0 // pred_region
    _
  $region5: #{vit_forward.19} parent=0 // pred_fallthru
    _
  // Predicated region
  $region6: #{vit_forward.19} parent=0 // pred_check
    _
  $region7: #{vit_forward.19} parent=0 // pred_check_branch
    %12 = sbr.rel (0) target = $region9
  $region8: #{vit_forward.19} parent=0 // pred_region
    _
  $region9: #{vit_forward.19} parent=0 // pred_fallthru
    _
  // Predicated region
  $region10: #{vit_forward.19} parent=0 // pred_check
    _
  $region11: #{vit_forward.19} parent=0 // pred_check_branch
    %14 = sbr.rel (0) target = $region13
  $region12: #{vit_forward.19} parent=0 // pred_region
    _
  $region13: #{vit_forward.19} parent=0 // pred_fallthru
    _
  // Predicated region
  $region14: #{vit_forward.19} parent=0 // pred_check
    _
  $region15: #{vit_forward.19} parent=0 // pred_check_branch
    %16 = sbr.rel (0) target = $region17
  $region16: #{vit_forward.19} parent=0 // pred_region
    _
  $region17: #{vit_forward.19} parent=0 // pred_fallthru
    _
  %v17 = vld [vmem:[%s0] sm:$0xff]
  %v18 = vld [vmem:[%s0 + $0x8] sm:$0x3]
  %v19 = vld [vmem:[%s2] sm:$0xff]
  %v20 = vld [vmem:[%s2 + $0x8] sm:$0xff]
  %v21 = vld [vmem:[%s2 + $0x10] sm:$0xff]
  %v22 = vld [vmem:[%s2 + $0x18] sm:$0xff]
  %vm23 = vcmask 261120
  %v25 = vsel %vm23, %v17, 0
  %v28 = vsel %vm23, %v18, 0
  %30 = vmatprep.subr.mxu0 0.0
  %31 = vmatpush1.msra.mxu0 0.0
  %32 = vmatprep.subr.mxu0 0.0
  %33 = vmatpush1.msra.mxu0 0.0
  %34 = vmatprep.subr.mxu0 0.0
  %35 = vmatpush1.msra.mxu0 0.0
  %36 = vmatprep.subr.mxu0 0.0
  %37 = vmatpush1.msra.mxu0 0.0
  %38 = vmatprep.subr.mxu0 0.0
  %39 = vmatpush1.msra.mxu0 0.0
  %40 = vmatprep.subr.mxu0 0.0
  %41 = vmatpush1.msra.mxu0 0.0
  %42 = vmatprep.subr.mxu0 0.0
  %43 = vmatpush1.msra.mxu0 0.0
  %44 = vmatprep.subr.mxu0 0.0
  %45 = vmatpush1.msra.mxu0 0.0
  %46 = vmatprep.subr.mxu0 0.0
  %47 = vmatpush1.msra.mxu0 0.0
  %48 = vmatprep.subr.mxu0 0.0
  %49 = vmatpush1.msra.mxu0 0.0
  %50 = vmatprep.subr.mxu0 0.0
  %51 = vmatpush1.msra.mxu0 0.0
  %52 = vmatprep.subr.mxu0 0.0
  %53 = vmatpush1.msra.mxu0 0.0
  %54 = vmatprep.subr.mxu0 0.0
  %55 = vmatpush1.msra.mxu0 %v22
  %56 = vmatprep.subr.mxu0 0.0
  %57 = vmatpush1.msra.mxu0 %v21
  %58 = vmatprep.subr.mxu0 0.0
  %59 = vmatpush1.msra.mxu0 %v20
  %60 = vmatprep.subr.mxu0 0.0
  %61 = vmatpush1.msra.mxu0 %v19
  %62 = vmatprep.subr.mxu0 0.0
  %63 = vmatpush2.msra.mxu0 0.0
  %64 = vmatprep.subr.mxu0 0.0
  %65 = vmatpush2.msra.mxu0 0.0
  %66 = vmatprep.subr.mxu0 0.0
  %67 = vmatpush2.msra.mxu0 0.0
  %68 = vmatprep.subr.mxu0 0.0
  %69 = vmatpush2.msra.mxu0 0.0
  %70 = vmatprep.subr.mxu0 0.0
  %71 = vmatpush2.msra.mxu0 0.0
  %72 = vmatprep.subr.mxu0 0.0
  %73 = vmatpush2.msra.mxu0 0.0
  %74 = vmatprep.subr.mxu0 0.0
  %75 = vmatpush2.msra.mxu0 0.0
  %76 = vmatprep.subr.mxu0 0.0
  %77 = vmatpush2.msra.mxu0 0.0
  %78 = vmatprep.subr.mxu0 0.0
  %79 = vmatpush2.msra.mxu0 0.0
  %80 = vmatprep.subr.mxu0 0.0
  %81 = vmatpush2.msra.mxu0 0.0
  %82 = vmatprep.subr.mxu0 0.0
  %83 = vmatpush2.msra.mxu0 0.0
  %84 = vmatprep.subr.mxu0 0.0
  %85 = vmatpush2.msra.mxu0 0.0
  %86 = vmatprep.subr.mxu0 0.0
  %87 = vmatpush2.msra.mxu0 0.0
  %88 = vmatprep.subr.mxu0 0.0
  %89 = vmatpush2.msra.mxu0 0.0
  %90 = vmatprep.subr.mxu0 0.0
  %91 = vmatpush2.msra.mxu0 0.0
  %92 = vmatprep.subr.mxu0 0.0
  %93 = vmatpush2.msra.mxu0 0.0
  %94 = vmatprep.mubr.f32.mxu0 0.0
  %95 = vmatmul.mubr.f32.gmra.mxu0 %v25
  %v96 = vpop.f32.mrf.mxu0
  %v97 = vadd.f32 0.0, %v96
  %v98 = vpop.f32.mrf.mxu0
  %99 = vmatprep.mubr.f32.mxu0 0.0
  %100 = vmatmul.mubr.f32.gmra.mxu0 %v28
  %v101 = vpop.f32.mrf.mxu0
  %v102 = vadd.f32 0.0, %v101
  %v103 = vpop.f32.mrf.mxu0
  %104 = vdwg.mxu0
  %v105 = vld [vmem:[%s1] sm:$0xff]
  %v106 = vld [vmem:[%s1 + $0x8] sm:$0x3]
  %v107 = vadd.f32 %v105, %v97
  %v108 = vadd.f32 %v106, %v102
  %v109 = vld [vmem:[%s3] sm:$0x1]
  %v111 = vlaneseq
  %v112 = vshrl.u32 %v111, 7
  %v113 = vsub.s32 0, %v112
  %v114 = vrot.slane %v109, %v113
  %v116 = vadd.f32 %v107, %v114
  %v117 = vadd.f32 %v108, %v114
  %118 = vst.msk [vmem:[%s4] sm:$0xff] %vm23, %v116
  %vm119 = vcmask 254976
  %120 = vst.msk [vmem:[%s4 + $0x8] sm:$0x3] %vm119, %v117
  // Predicated region
  $region18: #{vit_forward.19} parent=0 // pred_check
    _
  $region19: #{vit_forward.19} parent=0 // pred_check_branch
    %122 = sbr.rel (0) target = $region21
  $region20: #{vit_forward.19} parent=0 // pred_region
    _
  $region21: #{vit_forward.19} parent=0 // pred_fallthru
    _
  // Predicated region
  $region22: #{vit_forward.19} parent=0 // pred_check
    _
  $region23: #{vit_forward.19} parent=0 // pred_check_branch
    %124 = sbr.rel (0) target = $region25
  $region24: #{vit_forward.19} parent=0 // pred_region
    _
  $region25: #{vit_forward.19} parent=0 // pred_fallthru
    _

// kernel: vit_forward.20
$region0: #{vit_forward.20}
  #allocation0 [shape = 'u32[]', space=smem, size = 0x4, offset = 0x4, fixed_abs, tag = 'smem constant byte address 0x4 - core index']
  #allocation1 [shape = 'u32[144,128]{1,0:T(1,128)}', space=vmem, size = 0x12000, scoped, tag = 'internal scratch']
  %s0 = inlined_call_operand.vmem [shape: f32[2,32], index: 0, kind: input, shape index: {}]
  %s1 = inlined_call_operand.vmem [shape: f32[1,32], index: 1, kind: input, shape index: {}]
  %s2 = inlined_call_operand.vmem [shape: f32[1,32], index: 2, kind: input, shape index: {}]
  %s3 = inlined_call_operand.vmem [shape: f32[2,32], index: 3, kind: output, shape index: {}]
  %s4 = sld [smem:[#allocation0]]
  $region22: #{vit_forward.20} parent=0
    _
  %s6 = ssub.s32 1, %s4
  %s7 = scalar_select 0, %s6, %s4
  // Predicated region
  $region2: #{vit_forward.20} parent=0 // pred_check
    _
  $region3: #{vit_forward.20} parent=0 // pred_check_branch
    %9 = sbr.rel (0) target = $region5
  $region4: #{vit_forward.20} parent=0 // pred_region
    _
  $region5: #{vit_forward.20} parent=0 // pred_fallthru
    _
  // Predicated region
  $region6: #{vit_forward.20} parent=0 // pred_check
    _
  $region7: #{vit_forward.20} parent=0 // pred_check_branch
    %11 = sbr.rel (0) target = $region9
  $region8: #{vit_forward.20} parent=0 // pred_region
    _
  $region9: #{vit_forward.20} parent=0 // pred_fallthru
    _
  // Predicated region
  $region10: #{vit_forward.20} parent=0 // pred_check
    _
  $region11: #{vit_forward.20} parent=0 // pred_check_branch
    %13 = sbr.rel (0) target = $region13
  $region12: #{vit_forward.20} parent=0 // pred_region
    _
  $region13: #{vit_forward.20} parent=0 // pred_fallthru
    _
  %v14 = vld [vmem:[%s0] sm:$0x3]
  %v15 = vld [vmem:[%s1] sm:$0x1]
  %v16 = vld [vmem:[%s2] sm:$0x1]
  %vm17 = vcmask 254976
  %v18 = vsel %vm17, %v14, 0.0
  %19 = vadd.xlane.f32.xlu0 %v18
  %v20 = vpop.xlane.xlu0 %19
  %v21 = vrcp.pop 32.0
  %v22 = vmul.f32 %v20, %v21
  %v23 = vsub.f32 %v14, %v22
  %v24 = vmul.f32 %v23, %v23
  %v25 = vsel %vm17, %v24, 0.0
  %26 = vadd.xlane.f32.xlu0 %v25
  %v27 = vpop.xlane.xlu0 %26
  %v28 = vmul.f32 %v27, %v21
  %v29 = vadd.f32 %v28, 1e-05
  %v30 = vrsqrt.pop %v29
  %v31 = vmul.f32 %v23, %v30
  %v33 = vlaneseq
  %v34 = vshrl.u32 %v33, 7
  %v35 = vsub.s32 0, %v34
  %v36 = vrot.slane %v15, %v35
  %v38 = vmul.f32 %v31, %v36
  %v40 = vlaneseq
  %v41 = vshrl.u32 %v40, 7
  %v42 = vsub.s32 0, %v41
  %v43 = vrot.slane %v16, %v42
  %v45 = vadd.f32 %v38, %v43
  %46 = vst.msk [vmem:[%s3] sm:$0x3] %vm17, %v45
  // Predicated region
  $region14: #{vit_forward.20} parent=0 // pred_check
    _
  $region15: #{vit_forward.20} parent=0 // pred_check_branch
    %48 = sbr.rel (0) target = $region17
  $region16: #{vit_forward.20} parent=0 // pred_region
    _
  $region17: #{vit_forward.20} parent=0 // pred_fallthru
    _
  // Predicated region
  $region18: #{vit_forward.20} parent=0 // pred_check
    _
  $region19: #{vit_forward.20} parent=0 // pred_check_branch
    %50 = sbr.rel (0) target = $region21
  $region20: #{vit_forward.20} parent=0 // pred_region
    _
  $region21: #{vit_forward.20} parent=0 // pred_fallthru
    _

// kernel: vit_forward.15
$region0: #{vit_forward.15}
  #allocation0 [shape = 'u32[]', space=smem, size = 0x4, offset = 0x4, fixed_abs, tag = 'smem constant byte address 0x4 - core index']
  #allocation1 [shape = 'u32[144,128]{1,0:T(1,128)}', space=vmem, size = 0x12000, scoped, tag = 'internal scratch']
  %s0 = inlined_call_operand.vmem [shape: f32[10,32], index: 0, kind: input, shape index: {}]
  %s1 = inlined_call_operand.vmem [shape: f32[1,32], index: 1, kind: input, shape index: {}]
  %s2 = inlined_call_operand.vmem [shape: f32[1,32], index: 2, kind: input, shape index: {}]
  %s3 = inlined_call_operand.vmem [shape: f32[32,128], index: 3, kind: input, shape index: {}]
  %s4 = inlined_call_operand.vmem [shape: f32[1,128], index: 4, kind: input, shape index: {}]
  %s5 = inlined_call_operand.vmem [shape: f32[128,32], index: 5, kind: input, shape index: {}]
  %s6 = inlined_call_operand.vmem [shape: f32[1,32], index: 6, kind: input, shape index: {}]
  %s7 = inlined_call_operand.vmem [shape: f32[10,32], index: 7, kind: output, shape index: {}]
  %s8 = sld [smem:[#allocation0]]
  $region38: #{vit_forward.15} parent=0
    _
  %s10 = ssub.s32 1, %s8
  %s11 = scalar_select 0, %s10, %s8
  // Predicated region
  $region2: #{vit_forward.15} parent=0 // pred_check
    _
  $region3: #{vit_forward.15} parent=0 // pred_check_branch
    %13 = sbr.rel (0) target = $region5
  $region4: #{vit_forward.15} parent=0 // pred_region
    _
  $region5: #{vit_forward.15} parent=0 // pred_fallthru
    _
  // Predicated region
  $region6: #{vit_forward.15} parent=0 // pred_check
    _
  $region7: #{vit_forward.15} parent=0 // pred_check_branch
    %15 = sbr.rel (0) target = $region9
  $region8: #{vit_forward.15} parent=0 // pred_region
    _
  $region9: #{vit_forward.15} parent=0 // pred_fallthru
    _
  // Predicated region
  $region10: #{vit_forward.15} parent=0 // pred_check
    _
  $region11: #{vit_forward.15} parent=0 // pred_check_branch
    %17 = sbr.rel (0) target = $region13
  $region12: #{vit_forward.15} parent=0 // pred_region
    _
  $region13: #{vit_forward.15} parent=0 // pred_fallthru
    _
  // Predicated region
  $region14: #{vit_forward.15} parent=0 // pred_check
    _
  $region15: #{vit_forward.15} parent=0 // pred_check_branch
    %19 = sbr.rel (0) target = $region17
  $region16: #{vit_forward.15} parent=0 // pred_region
    _
  $region17: #{vit_forward.15} parent=0 // pred_fallthru
    _
  // Predicated region
  $region18: #{vit_forward.15} parent=0 // pred_check
    _
  $region19: #{vit_forward.15} parent=0 // pred_check_branch
    %21 = sbr.rel (0) target = $region21
  $region20: #{vit_forward.15} parent=0 // pred_region
    _
  $region21: #{vit_forward.15} parent=0 // pred_fallthru
    _
  // Predicated region
  $region22: #{vit_forward.15} parent=0 // pred_check
    _
  $region23: #{vit_forward.15} parent=0 // pred_check_branch
    %23 = sbr.rel (0) target = $region25
  $region24: #{vit_forward.15} parent=0 // pred_region
    _
  $region25: #{vit_forward.15} parent=0 // pred_fallthru
    _
  // Predicated region
  $region26: #{vit_forward.15} parent=0 // pred_check
    _
  $region27: #{vit_forward.15} parent=0 // pred_check_branch
    %25 = sbr.rel (0) target = $region29
  $region28: #{vit_forward.15} parent=0 // pred_region
    _
  $region29: #{vit_forward.15} parent=0 // pred_fallthru
    _
  %v26 = vld [vmem:[%s0] sm:$0xff]
  %v27 = vld [vmem:[%s0 + $0x8] sm:$0x3]
  %v28 = vld [vmem:[%s1] sm:$0x1]
  %v29 = vld [vmem:[%s2] sm:$0x1]
  %vm30 = vcmask 261120
  %v31 = vsel %vm30, %v26, 0.0
  %32 = vadd.xlane.f32.xlu0 %v31
  %v33 = vpop.xlane.xlu0 %32
  %vm34 = vcmask 254976
  %v35 = vsel %vm34, %v27, 0.0
  %36 = vadd.xlane.f32.xlu0 %v35
  %v37 = vpop.xlane.xlu0 %36
  %v38 = vrcp.pop 32.0
  %v39 = vmul.f32 %v33, %v38
  %v40 = vmul.f32 %v37, %v38
  %v41 = vsub.f32 %v26, %v39
  %v42 = vsub.f32 %v27, %v40
  %v43 = vmul.f32 %v41, %v41
  %v44 = vmul.f32 %v42, %v42
  %v45 = vsel %vm30, %v43, 0.0
  %46 = vadd.xlane.f32.xlu0 %v45
  %v47 = vpop.xlane.xlu0 %46
  %v48 = vsel %vm34, %v44, 0.0
  %49 = vadd.xlane.f32.xlu0 %v48
  %v50 = vpop.xlane.xlu0 %49
  %v51 = vmul.f32 %v47, %v38
  %v52 = vmul.f32 %v50, %v38
  %v53 = vadd.f32 %v51, 1e-05
  %v54 = vadd.f32 %v52, 1e-05
  %v55 = vrsqrt.pop %v53
  %v56 = vrsqrt.pop %v54
  %v57 = vmul.f32 %v41, %v55
  %v58 = vmul.f32 %v42, %v56
  %v60 = vlaneseq
  %v61 = vshrl.u32 %v60, 7
  %v62 = vsub.s32 0, %v61
  %v63 = vrot.slane %v28, %v62
  %v65 = vmul.f32 %v57, %v63
  %v66 = vmul.f32 %v58, %v63
  %v68 = vlaneseq
  %v69 = vshrl.u32 %v68, 7
  %v70 = vsub.s32 0, %v69
  %v71 = vrot.slane %v29, %v70
  %v73 = vadd.f32 %v65, %v71
  %v74 = vadd.f32 %v66, %v71
  %v75 = vld [vmem:[%s3] sm:$0xff]
  %v76 = vld [vmem:[%s3 + $0x8] sm:$0xff]
  %v77 = vld [vmem:[%s3 + $0x10] sm:$0xff]
  %v78 = vld [vmem:[%s3 + $0x18] sm:$0xff]
  %v79 = vld [vmem:[%s4] sm:$0x1]
  %v81 = vlaneseq
  %v82 = vshrl.u32 %v81, 7
  %v83 = vsub.s32 0, %v82
  %v84 = vrot.slane %v79, %v83
  %v87 = vsel %vm30, %v73, 0
  %v90 = vsel %vm30, %v74, 0
  %92 = vmatprep.subr.mxu0 0.0
  %93 = vmatpush1.msra.mxu0 0.0
  %94 = vmatprep.subr.mxu0 0.0
  %95 = vmatpush1.msra.mxu0 0.0
  %96 = vmatprep.subr.mxu0 0.0
  %97 = vmatpush1.msra.mxu0 0.0
  %98 = vmatprep.subr.mxu0 0.0
  %99 = vmatpush1.msra.mxu0 0.0
  %100 = vmatprep.subr.mxu0 0.0
  %101 = vmatpush1.msra.mxu0 0.0
  %102 = vmatprep.subr.mxu0 0.0
  %103 = vmatpush1.msra.mxu0 0.0
  %104 = vmatprep.subr.mxu0 0.0
  %105 = vmatpush1.msra.mxu0 0.0
  %106 = vmatprep.subr.mxu0 0.0
  %107 = vmatpush1.msra.mxu0 0.0
  %108 = vmatprep.subr.mxu0 0.0
  %109 = vmatpush1.msra.mxu0 0.0
  %110 = vmatprep.subr.mxu0 0.0
  %111 = vmatpush1.msra.mxu0 0.0
  %112 = vmatprep.subr.mxu0 0.0
  %113 = vmatpush1.msra.mxu0 0.0
  %114 = vmatprep.subr.mxu0 0.0
  %115 = vmatpush1.msra.mxu0 0.0
  %116 = vmatprep.subr.mxu0 0.0
  %117 = vmatpush1.msra.mxu0 %v78
  %118 = vmatprep.subr.mxu0 0.0
  %119 = vmatpush1.msra.mxu0 %v77
  %120 = vmatprep.subr.mxu0 0.0
  %121 = vmatpush1.msra.mxu0 %v76
  %122 = vmatprep.subr.mxu0 0.0
  %123 = vmatpush1.msra.mxu0 %v75
  %124 = vmatprep.subr.mxu0 0.0
  %125 = vmatpush2.msra.mxu0 0.0
  %126 = vmatprep.subr.mxu0 0.0
  %127 = vmatpush2.msra.mxu0 0.0
  %128 = vmatprep.subr.mxu0 0.0
  %129 = vmatpush2.msra.mxu0 0.0
  %130 = vmatprep.subr.mxu0 0.0
  %131 = vmatpush2.msra.mxu0 0.0
  %132 = vmatprep.subr.mxu0 0.0
  %133 = vmatpush2.msra.mxu0 0.0
  %134 = vmatprep.subr.mxu0 0.0
  %135 = vmatpush2.msra.mxu0 0.0
  %136 = vmatprep.subr.mxu0 0.0
  %137 = vmatpush2.msra.mxu0 0.0
  %138 = vmatprep.subr.mxu0 0.0
  %139 = vmatpush2.msra.mxu0 0.0
  %140 = vmatprep.subr.mxu0 0.0
  %141 = vmatpush2.msra.mxu0 0.0
  %142 = vmatprep.subr.mxu0 0.0
  %143 = vmatpush2.msra.mxu0 0.0
  %144 = vmatprep.subr.mxu0 0.0
  %145 = vmatpush2.msra.mxu0 0.0
  %146 = vmatprep.subr.mxu0 0.0
  %147 = vmatpush2.msra.mxu0 0.0
  %148 = vmatprep.subr.mxu0 0.0
  %149 = vmatpush2.msra.mxu0 0.0
  %150 = vmatprep.subr.mxu0 0.0
  %151 = vmatpush2.msra.mxu0 0.0
  %152 = vmatprep.subr.mxu0 0.0
  %153 = vmatpush2.msra.mxu0 0.0
  %154 = vmatprep.subr.mxu0 0.0
  %155 = vmatpush2.msra.mxu0 0.0
  %156 = vmatprep.mubr.f32.mxu0 0.0
  %157 = vmatmul.mubr.f32.gmra.mxu0 %v87
  %v158 = vpop.f32.mrf.mxu0
  %v159 = vadd.f32 %v84, %v158
  %v160 = vpop.f32.mrf.mxu0
  %161 = vmatprep.mubr.f32.mxu0 0.0
  %162 = vmatmul.mubr.f32.gmra.mxu0 %v90
  %v163 = vpop.f32.mrf.mxu0
  %v164 = vadd.f32 %v84, %v163
  %v165 = vpop.f32.mrf.mxu0
  %166 = vdwg.mxu0
  %v167 = vmul.f32 %v159, -1.702
  %v168 = vmul.f32 %v164, -1.702
  %v169 = vmul.f32 %v167, 1.442695
  %v170 = vpow.pop %v169
  %v171 = vmul.f32 %v168, 1.442695
  %v172 = vpow.pop %v171
  %v173 = vadd.f32 %v170, 1.0
  %v174 = vadd.f32 %v172, 1.0
  %v175 = vrcp.pop %v173
  %v176 = vmul.f32 1.0, %v175
  %v177 = vrcp.pop %v174
  %v178 = vmul.f32 1.0, %v177
  %v179 = vmul.f32 %v159, %v176
  %v180 = vmul.f32 %v164, %v178
  %v181 = vld [vmem:[%s5] sm:$0xff]
  %v182 = vld [vmem:[%s5 + $0x8] sm:$0xff]
  %v183 = vld [vmem:[%s5 + $0x10] sm:$0xff]
  %v184 = vld [vmem:[%s5 + $0x18] sm:$0xff]
  %v185 = vld [vmem:[%s5 + $0x20] sm:$0xff]
  %v186 = vld [vmem:[%s5 + $0x28] sm:$0xff]
  %v187 = vld [vmem:[%s5 + $0x30] sm:$0xff]
  %v188 = vld [vmem:[%s5 + $0x38] sm:$0xff]
  %v189 = vld [vmem:[%s5 + $0x40] sm:$0xff]
  %v190 = vld [vmem:[%s5 + $0x48] sm:$0xff]
  %v191 = vld [vmem:[%s5 + $0x50] sm:$0xff]
  %v192 = vld [vmem:[%s5 + $0x58] sm:$0xff]
  %v193 = vld [vmem:[%s5 + $0x60] sm:$0xff]
  %v194 = vld [vmem:[%s5 + $0x68] sm:$0xff]
  %v195 = vld [vmem:[%s5 + $0x70] sm:$0xff]
  %v196 = vld [vmem:[%s5 + $0x78] sm:$0xff]
  %v197 = vld [vmem:[%s6] sm:$0x1]
  %v199 = vlaneseq
  %v200 = vshrl.u32 %v199, 7
  %v201 = vsub.s32 0, %v200
  %v202 = vrot.slane %v197, %v201
  %204 = vmatprep.subr.mxu0 0.0
  %205 = vmatpush1.msra.mxu0 %v196
  %206 = vmatprep.subr.mxu0 0.0
  %207 = vmatpush1.msra.mxu0 %v195
  %208 = vmatprep.subr.mxu0 0.0
  %209 = vmatpush1.msra.mxu0 %v194
  %210 = vmatprep.subr.mxu0 0.0
  %211 = vmatpush1.msra.mxu0 %v193
  %212 = vmatprep.subr.mxu0 0.0
  %213 = vmatpush1.msra.mxu0 %v192
  %214 = vmatprep.subr.mxu0 0.0
  %215 = vmatpush1.msra.mxu0 %v191
  %216 = vmatprep.subr.mxu0 0.0
  %217 = vmatpush1.msra.mxu0 %v190
  %218 = vmatprep.subr.mxu0 0.0
  %219 = vmatpush1.msra.mxu0 %v189
  %220 = vmatprep.subr.mxu0 0.0
  %221 = vmatpush1.msra.mxu0 %v188
  %222 = vmatprep.subr.mxu0 0.0
  %223 = vmatpush1.msra.mxu0 %v187
  %224 = vmatprep.subr.mxu0 0.0
  %225 = vmatpush1.msra.mxu0 %v186
  %226 = vmatprep.subr.mxu0 0.0
  %227 = vmatpush1.msra.mxu0 %v185
  %228 = vmatprep.subr.mxu0 0.0
  %229 = vmatpush1.msra.mxu0 %v184
  %230 = vmatprep.subr.mxu0 0.0
  %231 = vmatpush1.msra.mxu0 %v183
  %232 = vmatprep.subr.mxu0 0.0
  %233 = vmatpush1.msra.mxu0 %v182
  %234 = vmatprep.subr.mxu0 0.0
  %235 = vmatpush1.msra.mxu0 %v181
  %236 = vmatprep.subr.mxu0 0.0
  %237 = vmatpush2.msra.mxu0 0.0
  %238 = vmatprep.subr.mxu0 0.0
  %239 = vmatpush2.msra.mxu0 0.0
  %240 = vmatprep.subr.mxu0 0.0
  %241 = vmatpush2.msra.mxu0 0.0
  %242 = vmatprep.subr.mxu0 0.0
  %243 = vmatpush2.msra.mxu0 0.0
  %244 = vmatprep.subr.mxu0 0.0
  %245 = vmatpush2.msra.mxu0 0.0
  %246 = vmatprep.subr.mxu0 0.0
  %247 = vmatpush2.msra.mxu0 0.0
  %248 = vmatprep.subr.mxu0 0.0
  %249 = vmatpush2.msra.mxu0 0.0
  %250 = vmatprep.subr.mxu0 0.0
  %251 = vmatpush2.msra.mxu0 0.0
  %252 = vmatprep.subr.mxu0 0.0
  %253 = vmatpush2.msra.mxu0 0.0
  %254 = vmatprep.subr.mxu0 0.0
  %255 = vmatpush2.msra.mxu0 0.0
  %256 = vmatprep.subr.mxu0 0.0
  %257 = vmatpush2.msra.mxu0 0.0
  %258 = vmatprep.subr.mxu0 0.0
  %259 = vmatpush2.msra.mxu0 0.0
  %260 = vmatprep.subr.mxu0 0.0
  %261 = vmatpush2.msra.mxu0 0.0
  %262 = vmatprep.subr.mxu0 0.0
  %263 = vmatpush2.msra.mxu0 0.0
  %264 = vmatprep.subr.mxu0 0.0
  %265 = vmatpush2.msra.mxu0 0.0
  %266 = vmatprep.subr.mxu0 0.0
  %267 = vmatpush2.msra.mxu0 0.0
  %268 = vmatprep.mubr.f32.mxu0 0.0
  %269 = vmatmul.mubr.f32.gmra.mxu0 %v179
  %v270 = vpop.f32.mrf.mxu0
  %v271 = vadd.f32 %v202, %v270
  %v272 = vpop.f32.mrf.mxu0
  %273 = vmatprep.mubr.f32.mxu0 0.0
  %274 = vmatmul.mubr.f32.gmra.mxu0 %v180
  %v275 = vpop.f32.mrf.mxu0
  %v276 = vadd.f32 %v202, %v275
  %v277 = vpop.f32.mrf.mxu0
  %278 = vdwg.mxu0
  %v279 = vadd.f32 %v26, %v271
  %v280 = vadd.f32 %v27, %v276
  %281 = vst.msk [vmem:[%s7] sm:$0xff] %vm30, %v279
  %282 = vst.msk [vmem:[%s7 + $0x8] sm:$0x3] %vm34, %v280
  // Predicated region
  $region30: #{vit_forward.15} parent=0 // pred_check
    _
  $region31: #{vit_forward.15} parent=0 // pred_check_branch
    %284 = sbr.rel (0) target = $region33
  $region32: #{vit_forward.15} parent=0 // pred_region
    _
  $region33: #{vit_forward.15} parent=0 // pred_fallthru
    _
  // Predicated region
  $region34: #{vit_forward.15} parent=0 // pred_check
    _
  $region35: #{vit_forward.15} parent=0 // pred_check_branch
    %286 = sbr.rel (0) target = $region37
  $region36: #{vit_forward.15} parent=0 // pred_region
    _
  $region37: #{vit_forward.15} parent=0 // pred_fallthru
    _

// kernel: vit_forward.21
$region0: #{vit_forward.21}
  #allocation0 [shape = 'u32[]', space=smem, size = 0x4, offset = 0x4, fixed_abs, tag = 'smem constant byte address 0x4 - core index']
  #allocation1 [shape = 'u32[144,128]{1,0:T(1,128)}', space=vmem, size = 0x12000, scoped, tag = 'internal scratch']
  %s0 = inlined_call_operand.vmem [shape: f32[10,32], index: 0, kind: input, shape index: {}]
  %s1 = inlined_call_operand.vmem [shape: f32[32,16], index: 1, kind: input, shape index: {}]
  %s2 = inlined_call_operand.vmem [shape: f32[10,16], index: 2, kind: output, shape index: {}]
  %s3 = sld [smem:[#allocation0]]
  $region18: #{vit_forward.21} parent=0
    _
  %s5 = ssub.s32 1, %s3
  %s6 = scalar_select 0, %s5, %s3
  // Predicated region
  $region2: #{vit_forward.21} parent=0 // pred_check
    _
  $region3: #{vit_forward.21} parent=0 // pred_check_branch
    %8 = sbr.rel (0) target = $region5
  $region4: #{vit_forward.21} parent=0 // pred_region
    _
  $region5: #{vit_forward.21} parent=0 // pred_fallthru
    _
  // Predicated region
  $region6: #{vit_forward.21} parent=0 // pred_check
    _
  $region7: #{vit_forward.21} parent=0 // pred_check_branch
    %10 = sbr.rel (0) target = $region9
  $region8: #{vit_forward.21} parent=0 // pred_region
    _
  $region9: #{vit_forward.21} parent=0 // pred_fallthru
    _
  %v11 = vld [vmem:[%s0] sm:$0xff]
  %v12 = vld [vmem:[%s0 + $0x8] sm:$0x3]
  %v13 = vld [vmem:[%s1] sm:$0xff]
  %v14 = vld [vmem:[%s1 + $0x8] sm:$0xff]
  %v15 = vld [vmem:[%s1 + $0x10] sm:$0xff]
  %v16 = vld [vmem:[%s1 + $0x18] sm:$0xff]
  %vm17 = vcmask 261120
  %v19 = vsel %vm17, %v11, 0
  %v22 = vsel %vm17, %v12, 0
  %24 = vmatprep.subr.mxu0 0.0
  %25 = vmatpush1.msra.mxu0 0.0
  %26 = vmatprep.subr.mxu0 0.0
  %27 = vmatpush1.msra.mxu0 0.0
  %28 = vmatprep.subr.mxu0 0.0
  %29 = vmatpush1.msra.mxu0 0.0
  %30 = vmatprep.subr.mxu0 0.0
  %31 = vmatpush1.msra.mxu0 0.0
  %32 = vmatprep.subr.mxu0 0.0
  %33 = vmatpush1.msra.mxu0 0.0
  %34 = vmatprep.subr.mxu0 0.0
  %35 = vmatpush1.msra.mxu0 0.0
  %36 = vmatprep.subr.mxu0 0.0
  %37 = vmatpush1.msra.mxu0 0.0
  %38 = vmatprep.subr.mxu0 0.0
  %39 = vmatpush1.msra.mxu0 0.0
  %40 = vmatprep.subr.mxu0 0.0
  %41 = vmatpush1.msra.mxu0 0.0
  %42 = vmatprep.subr.mxu0 0.0
  %43 = vmatpush1.msra.mxu0 0.0
  %44 = vmatprep.subr.mxu0 0.0
  %45 = vmatpush1.msra.mxu0 0.0
  %46 = vmatprep.subr.mxu0 0.0
  %47 = vmatpush1.msra.mxu0 0.0
  %48 = vmatprep.subr.mxu0 0.0
  %49 = vmatpush1.msra.mxu0 %v16
  %50 = vmatprep.subr.mxu0 0.0
  %51 = vmatpush1.msra.mxu0 %v15
  %52 = vmatprep.subr.mxu0 0.0
  %53 = vmatpush1.msra.mxu0 %v14
  %54 = vmatprep.subr.mxu0 0.0
  %55 = vmatpush1.msra.mxu0 %v13
  %56 = vmatprep.subr.mxu0 0.0
  %57 = vmatpush2.msra.mxu0 0.0
  %58 = vmatprep.subr.mxu0 0.0
  %59 = vmatpush2.msra.mxu0 0.0
  %60 = vmatprep.subr.mxu0 0.0
  %61 = vmatpush2.msra.mxu0 0.0
  %62 = vmatprep.subr.mxu0 0.0
  %63 = vmatpush2.msra.mxu0 0.0
  %64 = vmatprep.subr.mxu0 0.0
  %65 = vmatpush2.msra.mxu0 0.0
  %66 = vmatprep.subr.mxu0 0.0
  %67 = vmatpush2.msra.mxu0 0.0
  %68 = vmatprep.subr.mxu0 0.0
  %69 = vmatpush2.msra.mxu0 0.0
  %70 = vmatprep.subr.mxu0 0.0
  %71 = vmatpush2.msra.mxu0 0.0
  %72 = vmatprep.subr.mxu0 0.0
  %73 = vmatpush2.msra.mxu0 0.0
  %74 = vmatprep.subr.mxu0 0.0
  %75 = vmatpush2.msra.mxu0 0.0
  %76 = vmatprep.subr.mxu0 0.0
  %77 = vmatpush2.msra.mxu0 0.0
  %78 = vmatprep.subr.mxu0 0.0
  %79 = vmatpush2.msra.mxu0 0.0
  %80 = vmatprep.subr.mxu0 0.0
  %81 = vmatpush2.msra.mxu0 0.0
  %82 = vmatprep.subr.mxu0 0.0
  %83 = vmatpush2.msra.mxu0 0.0
  %84 = vmatprep.subr.mxu0 0.0
  %85 = vmatpush2.msra.mxu0 0.0
  %86 = vmatprep.subr.mxu0 0.0
  %87 = vmatpush2.msra.mxu0 0.0
  %88 = vmatprep.mubr.f32.mxu0 0.0
  %89 = vmatmul.mubr.f32.gmra.mxu0 %v19
  %v90 = vpop.f32.mrf.mxu0
  %v91 = vadd.f32 0.0, %v90
  %v92 = vpop.f32.mrf.mxu0
  %93 = vmatprep.mubr.f32.mxu0 0.0
  %94 = vmatmul.mubr.f32.gmra.mxu0 %v22
  %v95 = vpop.f32.mrf.mxu0
  %v96 = vadd.f32 0.0, %v95
  %v97 = vpop.f32.mrf.mxu0
  %98 = vdwg.mxu0
  %vm99 = vcmask 130048
  %100 = vst.msk [vmem:[%s2] sm:$0xff] %vm99, %v91
  %vm101 = vcmask 123904
  %102 = vst.msk [vmem:[%s2 + $0x8] sm:$0x3] %vm101, %v96
  // Predicated region
  $region10: #{vit_forward.21} parent=0 // pred_check
    _
  $region11: #{vit_forward.21} parent=0 // pred_check_branch
    %104 = sbr.rel (0) target = $region13
  $region12: #{vit_forward.21} parent=0 // pred_region
    _
  $region13: #{vit_forward.21} parent=0 // pred_fallthru
    _
  // Predicated region
  $region14: #{vit_forward.21} parent=0 // pred_check
    _
  $region15: #{vit_forward.21} parent=0 // pred_check_branch
    %106 = sbr.rel (0) target = $region17
  $region16: #{vit_forward.21} parent=0 // pred_region
    _
  $region17: #{vit_forward.21} parent=0 // pred_fallthru
    _

</llo_original>
